<compile_context>
chip_gen: v7x
topology: tpu7x:2x2x1
jax: 0.10.0
libtpu: 0.0.40
codegen_flags: <defaults>
</compile_context>

<pallas_src>
import math

import jax
import jax.numpy as jnp
import numpy as np
from jax.experimental import pallas as pl
from jax.experimental.pallas import tpu as pltpu

BN_EPS = 1e-5


# ---------------------------------------------------------------------------
# Pallas kernel
# ---------------------------------------------------------------------------
def reduction_kernel(x_ref, b1_ref, bias1_ref, b2_ref, bias2_ref,
                     b3_ref, bias3_ref, o_ref, pad_ref):
    """Per-batch fused Conv1x1+BN -> Conv3x3+BN -> Conv3x3+BN -> ReLU.

    x_ref:     (1, H, W*Cin)        lane-dense input slab
    b1_ref:    (W*Cin, W*Cout)      1x1 conv as block-diagonal matrix (BN scale folded)
    b2_ref:    (3, W*Cout, W*Cout)  3x3 conv as per-row-tap band matrices (BN folded)
    b3_ref:    (3, W*Cout, W*Cout)
    bias*_ref: (1, W*Cout)          folded BN bias rows
    o_ref:     (1, H, W*Cout)
    pad_ref:   (H+2, W*Cout)        VMEM scratch, H-padded feature map
    """
    H = x_ref.shape[1]
    wc = pad_ref.shape[1]

    # Zero only the two halo rows (interior is fully overwritten each layer).
    zero_row = jnp.zeros((1, wc), jnp.float32)
    pad_ref[0:1, :] = zero_row
    pad_ref[H + 1:H + 2, :] = zero_row

    x = x_ref[0]                                                     # (H, W*Cin)

    # ---- layer 1: 1x1 conv + folded BN (scale inside b1) ----------------------
    y = jnp.dot(x, b1_ref[...], preferred_element_type=jnp.float32) + bias1_ref[...]

    # ---- layer 2: 3x3 conv (pad=1) + folded BN, as 3 row-shifted band matmuls --
    pad_ref[1:H + 1, :] = y
    acc = jnp.dot(pad_ref[0:H, :], b2_ref[0], preferred_element_type=jnp.float32)
    acc = acc + jnp.dot(pad_ref[1:H + 1, :], b2_ref[1], preferred_element_type=jnp.float32)
    acc = acc + jnp.dot(pad_ref[2:H + 2, :], b2_ref[2], preferred_element_type=jnp.float32)
    y = acc + bias2_ref[...]

    # ---- layer 3: 3x3 conv (pad=1) + folded BN ---------------------------------
    pad_ref[1:H + 1, :] = y
    acc = jnp.dot(pad_ref[0:H, :], b3_ref[0], preferred_element_type=jnp.float32)
    acc = acc + jnp.dot(pad_ref[1:H + 1, :], b3_ref[1], preferred_element_type=jnp.float32)
    acc = acc + jnp.dot(pad_ref[2:H + 2, :], b3_ref[2], preferred_element_type=jnp.float32)
    y = acc + bias3_ref[...]

    # ---- ReLU ------------------------------------------------------------------
    o_ref[0] = jnp.maximum(y, 0.0)


# ---------------------------------------------------------------------------
# Host-side parameter construction (glue)
# ---------------------------------------------------------------------------
def band_matrices(w_hwio, W):
    """Turn an HWIO conv weight into per-kh band matrices on the (W*Cin, W*Cout) layout.

    Output B[kh][wi*Cin+ci, wo*Cout+co] = w_hwio[kh, kw, ci, co] with kw = wi-wo+KW//2,
    zero outside the band / image (reproduces zero padding along W).
    """
    KH, KW, Cin, Cout = w_hwio.shape
    mats = np.zeros((KH, W * Cin, W * Cout), np.float32)
    for kh in range(KH):
        for wo in range(W):
            for kw in range(KW):
                wi = wo + kw - (KW // 2)
                if 0 <= wi < W:
                    mats[kh, wi * Cin:(wi + 1) * Cin, wo * Cout:(wo + 1) * Cout] = \
                        np.asarray(w_hwio[kh, kw])
    return mats


def make_params(key, Cin, Cout, W):
    k1, k2, k3 = jax.random.split(key, 3)

    # kaiming_normal_(fan_in, relu): std = sqrt(2 / fan_in); bias-free convs.
    std1 = math.sqrt(2.0 / (Cin * 1 * 1))
    std3 = math.sqrt(2.0 / (Cout * 3 * 3))
    w1_oihw = jax.random.normal(k1, (Cout, Cin, 1, 1), jnp.float32) * std1
    w2_oihw = jax.random.normal(k2, (Cout, Cout, 3, 3), jnp.float32) * std3
    w3_oihw = jax.random.normal(k3, (Cout, Cout, 3, 3), jnp.float32) * std3

    w1_hwio = jnp.transpose(w1_oihw, (2, 3, 1, 0))   # (1,1,Cin,Cout)
    w2_hwio = jnp.transpose(w2_oihw, (2, 3, 1, 0))   # (3,3,Cout,Cout)
    w3_hwio = jnp.transpose(w3_oihw, (2, 3, 1, 0))

    # Folded inference-mode BatchNorm (gamma=1, beta=0, mean=0, var=1, eps).
    bn_scale = np.full((Cout,), 1.0 / math.sqrt(1.0 + BN_EPS), np.float32)
    bn_bias = np.zeros((Cout,), np.float32)
    scale_row = np.tile(bn_scale, W)[None, :]         # (1, W*Cout)
    bias_row = np.tile(bn_bias, W)[None, :]           # (1, W*Cout)

    b1 = band_matrices(np.asarray(w1_hwio), W)[0] * scale_row     # (W*Cin,  W*Cout)
    b2 = band_matrices(np.asarray(w2_hwio), W) * scale_row[None]  # (3, W*Cout, W*Cout)
    b3 = band_matrices(np.asarray(w3_hwio), W) * scale_row[None]

    return dict(
        cout=Cout,
        b1=jnp.asarray(b1), b2=jnp.asarray(b2), b3=jnp.asarray(b3),
        bias1=jnp.asarray(bias_row), bias2=jnp.asarray(bias_row),
        bias3=jnp.asarray(bias_row),
        w1_hwio=w1_hwio, w2_hwio=w2_hwio, w3_hwio=w3_hwio,
        bn_scale=jnp.asarray(bn_scale), bn_bias=jnp.asarray(bn_bias),
    )


# ---------------------------------------------------------------------------
# Wrapper
# ---------------------------------------------------------------------------
def reduction_pallas(x_nchw, params):
    N, Cin, H, W = x_nchw.shape
    Cout = params["cout"]
    WCin, WCout = W * Cin, W * Cout

    # NCHW -> lane-dense (N, H, W*Cin) slab (layout plumbing done in the wrapper).
    x = jnp.transpose(x_nchw, (0, 2, 3, 1)).astype(jnp.float32).reshape(N, H, WCin)

    out = pl.pallas_call(
        reduction_kernel,
        out_shape=jax.ShapeDtypeStruct((N, H, WCout), jnp.float32),
        grid=(N,),
        in_specs=[
            pl.BlockSpec((1, H, WCin), lambda n: (n, 0, 0)),
            pl.BlockSpec((WCin, WCout), lambda n: (0, 0)),
            pl.BlockSpec((1, WCout), lambda n: (0, 0)),
            pl.BlockSpec((3, WCout, WCout), lambda n: (0, 0, 0)),
            pl.BlockSpec((1, WCout), lambda n: (0, 0)),
            pl.BlockSpec((3, WCout, WCout), lambda n: (0, 0, 0)),
            pl.BlockSpec((1, WCout), lambda n: (0, 0)),
        ],
        out_specs=pl.BlockSpec((1, H, WCout), lambda n: (n, 0, 0)),
        scratch_shapes=[pltpu.VMEM((H + 2, WCout), jnp.float32)],
        compiler_params=pltpu.CompilerParams(
            dimension_semantics=("parallel",),
            vmem_limit_bytes=32 * 1024 * 1024,
        ),
    )(x, params["b1"], params["bias1"], params["b2"], params["bias2"],
      params["b3"], params["bias3"])

    # (N, H, W*Cout) -> NCHW
    return jnp.transpose(out.reshape(N, H, W, Cout), (0, 3, 1, 2))


# ---------------------------------------------------------------------------
# Pure-JAX reference (independent path: lax.conv_general_dilated)
# ---------------------------------------------------------------------------
def reduction_reference(x_nchw, params):
    x = jnp.transpose(x_nchw, (0, 2, 3, 1)).astype(jnp.float32)   # NHWC

    def conv_bn(h, w_hwio, pad):
        y = jax.lax.conv_general_dilated(
            h, w_hwio, window_strides=(1, 1),
            padding=((pad, pad), (pad, pad)),
            dimension_numbers=("NHWC", "HWIO", "NHWC"))
        return y * params["bn_scale"] + params["bn_bias"]

    y = conv_bn(x, params["w1_hwio"], 0)
    y = conv_bn(y, params["w2_hwio"], 1)
    y = conv_bn(y, params["w3_hwio"], 1)
    y = jnp.maximum(y, 0.0)
    return jnp.transpose(y, (0, 3, 1, 2))


# ---------------------------------------------------------------------------
if __name__ == "__main__":
    N, Cin, Cout, H, W = 2, 32, 32, 16, 16   # Reduction defaults: in/out channels = 32
    key = jax.random.PRNGKey(0)
    kx, kp = jax.random.split(key)

    x = jax.random.normal(kx, (N, Cin, H, W), jnp.float32)
    params = make_params(kp, Cin, Cout, W)

    out = jax.block_until_ready(reduction_pallas(x, params))
    ref = reduction_reference(x, params)

    assert out.shape == (N, Cout, H, W)
    # Tolerance covers MXU default-precision f32 matmul rounding across 3 chained convs.
    np.testing.assert_allclose(np.asarray(out), np.asarray(ref), rtol=2e-2, atol=2e-2)

    print("KERNEL_OK")
</pallas_src>

<mosaic_0001>
module attributes {stable_mosaic.version = 11 : i64} {
  func.func @reduction_kernel(%arg0: i32, %arg1: memref<1x16x512xf32, #tpu.memory_space<vmem>>, %arg2: memref<512x512xf32, #tpu.memory_space<vmem>>, %arg3: memref<1x512xf32, #tpu.memory_space<vmem>>, %arg4: memref<3x512x512xf32, #tpu.memory_space<vmem>>, %arg5: memref<1x512xf32, #tpu.memory_space<vmem>>, %arg6: memref<3x512x512xf32, #tpu.memory_space<vmem>>, %arg7: memref<1x512xf32, #tpu.memory_space<vmem>>, %arg8: memref<1x16x512xf32, #tpu.memory_space<vmem>>, %arg9: memref<18x512xf32, #tpu.memory_space<vmem>>) attributes {dimension_semantics = [#tpu.dimension_semantics<parallel>], iteration_bounds = array<i64: 2>, scalar_prefetch = 0 : i64, scratch_operands = 1 : i64, tpu.core_type = #tpu.core_type<tc>, window_params = [{transform_indices = @transform_0, window_bounds = array<i64: 1, 16, 512>}, {pipeline_mode = #tpu.pipeline_mode<synchronous>, transform_indices = @transform_1, window_bounds = array<i64: 512, 512>}, {pipeline_mode = #tpu.pipeline_mode<synchronous>, transform_indices = @transform_2, window_bounds = array<i64: 1, 512>}, {pipeline_mode = #tpu.pipeline_mode<synchronous>, transform_indices = @transform_3, window_bounds = array<i64: 3, 512, 512>}, {pipeline_mode = #tpu.pipeline_mode<synchronous>, transform_indices = @transform_4, window_bounds = array<i64: 1, 512>}, {pipeline_mode = #tpu.pipeline_mode<synchronous>, transform_indices = @transform_5, window_bounds = array<i64: 3, 512, 512>}, {pipeline_mode = #tpu.pipeline_mode<synchronous>, transform_indices = @transform_6, window_bounds = array<i64: 1, 512>}, {transform_indices = @transform_7, window_bounds = array<i64: 1, 16, 512>}]} {
    %cst = arith.constant 0.000000e+00 : f32
    %0 = vector.broadcast %cst : f32 to vector<1x512xf32>
    %c0 = arith.constant 0 : index
    %c0_0 = arith.constant 0 : index
    %1 = vector.load %arg9[%c0, %c0_0] : memref<18x512xf32, #tpu.memory_space<vmem>>, vector<1x512xf32>
    tpu.vector_store %arg9[%c0, %c0_0], %0 {strides = array<i32>} : memref<18x512xf32, #tpu.memory_space<vmem>>, vector<1x512xf32>,
    %c17 = arith.constant 17 : index
    %c0_1 = arith.constant 0 : index
    %2 = vector.load %arg9[%c17, %c0_1] : memref<18x512xf32, #tpu.memory_space<vmem>>, vector<1x512xf32>
    tpu.vector_store %arg9[%c17, %c0_1], %0 {strides = array<i32>} : memref<18x512xf32, #tpu.memory_space<vmem>>, vector<1x512xf32>,
    %c0_2 = arith.constant 0 : index
    %c0_3 = arith.constant 0 : index
    %c0_4 = arith.constant 0 : index
    %3 = vector.load %arg1[%c0_2, %c0_3, %c0_4] : memref<1x16x512xf32, #tpu.memory_space<vmem>>, vector<1x16x512xf32>
    %4 = vector.shape_cast %3 : vector<1x16x512xf32> to vector<16x512xf32>
    %c0_5 = arith.constant 0 : index
    %c0_6 = arith.constant 0 : index
    %5 = vector.load %arg2[%c0_5, %c0_6] : memref<512x512xf32, #tpu.memory_space<vmem>>, vector<512x512xf32>
    %cst_7 = arith.constant dense<0.000000e+00> : vector<16x512xf32>
    %6 = tpu.matmul %4, %5, %cst_7 {dimension_numbers = #tpu.dot_dimension_numbers<[1], [0], [0], [1], [0, 0, 1, 1], [], []>} : vector<16x512xf32>, vector<512x512xf32>, vector<16x512xf32> -> vector<16x512xf32>
    %c0_8 = arith.constant 0 : index
    %c0_9 = arith.constant 0 : index
    %7 = vector.load %arg3[%c0_8, %c0_9] : memref<1x512xf32, #tpu.memory_space<vmem>>, vector<1x512xf32>
    %8 = vector.broadcast %7 : vector<1x512xf32> to vector<16x512xf32>
    %9 = arith.addf %6, %8 : vector<16x512xf32>
    %c1 = arith.constant 1 : index
    %c0_10 = arith.constant 0 : index
    %10 = vector.load %arg9[%c1, %c0_10] : memref<18x512xf32, #tpu.memory_space<vmem>>, vector<16x512xf32>
    tpu.vector_store %arg9[%c1, %c0_10], %9 {strides = array<i32>} : memref<18x512xf32, #tpu.memory_space<vmem>>, vector<16x512xf32>,
    %c0_11 = arith.constant 0 : index
    %c0_12 = arith.constant 0 : index
    %11 = vector.load %arg9[%c0_11, %c0_12] : memref<18x512xf32, #tpu.memory_space<vmem>>, vector<16x512xf32>
    %c0_13 = arith.constant 0 : index
    %c0_14 = arith.constant 0 : index
    %c0_15 = arith.constant 0 : index
    %12 = vector.load %arg4[%c0_13, %c0_14, %c0_15] : memref<3x512x512xf32, #tpu.memory_space<vmem>>, vector<1x512x512xf32>
    %13 = vector.shape_cast %12 : vector<1x512x512xf32> to vector<512x512xf32>
    %cst_16 = arith.constant dense<0.000000e+00> : vector<16x512xf32>
    %14 = tpu.matmul %11, %13, %cst_16 {dimension_numbers = #tpu.dot_dimension_numbers<[1], [0], [0], [1], [0, 0, 1, 1], [], []>} : vector<16x512xf32>, vector<512x512xf32>, vector<16x512xf32> -> vector<16x512xf32>
    %c1_17 = arith.constant 1 : index
    %c0_18 = arith.constant 0 : index
    %15 = vector.load %arg9[%c1_17, %c0_18] : memref<18x512xf32, #tpu.memory_space<vmem>>, vector<16x512xf32>
    %c1_19 = arith.constant 1 : index
    %c0_20 = arith.constant 0 : index
    %c0_21 = arith.constant 0 : index
    %16 = vector.load %arg4[%c1_19, %c0_20, %c0_21] : memref<3x512x512xf32, #tpu.memory_space<vmem>>, vector<1x512x512xf32>
    %17 = vector.shape_cast %16 : vector<1x512x512xf32> to vector<512x512xf32>
    %cst_22 = arith.constant dense<0.000000e+00> : vector<16x512xf32>
    %18 = tpu.matmul %15, %17, %cst_22 {dimension_numbers = #tpu.dot_dimension_numbers<[1], [0], [0], [1], [0, 0, 1, 1], [], []>} : vector<16x512xf32>, vector<512x512xf32>, vector<16x512xf32> -> vector<16x512xf32>
    %19 = arith.addf %14, %18 : vector<16x512xf32>
    %c2 = arith.constant 2 : index
    %c0_23 = arith.constant 0 : index
    %20 = vector.load %arg9[%c2, %c0_23] : memref<18x512xf32, #tpu.memory_space<vmem>>, vector<16x512xf32>
    %c2_24 = arith.constant 2 : index
    %c0_25 = arith.constant 0 : index
    %c0_26 = arith.constant 0 : index
    %21 = vector.load %arg4[%c2_24, %c0_25, %c0_26] : memref<3x512x512xf32, #tpu.memory_space<vmem>>, vector<1x512x512xf32>
    %22 = vector.shape_cast %21 : vector<1x512x512xf32> to vector<512x512xf32>
    %cst_27 = arith.constant dense<0.000000e+00> : vector<16x512xf32>
    %23 = tpu.matmul %20, %22, %cst_27 {dimension_numbers = #tpu.dot_dimension_numbers<[1], [0], [0], [1], [0, 0, 1, 1], [], []>} : vector<16x512xf32>, vector<512x512xf32>, vector<16x512xf32> -> vector<16x512xf32>
    %24 = arith.addf %19, %23 : vector<16x512xf32>
    %c0_28 = arith.constant 0 : index
    %c0_29 = arith.constant 0 : index
    %25 = vector.load %arg5[%c0_28, %c0_29] : memref<1x512xf32, #tpu.memory_space<vmem>>, vector<1x512xf32>
    %26 = vector.broadcast %25 : vector<1x512xf32> to vector<16x512xf32>
    %27 = arith.addf %24, %26 : vector<16x512xf32>
    %c1_30 = arith.constant 1 : index
    %c0_31 = arith.constant 0 : index
    %28 = vector.load %arg9[%c1_30, %c0_31] : memref<18x512xf32, #tpu.memory_space<vmem>>, vector<16x512xf32>
    tpu.vector_store %arg9[%c1_30, %c0_31], %27 {strides = array<i32>} : memref<18x512xf32, #tpu.memory_space<vmem>>, vector<16x512xf32>,
    %c0_32 = arith.constant 0 : index
    %c0_33 = arith.constant 0 : index
    %29 = vector.load %arg9[%c0_32, %c0_33] : memref<18x512xf32, #tpu.memory_space<vmem>>, vector<16x512xf32>
    %c0_34 = arith.constant 0 : index
    %c0_35 = arith.constant 0 : index
    %c0_36 = arith.constant 0 : index
    %30 = vector.load %arg6[%c0_34, %c0_35, %c0_36] : memref<3x512x512xf32, #tpu.memory_space<vmem>>, vector<1x512x512xf32>
    %31 = vector.shape_cast %30 : vector<1x512x512xf32> to vector<512x512xf32>
    %cst_37 = arith.constant dense<0.000000e+00> : vector<16x512xf32>
    %32 = tpu.matmul %29, %31, %cst_37 {dimension_numbers = #tpu.dot_dimension_numbers<[1], [0], [0], [1], [0, 0, 1, 1], [], []>} : vector<16x512xf32>, vector<512x512xf32>, vector<16x512xf32> -> vector<16x512xf32>
    %c1_38 = arith.constant 1 : index
    %c0_39 = arith.constant 0 : index
    %33 = vector.load %arg9[%c1_38, %c0_39] : memref<18x512xf32, #tpu.memory_space<vmem>>, vector<16x512xf32>
    %c1_40 = arith.constant 1 : index
    %c0_41 = arith.constant 0 : index
    %c0_42 = arith.constant 0 : index
    %34 = vector.load %arg6[%c1_40, %c0_41, %c0_42] : memref<3x512x512xf32, #tpu.memory_space<vmem>>, vector<1x512x512xf32>
    %35 = vector.shape_cast %34 : vector<1x512x512xf32> to vector<512x512xf32>
    %cst_43 = arith.constant dense<0.000000e+00> : vector<16x512xf32>
    %36 = tpu.matmul %33, %35, %cst_43 {dimension_numbers = #tpu.dot_dimension_numbers<[1], [0], [0], [1], [0, 0, 1, 1], [], []>} : vector<16x512xf32>, vector<512x512xf32>, vector<16x512xf32> -> vector<16x512xf32>
    %37 = arith.addf %32, %36 : vector<16x512xf32>
    %c2_44 = arith.constant 2 : index
    %c0_45 = arith.constant 0 : index
    %38 = vector.load %arg9[%c2_44, %c0_45] : memref<18x512xf32, #tpu.memory_space<vmem>>, vector<16x512xf32>
    %c2_46 = arith.constant 2 : index
    %c0_47 = arith.constant 0 : index
    %c0_48 = arith.constant 0 : index
    %39 = vector.load %arg6[%c2_46, %c0_47, %c0_48] : memref<3x512x512xf32, #tpu.memory_space<vmem>>, vector<1x512x512xf32>
    %40 = vector.shape_cast %39 : vector<1x512x512xf32> to vector<512x512xf32>
    %cst_49 = arith.constant dense<0.000000e+00> : vector<16x512xf32>
    %41 = tpu.matmul %38, %40, %cst_49 {dimension_numbers = #tpu.dot_dimension_numbers<[1], [0], [0], [1], [0, 0, 1, 1], [], []>} : vector<16x512xf32>, vector<512x512xf32>, vector<16x512xf32> -> vector<16x512xf32>
    %42 = arith.addf %37, %41 : vector<16x512xf32>
    %c0_50 = arith.constant 0 : index
    %c0_51 = arith.constant 0 : index
    %43 = vector.load %arg7[%c0_50, %c0_51] : memref<1x512xf32, #tpu.memory_space<vmem>>, vector<1x512xf32>
    %44 = vector.broadcast %43 : vector<1x512xf32> to vector<16x512xf32>
    %45 = arith.addf %42, %44 : vector<16x512xf32>
    %cst_52 = arith.constant 0.000000e+00 : f32
    %46 = vector.broadcast %cst_52 : f32 to vector<16x512xf32>
    %47 = arith.maximumf %45, %46 : vector<16x512xf32>
    %c0_53 = arith.constant 0 : index
    %c0_54 = arith.constant 0 : index
    %c0_55 = arith.constant 0 : index
    %48 = vector.load %arg8[%c0_53, %c0_54, %c0_55] : memref<1x16x512xf32, #tpu.memory_space<vmem>>, vector<1x16x512xf32>
    %49 = vector.shape_cast %48 : vector<1x16x512xf32> to vector<16x512xf32>
    %50 = vector.shape_cast %47 : vector<16x512xf32> to vector<1x16x512xf32>
    tpu.vector_store %arg8[%c0_53, %c0_54, %c0_55], %50 {strides = array<i32>} : memref<1x16x512xf32, #tpu.memory_space<vmem>>, vector<1x16x512xf32>,
    return
  }
  func.func @transform_0(%arg0: i32) -> (i32, i32, i32) {
    %c0_i32 = arith.constant 0 : i32
    %c0_i32_0 = arith.constant 0 : i32
    %c0_i32_1 = arith.constant 0 : i32
    return %arg0, %c0_i32, %c0_i32_0 : i32, i32, i32
  }
  func.func @transform_1(%arg0: i32) -> (i32, i32) {
    %c0_i32 = arith.constant 0 : i32
    %c0_i32_0 = arith.constant 0 : i32
    %c0_i32_1 = arith.constant 0 : i32
    return %c0_i32, %c0_i32_0 : i32, i32
  }
  func.func @transform_2(%arg0: i32) -> (i32, i32) {
    %c0_i32 = arith.constant 0 : i32
    %c0_i32_0 = arith.constant 0 : i32
    %c0_i32_1 = arith.constant 0 : i32
    return %c0_i32, %c0_i32_0 : i32, i32
  }
  func.func @transform_3(%arg0: i32) -> (i32, i32, i32) {
    %c0_i32 = arith.constant 0 : i32
    %c0_i32_0 = arith.constant 0 : i32
    %c0_i32_1 = arith.constant 0 : i32
    %c0_i32_2 = arith.constant 0 : i32
    return %c0_i32, %c0_i32_0, %c0_i32_1 : i32, i32, i32
  }
  func.func @transform_4(%arg0: i32) -> (i32, i32) {
    %c0_i32 = arith.constant 0 : i32
    %c0_i32_0 = arith.constant 0 : i32
    %c0_i32_1 = arith.constant 0 : i32
    return %c0_i32, %c0_i32_0 : i32, i32
  }
  func.func @transform_5(%arg0: i32) -> (i32, i32, i32) {
    %c0_i32 = arith.constant 0 : i32
    %c0_i32_0 = arith.constant 0 : i32
    %c0_i32_1 = arith.constant 0 : i32
    %c0_i32_2 = arith.constant 0 : i32
    return %c0_i32, %c0_i32_0, %c0_i32_1 : i32, i32, i32
  }
  func.func @transform_6(%arg0: i32) -> (i32, i32) {
    %c0_i32 = arith.constant 0 : i32
    %c0_i32_0 = arith.constant 0 : i32
    %c0_i32_1 = arith.constant 0 : i32
    return %c0_i32, %c0_i32_0 : i32, i32
  }
  func.func @transform_7(%arg0: i32) -> (i32, i32, i32) {
    %c0_i32 = arith.constant 0 : i32
    %c0_i32_0 = arith.constant 0 : i32
    %c0_i32_1 = arith.constant 0 : i32
    return %arg0, %c0_i32, %c0_i32_0 : i32, i32, i32
  }
}

</mosaic_0001>

<llo_original>
// kernel: tpu_custom_call.1
$region0: #{tpu_custom_call.1}
  #allocation0 [shape = 'u32[]', space=smem, size = 0x4, offset = 0x4, fixed_abs, tag = 'smem constant byte address 0x4 - core index']
  #allocation1 [shape = 'u32[144,128]{1,0:T(1,128)}', space=vmem, size = 0x12000, scoped, tag = 'internal scratch']
  #allocation2 [shape = 'f32[18,512]{1,0:T(8,128)}', space=vmem, size = 0xc000, scoped, tag = 'scratch operand']
  %s0 = inlined_call_operand.hbm [shape: f32[2,16,512], index: 0, kind: input, shape index: {}]
  %s1 = inlined_call_operand.hbm [shape: f32[512,512], index: 1, kind: input, shape index: {}]
  %s2 = inlined_call_operand.hbm [shape: f32[1,512], index: 2, kind: input, shape index: {}]
  %s3 = inlined_call_operand.hbm [shape: f32[3,512,512], index: 3, kind: input, shape index: {}]
  %s4 = inlined_call_operand.hbm [shape: f32[1,512], index: 4, kind: input, shape index: {}]
  %s5 = inlined_call_operand.hbm [shape: f32[3,512,512], index: 5, kind: input, shape index: {}]
  %s6 = inlined_call_operand.hbm [shape: f32[1,512], index: 6, kind: input, shape index: {}]
  %s7 = inlined_call_operand.hbm [shape: f32[2,16,512], index: 7, kind: output, shape index: {}]
  %s8 = sld [smem:[#allocation0]]
  $region89: #{tpu_custom_call.1} parent=0
    _
  %s10 = ssub.s32 1, %s8
  %s11 = scalar_select 0, %s10, %s8
  $region1: #{tpu_custom_call.1} parent=0
    #allocation3 [shape = 'u8[65536]{0}', space=vmem, size = 0x10000, scoped, tag = 'input window, operand 0']
    #allocation4 [shape = 's32[2]{0}', space=sflag, size = 0x8, scoped, tag = 'scoped memory for tpu_custom_call.1']
    #allocation5 [shape = 's32[2]{0}', space=sflag, size = 0x8, scoped, tag = 'scoped memory for tpu_custom_call.1']
    #allocation6 [shape = 'u8[1048576]{0}', space=vmem, size = 0x100000, scoped, tag = 'input window, operand 1, single buffered']
    #allocation7 [shape = 's32[1]{0}', space=sflag, size = 0x4, scoped, tag = 'scoped memory for tpu_custom_call.1']
    #allocation8 [shape = 'u8[2048]{0}', space=vmem, size = 0x800, scoped, tag = 'input window, operand 2, single buffered']
    #allocation9 [shape = 'u8[3145728]{0}', space=vmem, size = 0x300000, scoped, tag = 'input window, operand 3, single buffered']
    #allocation10 [shape = 's32[1]{0}', space=sflag, size = 0x4, scoped, tag = 'scoped memory for tpu_custom_call.1']
    #allocation11 [shape = 'u8[2048]{0}', space=vmem, size = 0x800, scoped, tag = 'input window, operand 4, single buffered']
    #allocation12 [shape = 'u8[3145728]{0}', space=vmem, size = 0x300000, scoped, tag = 'input window, operand 5, single buffered']
    #allocation13 [shape = 's32[1]{0}', space=sflag, size = 0x4, scoped, tag = 'scoped memory for tpu_custom_call.1']
    #allocation14 [shape = 'u8[2048]{0}', space=vmem, size = 0x800, scoped, tag = 'input window, operand 6, single buffered']
    #allocation15 [shape = 'u8[65536]{0}', space=vmem, size = 0x10000, scoped, tag = 'output window, operand 0']
    %12 = vsyncpa [#allocation4], 0
    %s13 = scalar_lea.sflag [#allocation4], 1
    %14 = vsyncpa %s13, 0
    %15 = vsyncpa [#allocation7], 0
    %16 = vsyncpa [#allocation10], 0
    %17 = vsyncpa [#allocation13], 0
    %18 = vsyncpa [#allocation5], 0
    %s19 = scalar_lea.sflag [#allocation5], 1
    %20 = vsyncpa %s19, 0
    loop: start=0, step=1, limit=4
    $region2: #{tpu_custom_call.1} parent=1 // loop_pre_header
      _
    $region3: #{tpu_custom_call.1} parent=1 // loop_header
      %s22 = sphi 0, %s26
      %p23 = scmp.ge.s32.totalorder %s22, 4
      %s32 = sphi 0, %s34
      %s35 = sphi 0, %s32
      %s36 = sphi 0, %s35
      %s52 = sphi 0, %s36
      %s56 = sphi 0, %s56
      %s58 = sphi 0, %s56
      %s59 = sphi 0, %s58
      %s73 = sphi 0, %s59
      %s77 = sphi 0, %s77
      %s79 = sphi 0, %s77
      %s80 = sphi 0, %s79
      %s94 = sphi 0, %s80
      %s98 = sphi 0, %s98
      %s100 = sphi 0, %s98
      %s101 = sphi 0, %s100
      %s115 = sphi 0, %s101
      %s119 = sphi 0, %s119
      %s121 = sphi 0, %s119
      %s122 = sphi 0, %s121
      %s136 = sphi 0, %s122
      %s140 = sphi 0, %s140
      %s142 = sphi 0, %s140
      %s143 = sphi 0, %s142
      %s157 = sphi 0, %s143
      %s161 = sphi 0, %s161
      %s163 = sphi 0, %s161
      %s164 = sphi 0, %s163
      %s178 = sphi 0, %s164
      %s184 = sphi 0, %s186
      %s187 = sphi 0, %s184
      %s188 = sphi 0, %s187
      %s204 = sphi 0, %s188
    $region4: #{tpu_custom_call.1} parent=1 // loop_header_branch
      %25 = sbr.rel (%p23) target = $region8
    $region5: #{tpu_custom_call.1} parent=1 // loop_body
      %s27 = ssub.s32 %s22, 1
      %s28 = ssub.s32 %s22, 2
      %s29 = sadd.s32 %s22, 1
      %s30 = ssub.s32 %s22, %s29
      %p31 = scmp.eq.s32.totalorder %s30, 0
      %s33 = sadd.s32 %s32, 1
      %s34 = scalar_select %p31, %s32, %s33
      %p37 = pneg %p31
      %p38 = scmp.eq.s32.totalorder %s22, 1
      %p39 = por %p37, %p38
      %p40 = scmp.ne.s32.totalorder %s32, %s35
      %p41 = scmp.eq.s32.totalorder %s22, 0
      %p42 = por %p40, %p41
      %p43 = scmp.ne.s32.totalorder %s32, %s35
      %p44 = scmp.eq.s32.totalorder %s27, 1
      %p45 = por %p43, %p44
      %p46 = scmp.ne.s32.totalorder %s35, %s36
      %p47 = scmp.eq.s32.totalorder %s27, 0
      %p48 = por %p46, %p47
      %p49 = scmp.ne.s32.totalorder %s35, %s36
      %p50 = scmp.eq.s32.totalorder %s28, 1
      %p51 = por %p49, %p50
      %p53 = scmp.ne.s32.totalorder %s36, %s52
      %p54 = scmp.eq.s32.totalorder %s28, 0
      %p55 = por %p53, %p54
      %s57 = sadd.s32 %s56, 1
      %p60 = scmp.eq.s32.totalorder %s22, 1
      %p61 = scmp.ne.s32.totalorder %s56, %s58
      %p62 = scmp.eq.s32.totalorder %s22, 0
      %p63 = por %p61, %p62
      %p64 = scmp.ne.s32.totalorder %s56, %s58
      %p65 = scmp.eq.s32.totalorder %s27, 1
      %p66 = por %p64, %p65
      %p67 = scmp.ne.s32.totalorder %s58, %s59
      %p68 = scmp.eq.s32.totalorder %s27, 0
      %p69 = por %p67, %p68
      %p70 = scmp.ne.s32.totalorder %s58, %s59
      %p71 = scmp.eq.s32.totalorder %s28, 1
      %p72 = por %p70, %p71
      %p74 = scmp.ne.s32.totalorder %s59, %s73
      %p75 = scmp.eq.s32.totalorder %s28, 0
      %p76 = por %p74, %p75
      %s78 = sadd.s32 %s77, 1
      %p81 = scmp.eq.s32.totalorder %s22, 1
      %p82 = scmp.ne.s32.totalorder %s77, %s79
      %p83 = scmp.eq.s32.totalorder %s22, 0
      %p84 = por %p82, %p83
      %p85 = scmp.ne.s32.totalorder %s77, %s79
      %p86 = scmp.eq.s32.totalorder %s27, 1
      %p87 = por %p85, %p86
      %p88 = scmp.ne.s32.totalorder %s79, %s80
      %p89 = scmp.eq.s32.totalorder %s27, 0
      %p90 = por %p88, %p89
      %p91 = scmp.ne.s32.totalorder %s79, %s80
      %p92 = scmp.eq.s32.totalorder %s28, 1
      %p93 = por %p91, %p92
      %p95 = scmp.ne.s32.totalorder %s80, %s94
      %p96 = scmp.eq.s32.totalorder %s28, 0
      %p97 = por %p95, %p96
      %s99 = sadd.s32 %s98, 1
      %p102 = scmp.eq.s32.totalorder %s22, 1
      %p103 = scmp.ne.s32.totalorder %s98, %s100
      %p104 = scmp.eq.s32.totalorder %s22, 0
      %p105 = por %p103, %p104
      %p106 = scmp.ne.s32.totalorder %s98, %s100
      %p107 = scmp.eq.s32.totalorder %s27, 1
      %p108 = por %p106, %p107
      %p109 = scmp.ne.s32.totalorder %s100, %s101
      %p110 = scmp.eq.s32.totalorder %s27, 0
      %p111 = por %p109, %p110
      %p112 = scmp.ne.s32.totalorder %s100, %s101
      %p113 = scmp.eq.s32.totalorder %s28, 1
      %p114 = por %p112, %p113
      %p116 = scmp.ne.s32.totalorder %s101, %s115
      %p117 = scmp.eq.s32.totalorder %s28, 0
      %p118 = por %p116, %p117
      %s120 = sadd.s32 %s119, 1
      %p123 = scmp.eq.s32.totalorder %s22, 1
      %p124 = scmp.ne.s32.totalorder %s119, %s121
      %p125 = scmp.eq.s32.totalorder %s22, 0
      %p126 = por %p124, %p125
      %p127 = scmp.ne.s32.totalorder %s119, %s121
      %p128 = scmp.eq.s32.totalorder %s27, 1
      %p129 = por %p127, %p128
      %p130 = scmp.ne.s32.totalorder %s121, %s122
      %p131 = scmp.eq.s32.totalorder %s27, 0
      %p132 = por %p130, %p131
      %p133 = scmp.ne.s32.totalorder %s121, %s122
      %p134 = scmp.eq.s32.totalorder %s28, 1
      %p135 = por %p133, %p134
      %p137 = scmp.ne.s32.totalorder %s122, %s136
      %p138 = scmp.eq.s32.totalorder %s28, 0
      %p139 = por %p137, %p138
      %s141 = sadd.s32 %s140, 1
      %p144 = scmp.eq.s32.totalorder %s22, 1
      %p145 = scmp.ne.s32.totalorder %s140, %s142
      %p146 = scmp.eq.s32.totalorder %s22, 0
      %p147 = por %p145, %p146
      %p148 = scmp.ne.s32.totalorder %s140, %s142
      %p149 = scmp.eq.s32.totalorder %s27, 1
      %p150 = por %p148, %p149
      %p151 = scmp.ne.s32.totalorder %s142, %s143
      %p152 = scmp.eq.s32.totalorder %s27, 0
      %p153 = por %p151, %p152
      %p154 = scmp.ne.s32.totalorder %s142, %s143
      %p155 = scmp.eq.s32.totalorder %s28, 1
      %p156 = por %p154, %p155
      %p158 = scmp.ne.s32.totalorder %s143, %s157
      %p159 = scmp.eq.s32.totalorder %s28, 0
      %p160 = por %p158, %p159
      %s162 = sadd.s32 %s161, 1
      %p165 = scmp.eq.s32.totalorder %s22, 1
      %p166 = scmp.ne.s32.totalorder %s161, %s163
      %p167 = scmp.eq.s32.totalorder %s22, 0
      %p168 = por %p166, %p167
      %p169 = scmp.ne.s32.totalorder %s161, %s163
      %p170 = scmp.eq.s32.totalorder %s27, 1
      %p171 = por %p169, %p170
      %p172 = scmp.ne.s32.totalorder %s163, %s164
      %p173 = scmp.eq.s32.totalorder %s27, 0
      %p174 = por %p172, %p173
      %p175 = scmp.ne.s32.totalorder %s163, %s164
      %p176 = scmp.eq.s32.totalorder %s28, 1
      %p177 = por %p175, %p176
      %p179 = scmp.ne.s32.totalorder %s164, %s178
      %p180 = scmp.eq.s32.totalorder %s28, 0
      %p181 = por %p179, %p180
      %s182 = ssub.s32 %s22, %s29
      %p183 = scmp.eq.s32.totalorder %s182, 0
      %s185 = sadd.s32 %s184, 1
      %s186 = scalar_select %p183, %s184, %s185
      %p189 = pneg %p183
      %p190 = scmp.eq.s32.totalorder %s22, 1
      %p191 = por %p189, %p190
      %p192 = scmp.ne.s32.totalorder %s184, %s187
      %p193 = scmp.eq.s32.totalorder %s22, 0
      %p194 = por %p192, %p193
      %p195 = scmp.ne.s32.totalorder %s184, %s187
      %p196 = scmp.eq.s32.totalorder %s27, 1
      %p197 = por %p195, %p196
      %p198 = scmp.ne.s32.totalorder %s187, %s188
      %p199 = scmp.eq.s32.totalorder %s27, 0
      %p200 = por %p198, %p199
      %p201 = scmp.ne.s32.totalorder %s187, %s188
      %p202 = scmp.eq.s32.totalorder %s28, 1
      %p203 = por %p201, %p202
      %p205 = scmp.ne.s32.totalorder %s188, %s204
      %p206 = scmp.eq.s32.totalorder %s28, 0
      %p207 = por %p205, %p206
      %p208 = scmp.le.s32.totalorder 1, %s22
      %p209 = scmp.lt.s32.totalorder %s22, 3
      %p210 = pnand %p208, %p209
      %p211 = pneg %p210
      // Predicated region
      $region9: #{tpu_custom_call.1} parent=5 // pred_check
        _
      $region10: #{tpu_custom_call.1} parent=5 // pred_check_branch
        %213 = sbr.rel (%p210) target = $region12
      $region11: #{tpu_custom_call.1} parent=5 // pred_region
        %s214 = ssub.s32 %s22, 1
        // Predicated region
        $region13: #{tpu_custom_call.1} parent=11 // pred_check
          %p215 = pneg %p69
        $region14: #{tpu_custom_call.1} parent=11 // pred_check_branch
          %217 = sbr.rel (%p215) target = $region16
        $region15: #{tpu_custom_call.1} parent=11 // pred_region
          %s219 = ssub.s32 32768, 32768
          %220 = vsyncadd [#allocation7], %s219
          %s221 = sshll.u32 [#allocation6], 4
          %s222 = int_to_ptr.vmem [resolvable:$true] %s221
          %227 = dma.hbm_to_vmem [thread:$0]  %s1, 32768, %s222, [#allocation7], 512, 512, 32
        $region16: #{tpu_custom_call.1} parent=11 // pred_fallthru
          _
        // Predicated region
        $region17: #{tpu_custom_call.1} parent=11 // pred_check
          %p228 = pneg %p90
        $region18: #{tpu_custom_call.1} parent=11 // pred_check_branch
          %230 = sbr.rel (%p228) target = $region20
        $region19: #{tpu_custom_call.1} parent=11 // pred_region
          %s232 = ssub.s32 64, 64
          %233 = vsyncadd [#allocation7], %s232
          %s235 = sshll.u32 [#allocation8], 4
          %s236 = int_to_ptr.vmem [resolvable:$true] %s235
          %238 = dma.hbm_to_vmem [thread:$0]  %s2, 64, %s236, [#allocation7]
        $region20: #{tpu_custom_call.1} parent=11 // pred_fallthru
          _
        // Predicated region
        $region21: #{tpu_custom_call.1} parent=11 // pred_check
          %p239 = pneg %p111
        $region22: #{tpu_custom_call.1} parent=11 // pred_check_branch
          %241 = sbr.rel (%p239) target = $region24
        $region23: #{tpu_custom_call.1} parent=11 // pred_region
          %s243 = ssub.s32 98304, 98304
          %244 = vsyncadd [#allocation10], %s243
          %s245 = sshll.u32 [#allocation9], 4
          %s246 = int_to_ptr.vmem [resolvable:$true] %s245
          %251 = dma.hbm_to_vmem [thread:$0]  %s3, 98304, %s246, [#allocation10], 512, 512, 32
        $region24: #{tpu_custom_call.1} parent=11 // pred_fallthru
          _
        // Predicated region
        $region25: #{tpu_custom_call.1} parent=11 // pred_check
          %p252 = pneg %p132
        $region26: #{tpu_custom_call.1} parent=11 // pred_check_branch
          %254 = sbr.rel (%p252) target = $region28
        $region27: #{tpu_custom_call.1} parent=11 // pred_region
          %s256 = ssub.s32 64, 64
          %257 = vsyncadd [#allocation10], %s256
          %s259 = sshll.u32 [#allocation11], 4
          %s260 = int_to_ptr.vmem [resolvable:$true] %s259
          %262 = dma.hbm_to_vmem [thread:$0]  %s4, 64, %s260, [#allocation10]
        $region28: #{tpu_custom_call.1} parent=11 // pred_fallthru
          _
        // Predicated region
        $region29: #{tpu_custom_call.1} parent=11 // pred_check
          %p263 = pneg %p153
        $region30: #{tpu_custom_call.1} parent=11 // pred_check_branch
          %265 = sbr.rel (%p263) target = $region32
        $region31: #{tpu_custom_call.1} parent=11 // pred_region
          %s267 = ssub.s32 98304, 98304
          %268 = vsyncadd [#allocation13], %s267
          %s269 = sshll.u32 [#allocation12], 4
          %s270 = int_to_ptr.vmem [resolvable:$true] %s269
          %275 = dma.hbm_to_vmem [thread:$0]  %s5, 98304, %s270, [#allocation13], 512, 512, 32
        $region32: #{tpu_custom_call.1} parent=11 // pred_fallthru
          _
        // Predicated region
        $region33: #{tpu_custom_call.1} parent=11 // pred_check
          %p276 = pneg %p174
        $region34: #{tpu_custom_call.1} parent=11 // pred_check_branch
          %278 = sbr.rel (%p276) target = $region36
        $region35: #{tpu_custom_call.1} parent=11 // pred_region
          %s280 = ssub.s32 64, 64
          %281 = vsyncadd [#allocation13], %s280
          %s283 = sshll.u32 [#allocation14], 4
          %s284 = int_to_ptr.vmem [resolvable:$true] %s283
          %286 = dma.hbm_to_vmem [thread:$0]  %s6, 64, %s284, [#allocation13]
        $region36: #{tpu_custom_call.1} parent=11 // pred_fallthru
          _
      $region12: #{tpu_custom_call.1} parent=5 // pred_fallthru
        _
      %p287 = scmp.lt.s32.totalorder %s22, 2
      // Predicated region
      $region37: #{tpu_custom_call.1} parent=5 // pred_check
        %p288 = pneg %p287
      $region38: #{tpu_custom_call.1} parent=5 // pred_check_branch
        %290 = sbr.rel (%p288) target = $region40
      $region39: #{tpu_custom_call.1} parent=5 // pred_region
        // Predicated region
        $region41: #{tpu_custom_call.1} parent=39 // pred_check
          %p291 = pneg %p42
        $region42: #{tpu_custom_call.1} parent=39 // pred_check_branch
          %293 = sbr.rel (%p291) target = $region44
        $region43: #{tpu_custom_call.1} parent=39 // pred_region
          %s294 = sand.u32 %s32, 1
          %s295 = scalar_lea.sflag [#allocation4], %s294
          %s296 = sand.u32 %s32, 1
          %s297 = smul.addr %s296, 64
          %s298 = scalar_lea.vmem [#allocation3], %s297
          %s300 = ssub.s32 1024, 1024
          %301 = vsyncadd %s295, %s300
          %s302 = smul.addr %s22, 8
          %s303 = smul.addr %s302, 128
          %s304 = scalar_lea.hbm %s0, %s303
          %s305 = sshll.u32 %s298, 4
          %s306 = int_to_ptr.vmem [resolvable:$true] %s305
          %311 = dma.hbm_to_vmem [thread:$0]  %s304, 1024, %s306, %s295, 512, 512, 32
        $region44: #{tpu_custom_call.1} parent=39 // pred_fallthru
          _
      $region40: #{tpu_custom_call.1} parent=5 // pred_fallthru
        _
      %p312 = scmp.le.s32.totalorder 1, %s22
      %p313 = scmp.lt.s32.totalorder %s22, 3
      %p314 = pnand %p312, %p313
      %p315 = pneg %p314
      // Predicated region
      $region45: #{tpu_custom_call.1} parent=5 // pred_check
        _
      $region46: #{tpu_custom_call.1} parent=5 // pred_check_branch
        %317 = sbr.rel (%p314) target = $region48
      $region47: #{tpu_custom_call.1} parent=5 // pred_region
        %s318 = ssub.s32 %s22, 1
        %s319 = sand.u32 %s35, 1
        %s320 = scalar_lea.sflag [#allocation4], %s319
        %s321 = sand.u32 %s35, 1
        %s322 = smul.addr %s321, 64
        %s323 = scalar_lea.vmem [#allocation3], %s322
        // Predicated region
        $region49: #{tpu_custom_call.1} parent=47 // pred_check
          %p324 = pneg %p48
        $region50: #{tpu_custom_call.1} parent=47 // pred_check_branch
          %326 = sbr.rel (%p324) target = $region52
        $region51: #{tpu_custom_call.1} parent=47 // pred_region
          %327 = dma.done %s320, 1024
        $region52: #{tpu_custom_call.1} parent=47 // pred_fallthru
          _
        // Predicated region
        $region53: #{tpu_custom_call.1} parent=47 // pred_check
          %p328 = pneg %p69
        $region54: #{tpu_custom_call.1} parent=47 // pred_check_branch
          %330 = sbr.rel (%p328) target = $region56
        $region55: #{tpu_custom_call.1} parent=47 // pred_region
          %331 = dma.done [#allocation7], 32768
        $region56: #{tpu_custom_call.1} parent=47 // pred_fallthru
          _
        // Predicated region
        $region57: #{tpu_custom_call.1} parent=47 // pred_check
          %p332 = pneg %p90
        $region58: #{tpu_custom_call.1} parent=47 // pred_check_branch
          %334 = sbr.rel (%p332) target = $region60
        $region59: #{tpu_custom_call.1} parent=47 // pred_region
          %335 = dma.done [#allocation7], 64
        $region60: #{tpu_custom_call.1} parent=47 // pred_fallthru
          _
        // Predicated region
        $region61: #{tpu_custom_call.1} parent=47 // pred_check
          %p336 = pneg %p111
        $region62: #{tpu_custom_call.1} parent=47 // pred_check_branch
          %338 = sbr.rel (%p336) target = $region64
        $region63: #{tpu_custom_call.1} parent=47 // pred_region
          %339 = dma.done [#allocation10], 98304
        $region64: #{tpu_custom_call.1} parent=47 // pred_fallthru
          _
        // Predicated region
        $region65: #{tpu_custom_call.1} parent=47 // pred_check
          %p340 = pneg %p132
        $region66: #{tpu_custom_call.1} parent=47 // pred_check_branch
          %342 = sbr.rel (%p340) target = $region68
        $region67: #{tpu_custom_call.1} parent=47 // pred_region
          %343 = dma.done [#allocation10], 64
        $region68: #{tpu_custom_call.1} parent=47 // pred_fallthru
          _
        // Predicated region
        $region69: #{tpu_custom_call.1} parent=47 // pred_check
          %p344 = pneg %p153
        $region70: #{tpu_custom_call.1} parent=47 // pred_check_branch
          %346 = sbr.rel (%p344) target = $region72
        $region71: #{tpu_custom_call.1} parent=47 // pred_region
          %347 = dma.done [#allocation13], 98304
        $region72: #{tpu_custom_call.1} parent=47 // pred_fallthru
          _
        // Predicated region
        $region73: #{tpu_custom_call.1} parent=47 // pred_check
          %p348 = pneg %p174
        $region74: #{tpu_custom_call.1} parent=47 // pred_check_branch
          %350 = sbr.rel (%p348) target = $region76
        $region75: #{tpu_custom_call.1} parent=47 // pred_region
          %351 = dma.done [#allocation13], 64
        $region76: #{tpu_custom_call.1} parent=47 // pred_fallthru
          _
        %s352 = sand.u32 %s35, 1
        %s353 = scalar_lea.sflag [#allocation4], %s352
        %s354 = sand.u32 %s35, 1
        %s355 = smul.addr %s354, 64
        %s356 = scalar_lea.vmem [#allocation3], %s355
        %p357 = pneg %p48
        %p358 = pneg %p45
        %p359 = pneg %p69
        %p360 = pneg %p66
        %p361 = pneg %p90
        %p362 = pneg %p87
        %p363 = pneg %p111
        %p364 = pneg %p108
        %p365 = pneg %p132
        %p366 = pneg %p129
        %p367 = pneg %p153
        %p368 = pneg %p150
        %p369 = pneg %p174
        %p370 = pneg %p171
        %p371 = pneg %p200
        %p372 = pneg %p197
        %s373 = sand.u32 %s187, 1
        %s374 = scalar_lea.sflag [#allocation5], %s373
        %s375 = sand.u32 %s187, 1
        %s376 = smul.addr %s375, 64
        %s377 = scalar_lea.vmem [#allocation15], %s376
        %v378 = vlaneseq
        %vm379 = vcmp.ge.s32.totalorder %v378, 0
        %vm380 = vcmp.lt.s32.totalorder %v378, 512
        %vm381 = vmand %vm379, %vm380
        %382 = vst.msk [vmem:[#allocation2] ss:$8 sm:$0xf] %vm381, 0.0
        %383 = vst.msk [vmem:[#allocation2] ss:$8 sm:$0x0] %vm381, 0.0
        %s384 = scalar_lea.vmem [#allocation2], 65
        %385 = vst.msk [vmem:[%s384] ss:$8 sm:$0xf] %vm381, 0.0
        %386 = vst.msk [vmem:[%s384] ss:$8 sm:$0x0] %vm381, 0.0
        %v387 = vld [vmem:[%s323] sm:$0xff]
        %v388 = vld [vmem:[%s323 + $0x8] sm:$0xff]
        %v389 = vld [vmem:[%s323 + $0x10] sm:$0xff]
        %v390 = vld [vmem:[%s323 + $0x18] sm:$0xff]
        %v391 = vld [vmem:[%s323 + $0x20] sm:$0xff]
        %v392 = vld [vmem:[%s323 + $0x28] sm:$0xff]
        %v393 = vld [vmem:[%s323 + $0x30] sm:$0xff]
        %v394 = vld [vmem:[%s323 + $0x38] sm:$0xff]
        %v395 = vld [vmem:[#allocation6] sm:$0xff]
        %v396 = vld [vmem:[#allocation6 + $0x8] sm:$0xff]
        %v397 = vld [vmem:[#allocation6 + $0x10] sm:$0xff]
        %v398 = vld [vmem:[#allocation6 + $0x18] sm:$0xff]
        %v399 = vld [vmem:[#allocation6 + $0x20] sm:$0xff]
        %v400 = vld [vmem:[#allocation6 + $0x28] sm:$0xff]
        %v401 = vld [vmem:[#allocation6 + $0x30] sm:$0xff]
        %v402 = vld [vmem:[#allocation6 + $0x38] sm:$0xff]
        %v403 = vld [vmem:[#allocation6 + $0x40] sm:$0xff]
        %v404 = vld [vmem:[#allocation6 + $0x48] sm:$0xff]
        %v405 = vld [vmem:[#allocation6 + $0x50] sm:$0xff]
        %v406 = vld [vmem:[#allocation6 + $0x58] sm:$0xff]
        %v407 = vld [vmem:[#allocation6 + $0x60] sm:$0xff]
        %v408 = vld [vmem:[#allocation6 + $0x68] sm:$0xff]
        %v409 = vld [vmem:[#allocation6 + $0x70] sm:$0xff]
        %v410 = vld [vmem:[#allocation6 + $0x78] sm:$0xff]
        %v411 = vld [vmem:[#allocation6 + $0x80] sm:$0xff]
        %v412 = vld [vmem:[#allocation6 + $0x88] sm:$0xff]
        %v413 = vld [vmem:[#allocation6 + $0x90] sm:$0xff]
        %v414 = vld [vmem:[#allocation6 + $0x98] sm:$0xff]
        %v415 = vld [vmem:[#allocation6 + $0xa0] sm:$0xff]
        %v416 = vld [vmem:[#allocation6 + $0xa8] sm:$0xff]
        %v417 = vld [vmem:[#allocation6 + $0xb0] sm:$0xff]
        %v418 = vld [vmem:[#allocation6 + $0xb8] sm:$0xff]
        %v419 = vld [vmem:[#allocation6 + $0xc0] sm:$0xff]
        %v420 = vld [vmem:[#allocation6 + $0xc8] sm:$0xff]
        %v421 = vld [vmem:[#allocation6 + $0xd0] sm:$0xff]
        %v422 = vld [vmem:[#allocation6 + $0xd8] sm:$0xff]
        %v423 = vld [vmem:[#allocation6 + $0xe0] sm:$0xff]
        %v424 = vld [vmem:[#allocation6 + $0xe8] sm:$0xff]
        %v425 = vld [vmem:[#allocation6 + $0xf0] sm:$0xff]
        %v426 = vld [vmem:[#allocation6 + $0xf8] sm:$0xff]
        %v427 = vld [vmem:[#allocation6 + $0x100] sm:$0xff]
        %v428 = vld [vmem:[#allocation6 + $0x108] sm:$0xff]
        %v429 = vld [vmem:[#allocation6 + $0x110] sm:$0xff]
        %v430 = vld [vmem:[#allocation6 + $0x118] sm:$0xff]
        %v431 = vld [vmem:[#allocation6 + $0x120] sm:$0xff]
        %v432 = vld [vmem:[#allocation6 + $0x128] sm:$0xff]
        %v433 = vld [vmem:[#allocation6 + $0x130] sm:$0xff]
        %v434 = vld [vmem:[#allocation6 + $0x138] sm:$0xff]
        %v435 = vld [vmem:[#allocation6 + $0x140] sm:$0xff]
        %v436 = vld [vmem:[#allocation6 + $0x148] sm:$0xff]
        %v437 = vld [vmem:[#allocation6 + $0x150] sm:$0xff]
        %v438 = vld [vmem:[#allocation6 + $0x158] sm:$0xff]
        %v439 = vld [vmem:[#allocation6 + $0x160] sm:$0xff]
        %v440 = vld [vmem:[#allocation6 + $0x168] sm:$0xff]
        %v441 = vld [vmem:[#allocation6 + $0x170] sm:$0xff]
        %v442 = vld [vmem:[#allocation6 + $0x178] sm:$0xff]
        %v443 = vld [vmem:[#allocation6 + $0x180] sm:$0xff]
        %v444 = vld [vmem:[#allocation6 + $0x188] sm:$0xff]
        %v445 = vld [vmem:[#allocation6 + $0x190] sm:$0xff]
        %v446 = vld [vmem:[#allocation6 + $0x198] sm:$0xff]
        %v447 = vld [vmem:[#allocation6 + $0x1a0] sm:$0xff]
        %v448 = vld [vmem:[#allocation6 + $0x1a8] sm:$0xff]
        %v449 = vld [vmem:[#allocation6 + $0x1b0] sm:$0xff]
        %v450 = vld [vmem:[#allocation6 + $0x1b8] sm:$0xff]
        %v451 = vld [vmem:[#allocation6 + $0x1c0] sm:$0xff]
        %v452 = vld [vmem:[#allocation6 + $0x1c8] sm:$0xff]
        %v453 = vld [vmem:[#allocation6 + $0x1d0] sm:$0xff]
        %v454 = vld [vmem:[#allocation6 + $0x1d8] sm:$0xff]
        %v455 = vld [vmem:[#allocation6 + $0x1e0] sm:$0xff]
        %v456 = vld [vmem:[#allocation6 + $0x1e8] sm:$0xff]
        %v457 = vld [vmem:[#allocation6 + $0x1f0] sm:$0xff]
        %v458 = vld [vmem:[#allocation6 + $0x1f8] sm:$0xff]
        %v459 = vld [vmem:[#allocation6 + $0x200] sm:$0xff]
        %v460 = vld [vmem:[#allocation6 + $0x208] sm:$0xff]
        %v461 = vld [vmem:[#allocation6 + $0x210] sm:$0xff]
        %v462 = vld [vmem:[#allocation6 + $0x218] sm:$0xff]
        %v463 = vld [vmem:[#allocation6 + $0x220] sm:$0xff]
        %v464 = vld [vmem:[#allocation6 + $0x228] sm:$0xff]
        %v465 = vld [vmem:[#allocation6 + $0x230] sm:$0xff]
        %v466 = vld [vmem:[#allocation6 + $0x238] sm:$0xff]
        %v467 = vld [vmem:[#allocation6 + $0x240] sm:$0xff]
        %v468 = vld [vmem:[#allocation6 + $0x248] sm:$0xff]
        %v469 = vld [vmem:[#allocation6 + $0x250] sm:$0xff]
        %v470 = vld [vmem:[#allocation6 + $0x258] sm:$0xff]
        %v471 = vld [vmem:[#allocation6 + $0x260] sm:$0xff]
        %v472 = vld [vmem:[#allocation6 + $0x268] sm:$0xff]
        %v473 = vld [vmem:[#allocation6 + $0x270] sm:$0xff]
        %v474 = vld [vmem:[#allocation6 + $0x278] sm:$0xff]
        %v475 = vld [vmem:[#allocation6 + $0x280] sm:$0xff]
        %v476 = vld [vmem:[#allocation6 + $0x288] sm:$0xff]
        %v477 = vld [vmem:[#allocation6 + $0x290] sm:$0xff]
        %v478 = vld [vmem:[#allocation6 + $0x298] sm:$0xff]
        %v479 = vld [vmem:[#allocation6 + $0x2a0] sm:$0xff]
        %v480 = vld [vmem:[#allocation6 + $0x2a8] sm:$0xff]
        %v481 = vld [vmem:[#allocation6 + $0x2b0] sm:$0xff]
        %v482 = vld [vmem:[#allocation6 + $0x2b8] sm:$0xff]
        %v483 = vld [vmem:[#allocation6 + $0x2c0] sm:$0xff]
        %v484 = vld [vmem:[#allocation6 + $0x2c8] sm:$0xff]
        %v485 = vld [vmem:[#allocation6 + $0x2d0] sm:$0xff]
        %v486 = vld [vmem:[#allocation6 + $0x2d8] sm:$0xff]
        %v487 = vld [vmem:[#allocation6 + $0x2e0] sm:$0xff]
        %v488 = vld [vmem:[#allocation6 + $0x2e8] sm:$0xff]
        %v489 = vld [vmem:[#allocation6 + $0x2f0] sm:$0xff]
        %v490 = vld [vmem:[#allocation6 + $0x2f8] sm:$0xff]
        %v491 = vld [vmem:[#allocation6 + $0x300] sm:$0xff]
        %v492 = vld [vmem:[#allocation6 + $0x308] sm:$0xff]
        %v493 = vld [vmem:[#allocation6 + $0x310] sm:$0xff]
        %v494 = vld [vmem:[#allocation6 + $0x318] sm:$0xff]
        %v495 = vld [vmem:[#allocation6 + $0x320] sm:$0xff]
        %v496 = vld [vmem:[#allocation6 + $0x328] sm:$0xff]
        %v497 = vld [vmem:[#allocation6 + $0x330] sm:$0xff]
        %v498 = vld [vmem:[#allocation6 + $0x338] sm:$0xff]
        %v499 = vld [vmem:[#allocation6 + $0x340] sm:$0xff]
        %v500 = vld [vmem:[#allocation6 + $0x348] sm:$0xff]
        %v501 = vld [vmem:[#allocation6 + $0x350] sm:$0xff]
        %v502 = vld [vmem:[#allocation6 + $0x358] sm:$0xff]
        %v503 = vld [vmem:[#allocation6 + $0x360] sm:$0xff]
        %v504 = vld [vmem:[#allocation6 + $0x368] sm:$0xff]
        %v505 = vld [vmem:[#allocation6 + $0x370] sm:$0xff]
        %v506 = vld [vmem:[#allocation6 + $0x378] sm:$0xff]
        %v507 = vld [vmem:[#allocation6 + $0x380] sm:$0xff]
        %v508 = vld [vmem:[#allocation6 + $0x388] sm:$0xff]
        %v509 = vld [vmem:[#allocation6 + $0x390] sm:$0xff]
        %v510 = vld [vmem:[#allocation6 + $0x398] sm:$0xff]
        %v511 = vld [vmem:[#allocation6 + $0x3a0] sm:$0xff]
        %v512 = vld [vmem:[#allocation6 + $0x3a8] sm:$0xff]
        %v513 = vld [vmem:[#allocation6 + $0x3b0] sm:$0xff]
        %v514 = vld [vmem:[#allocation6 + $0x3b8] sm:$0xff]
        %v515 = vld [vmem:[#allocation6 + $0x3c0] sm:$0xff]
        %v516 = vld [vmem:[#allocation6 + $0x3c8] sm:$0xff]
        %v517 = vld [vmem:[#allocation6 + $0x3d0] sm:$0xff]
        %v518 = vld [vmem:[#allocation6 + $0x3d8] sm:$0xff]
        %v519 = vld [vmem:[#allocation6 + $0x3e0] sm:$0xff]
        %v520 = vld [vmem:[#allocation6 + $0x3e8] sm:$0xff]
        %v521 = vld [vmem:[#allocation6 + $0x3f0] sm:$0xff]
        %v522 = vld [vmem:[#allocation6 + $0x3f8] sm:$0xff]
        %v523 = vld [vmem:[#allocation6 + $0x400] sm:$0xff]
        %v524 = vld [vmem:[#allocation6 + $0x408] sm:$0xff]
        %v525 = vld [vmem:[#allocation6 + $0x410] sm:$0xff]
        %v526 = vld [vmem:[#allocation6 + $0x418] sm:$0xff]
        %v527 = vld [vmem:[#allocation6 + $0x420] sm:$0xff]
        %v528 = vld [vmem:[#allocation6 + $0x428] sm:$0xff]
        %v529 = vld [vmem:[#allocation6 + $0x430] sm:$0xff]
        %v530 = vld [vmem:[#allocation6 + $0x438] sm:$0xff]
        %v531 = vld [vmem:[#allocation6 + $0x440] sm:$0xff]
        %v532 = vld [vmem:[#allocation6 + $0x448] sm:$0xff]
        %v533 = vld [vmem:[#allocation6 + $0x450] sm:$0xff]
        %v534 = vld [vmem:[#allocation6 + $0x458] sm:$0xff]
        %v535 = vld [vmem:[#allocation6 + $0x460] sm:$0xff]
        %v536 = vld [vmem:[#allocation6 + $0x468] sm:$0xff]
        %v537 = vld [vmem:[#allocation6 + $0x470] sm:$0xff]
        %v538 = vld [vmem:[#allocation6 + $0x478] sm:$0xff]
        %v539 = vld [vmem:[#allocation6 + $0x480] sm:$0xff]
        %v540 = vld [vmem:[#allocation6 + $0x488] sm:$0xff]
        %v541 = vld [vmem:[#allocation6 + $0x490] sm:$0xff]
        %v542 = vld [vmem:[#allocation6 + $0x498] sm:$0xff]
        %v543 = vld [vmem:[#allocation6 + $0x4a0] sm:$0xff]
        %v544 = vld [vmem:[#allocation6 + $0x4a8] sm:$0xff]
        %v545 = vld [vmem:[#allocation6 + $0x4b0] sm:$0xff]
        %v546 = vld [vmem:[#allocation6 + $0x4b8] sm:$0xff]
        %v547 = vld [vmem:[#allocation6 + $0x4c0] sm:$0xff]
        %v548 = vld [vmem:[#allocation6 + $0x4c8] sm:$0xff]
        %v549 = vld [vmem:[#allocation6 + $0x4d0] sm:$0xff]
        %v550 = vld [vmem:[#allocation6 + $0x4d8] sm:$0xff]
        %v551 = vld [vmem:[#allocation6 + $0x4e0] sm:$0xff]
        %v552 = vld [vmem:[#allocation6 + $0x4e8] sm:$0xff]
        %v553 = vld [vmem:[#allocation6 + $0x4f0] sm:$0xff]
        %v554 = vld [vmem:[#allocation6 + $0x4f8] sm:$0xff]
        %v555 = vld [vmem:[#allocation6 + $0x500] sm:$0xff]
        %v556 = vld [vmem:[#allocation6 + $0x508] sm:$0xff]
        %v557 = vld [vmem:[#allocation6 + $0x510] sm:$0xff]
        %v558 = vld [vmem:[#allocation6 + $0x518] sm:$0xff]
        %v559 = vld [vmem:[#allocation6 + $0x520] sm:$0xff]
        %v560 = vld [vmem:[#allocation6 + $0x528] sm:$0xff]
        %v561 = vld [vmem:[#allocation6 + $0x530] sm:$0xff]
        %v562 = vld [vmem:[#allocation6 + $0x538] sm:$0xff]
        %v563 = vld [vmem:[#allocation6 + $0x540] sm:$0xff]
        %v564 = vld [vmem:[#allocation6 + $0x548] sm:$0xff]
        %v565 = vld [vmem:[#allocation6 + $0x550] sm:$0xff]
        %v566 = vld [vmem:[#allocation6 + $0x558] sm:$0xff]
        %v567 = vld [vmem:[#allocation6 + $0x560] sm:$0xff]
        %v568 = vld [vmem:[#allocation6 + $0x568] sm:$0xff]
        %v569 = vld [vmem:[#allocation6 + $0x570] sm:$0xff]
        %v570 = vld [vmem:[#allocation6 + $0x578] sm:$0xff]
        %v571 = vld [vmem:[#allocation6 + $0x580] sm:$0xff]
        %v572 = vld [vmem:[#allocation6 + $0x588] sm:$0xff]
        %v573 = vld [vmem:[#allocation6 + $0x590] sm:$0xff]
        %v574 = vld [vmem:[#allocation6 + $0x598] sm:$0xff]
        %v575 = vld [vmem:[#allocation6 + $0x5a0] sm:$0xff]
        %v576 = vld [vmem:[#allocation6 + $0x5a8] sm:$0xff]
        %v577 = vld [vmem:[#allocation6 + $0x5b0] sm:$0xff]
        %v578 = vld [vmem:[#allocation6 + $0x5b8] sm:$0xff]
        %v579 = vld [vmem:[#allocation6 + $0x5c0] sm:$0xff]
        %v580 = vld [vmem:[#allocation6 + $0x5c8] sm:$0xff]
        %v581 = vld [vmem:[#allocation6 + $0x5d0] sm:$0xff]
        %v582 = vld [vmem:[#allocation6 + $0x5d8] sm:$0xff]
        %v583 = vld [vmem:[#allocation6 + $0x5e0] sm:$0xff]
        %v584 = vld [vmem:[#allocation6 + $0x5e8] sm:$0xff]
        %v585 = vld [vmem:[#allocation6 + $0x5f0] sm:$0xff]
        %v586 = vld [vmem:[#allocation6 + $0x5f8] sm:$0xff]
        %v587 = vld [vmem:[#allocation6 + $0x600] sm:$0xff]
        %v588 = vld [vmem:[#allocation6 + $0x608] sm:$0xff]
        %v589 = vld [vmem:[#allocation6 + $0x610] sm:$0xff]
        %v590 = vld [vmem:[#allocation6 + $0x618] sm:$0xff]
        %v591 = vld [vmem:[#allocation6 + $0x620] sm:$0xff]
        %v592 = vld [vmem:[#allocation6 + $0x628] sm:$0xff]
        %v593 = vld [vmem:[#allocation6 + $0x630] sm:$0xff]
        %v594 = vld [vmem:[#allocation6 + $0x638] sm:$0xff]
        %v595 = vld [vmem:[#allocation6 + $0x640] sm:$0xff]
        %v596 = vld [vmem:[#allocation6 + $0x648] sm:$0xff]
        %v597 = vld [vmem:[#allocation6 + $0x650] sm:$0xff]
        %v598 = vld [vmem:[#allocation6 + $0x658] sm:$0xff]
        %v599 = vld [vmem:[#allocation6 + $0x660] sm:$0xff]
        %v600 = vld [vmem:[#allocation6 + $0x668] sm:$0xff]
        %v601 = vld [vmem:[#allocation6 + $0x670] sm:$0xff]
        %v602 = vld [vmem:[#allocation6 + $0x678] sm:$0xff]
        %v603 = vld [vmem:[#allocation6 + $0x680] sm:$0xff]
        %v604 = vld [vmem:[#allocation6 + $0x688] sm:$0xff]
        %v605 = vld [vmem:[#allocation6 + $0x690] sm:$0xff]
        %v606 = vld [vmem:[#allocation6 + $0x698] sm:$0xff]
        %v607 = vld [vmem:[#allocation6 + $0x6a0] sm:$0xff]
        %v608 = vld [vmem:[#allocation6 + $0x6a8] sm:$0xff]
        %v609 = vld [vmem:[#allocation6 + $0x6b0] sm:$0xff]
        %v610 = vld [vmem:[#allocation6 + $0x6b8] sm:$0xff]
        %v611 = vld [vmem:[#allocation6 + $0x6c0] sm:$0xff]
        %v612 = vld [vmem:[#allocation6 + $0x6c8] sm:$0xff]
        %v613 = vld [vmem:[#allocation6 + $0x6d0] sm:$0xff]
        %v614 = vld [vmem:[#allocation6 + $0x6d8] sm:$0xff]
        %v615 = vld [vmem:[#allocation6 + $0x6e0] sm:$0xff]
        %v616 = vld [vmem:[#allocation6 + $0x6e8] sm:$0xff]
        %v617 = vld [vmem:[#allocation6 + $0x6f0] sm:$0xff]
        %v618 = vld [vmem:[#allocation6 + $0x6f8] sm:$0xff]
        %v619 = vld [vmem:[#allocation6 + $0x700] sm:$0xff]
        %v620 = vld [vmem:[#allocation6 + $0x708] sm:$0xff]
        %v621 = vld [vmem:[#allocation6 + $0x710] sm:$0xff]
        %v622 = vld [vmem:[#allocation6 + $0x718] sm:$0xff]
        %v623 = vld [vmem:[#allocation6 + $0x720] sm:$0xff]
        %v624 = vld [vmem:[#allocation6 + $0x728] sm:$0xff]
        %v625 = vld [vmem:[#allocation6 + $0x730] sm:$0xff]
        %v626 = vld [vmem:[#allocation6 + $0x738] sm:$0xff]
        %v627 = vld [vmem:[#allocation6 + $0x740] sm:$0xff]
        %v628 = vld [vmem:[#allocation6 + $0x748] sm:$0xff]
        %v629 = vld [vmem:[#allocation6 + $0x750] sm:$0xff]
        %v630 = vld [vmem:[#allocation6 + $0x758] sm:$0xff]
        %v631 = vld [vmem:[#allocation6 + $0x760] sm:$0xff]
        %v632 = vld [vmem:[#allocation6 + $0x768] sm:$0xff]
        %v633 = vld [vmem:[#allocation6 + $0x770] sm:$0xff]
        %v634 = vld [vmem:[#allocation6 + $0x778] sm:$0xff]
        %v635 = vld [vmem:[#allocation6 + $0x780] sm:$0xff]
        %v636 = vld [vmem:[#allocation6 + $0x788] sm:$0xff]
        %v637 = vld [vmem:[#allocation6 + $0x790] sm:$0xff]
        %v638 = vld [vmem:[#allocation6 + $0x798] sm:$0xff]
        %v639 = vld [vmem:[#allocation6 + $0x7a0] sm:$0xff]
        %v640 = vld [vmem:[#allocation6 + $0x7a8] sm:$0xff]
        %v641 = vld [vmem:[#allocation6 + $0x7b0] sm:$0xff]
        %v642 = vld [vmem:[#allocation6 + $0x7b8] sm:$0xff]
        %v643 = vld [vmem:[#allocation6 + $0x7c0] sm:$0xff]
        %v644 = vld [vmem:[#allocation6 + $0x7c8] sm:$0xff]
        %v645 = vld [vmem:[#allocation6 + $0x7d0] sm:$0xff]
        %v646 = vld [vmem:[#allocation6 + $0x7d8] sm:$0xff]
        %v647 = vld [vmem:[#allocation6 + $0x7e0] sm:$0xff]
        %v648 = vld [vmem:[#allocation6 + $0x7e8] sm:$0xff]
        %v649 = vld [vmem:[#allocation6 + $0x7f0] sm:$0xff]
        %v650 = vld [vmem:[#allocation6 + $0x7f8] sm:$0xff]
        %v651 = vld [vmem:[#allocation8] sm:$0xf]
        %v653 = vlaneseq
        %v654 = vshrl.u32 %v653, 7
        %v655 = vsub.s32 0, %v654
        %v656 = vrot.slane %v651, %v655
        %v657 = vlaneseq
        %v658 = vshrl.u32 %v657, 7
        %v659 = vsub.s32 1, %v658
        %v660 = vrot.slane %v651, %v659
        %v661 = vlaneseq
        %v662 = vshrl.u32 %v661, 7
        %v663 = vsub.s32 2, %v662
        %v664 = vrot.slane %v651, %v663
        %v665 = vlaneseq
        %v666 = vshrl.u32 %v665, 7
        %v667 = vsub.s32 3, %v666
        %v668 = vrot.slane %v651, %v667
        %673 = vmatprep.subr.mxu0 %v396
        %674 = vmatpush1.msra.mxu0 %v395
        %675 = vmatprep.subr.mxu0 %v400
        %676 = vmatpush1.msra.mxu0 %v399
        %677 = vmatprep.subr.mxu0 %v404
        %678 = vmatpush1.msra.mxu0 %v403
        %679 = vmatprep.subr.mxu0 %v408
        %680 = vmatpush1.msra.mxu0 %v407
        %681 = vmatprep.subr.mxu0 %v412
        %682 = vmatpush1.msra.mxu0 %v411
        %683 = vmatprep.subr.mxu0 %v416
        %684 = vmatpush1.msra.mxu0 %v415
        %685 = vmatprep.subr.mxu0 %v420
        %686 = vmatpush1.msra.mxu0 %v419
        %687 = vmatprep.subr.mxu0 %v424
        %688 = vmatpush1.msra.mxu0 %v423
        %689 = vmatprep.subr.mxu0 %v428
        %690 = vmatpush1.msra.mxu0 %v427
        %691 = vmatprep.subr.mxu0 %v432
        %692 = vmatpush1.msra.mxu0 %v431
        %693 = vmatprep.subr.mxu0 %v436
        %694 = vmatpush1.msra.mxu0 %v435
        %695 = vmatprep.subr.mxu0 %v440
        %696 = vmatpush1.msra.mxu0 %v439
        %697 = vmatprep.subr.mxu0 %v444
        %698 = vmatpush1.msra.mxu0 %v443
        %699 = vmatprep.subr.mxu0 %v448
        %700 = vmatpush1.msra.mxu0 %v447
        %701 = vmatprep.subr.mxu0 %v452
        %702 = vmatpush1.msra.mxu0 %v451
        %703 = vmatprep.subr.mxu0 %v456
        %704 = vmatpush1.msra.mxu0 %v455
        %705 = vmatprep.subr.mxu0 %v460
        %706 = vmatpush1.msra.mxu0 %v459
        %707 = vmatprep.subr.mxu0 %v464
        %708 = vmatpush1.msra.mxu0 %v463
        %709 = vmatprep.subr.mxu0 %v468
        %710 = vmatpush1.msra.mxu0 %v467
        %711 = vmatprep.subr.mxu0 %v472
        %712 = vmatpush1.msra.mxu0 %v471
        %713 = vmatprep.subr.mxu0 %v476
        %714 = vmatpush1.msra.mxu0 %v475
        %715 = vmatprep.subr.mxu0 %v480
        %716 = vmatpush1.msra.mxu0 %v479
        %717 = vmatprep.subr.mxu0 %v484
        %718 = vmatpush1.msra.mxu0 %v483
        %719 = vmatprep.subr.mxu0 %v488
        %720 = vmatpush1.msra.mxu0 %v487
        %721 = vmatprep.subr.mxu0 %v492
        %722 = vmatpush1.msra.mxu0 %v491
        %723 = vmatprep.subr.mxu0 %v496
        %724 = vmatpush1.msra.mxu0 %v495
        %725 = vmatprep.subr.mxu0 %v500
        %726 = vmatpush1.msra.mxu0 %v499
        %727 = vmatprep.subr.mxu0 %v504
        %728 = vmatpush1.msra.mxu0 %v503
        %729 = vmatprep.subr.mxu0 %v508
        %730 = vmatpush1.msra.mxu0 %v507
        %731 = vmatprep.subr.mxu0 %v512
        %732 = vmatpush1.msra.mxu0 %v511
        %733 = vmatprep.subr.mxu0 %v516
        %734 = vmatpush1.msra.mxu0 %v515
        %735 = vmatprep.subr.mxu0 %v520
        %736 = vmatpush1.msra.mxu0 %v519
        %737 = vmatprep.mubr.f32.mxu0 %v388
        %738 = vmatmul.mubr.f32.gmra.mrb[0].mxu0 %v387
        %v739 = vpop.f32.mrb[0].mxu0
        %v740 = vadd.f32 %v656, %v739
        %v741 = vpop.f32.mrb[0].mxu0
        %v742 = vadd.f32 %v660, %v741
        %743 = vmatprep.mubr.f32.mxu0 %v392
        %744 = vmatmul.mubr.f32.gmra.mrb[0].mxu0 %v391
        %v745 = vpop.f32.mrb[0].mxu0
        %v746 = vadd.f32 %v656, %v745
        %v747 = vpop.f32.mrb[0].mxu0
        %v748 = vadd.f32 %v660, %v747
        %749 = vdwg.mxu0
        %750 = vmatprep.subr.mxu0 %v524
        %751 = vmatpush1.msra.mxu0 %v523
        %752 = vmatprep.subr.mxu0 %v528
        %753 = vmatpush1.msra.mxu0 %v527
        %754 = vmatprep.subr.mxu0 %v532
        %755 = vmatpush1.msra.mxu0 %v531
        %756 = vmatprep.subr.mxu0 %v536
        %757 = vmatpush1.msra.mxu0 %v535
        %758 = vmatprep.subr.mxu0 %v540
        %759 = vmatpush1.msra.mxu0 %v539
        %760 = vmatprep.subr.mxu0 %v544
        %761 = vmatpush1.msra.mxu0 %v543
        %762 = vmatprep.subr.mxu0 %v548
        %763 = vmatpush1.msra.mxu0 %v547
        %764 = vmatprep.subr.mxu0 %v552
        %765 = vmatpush1.msra.mxu0 %v551
        %766 = vmatprep.subr.mxu0 %v556
        %767 = vmatpush1.msra.mxu0 %v555
        %768 = vmatprep.subr.mxu0 %v560
        %769 = vmatpush1.msra.mxu0 %v559
        %770 = vmatprep.subr.mxu0 %v564
        %771 = vmatpush1.msra.mxu0 %v563
        %772 = vmatprep.subr.mxu0 %v568
        %773 = vmatpush1.msra.mxu0 %v567
        %774 = vmatprep.subr.mxu0 %v572
        %775 = vmatpush1.msra.mxu0 %v571
        %776 = vmatprep.subr.mxu0 %v576
        %777 = vmatpush1.msra.mxu0 %v575
        %778 = vmatprep.subr.mxu0 %v580
        %779 = vmatpush1.msra.mxu0 %v579
        %780 = vmatprep.subr.mxu0 %v584
        %781 = vmatpush1.msra.mxu0 %v583
        %782 = vmatprep.subr.mxu0 %v588
        %783 = vmatpush1.msra.mxu0 %v587
        %784 = vmatprep.subr.mxu0 %v592
        %785 = vmatpush1.msra.mxu0 %v591
        %786 = vmatprep.subr.mxu0 %v596
        %787 = vmatpush1.msra.mxu0 %v595
        %788 = vmatprep.subr.mxu0 %v600
        %789 = vmatpush1.msra.mxu0 %v599
        %790 = vmatprep.subr.mxu0 %v604
        %791 = vmatpush1.msra.mxu0 %v603
        %792 = vmatprep.subr.mxu0 %v608
        %793 = vmatpush1.msra.mxu0 %v607
        %794 = vmatprep.subr.mxu0 %v612
        %795 = vmatpush1.msra.mxu0 %v611
        %796 = vmatprep.subr.mxu0 %v616
        %797 = vmatpush1.msra.mxu0 %v615
        %798 = vmatprep.subr.mxu0 %v620
        %799 = vmatpush1.msra.mxu0 %v619
        %800 = vmatprep.subr.mxu0 %v624
        %801 = vmatpush1.msra.mxu0 %v623
        %802 = vmatprep.subr.mxu0 %v628
        %803 = vmatpush1.msra.mxu0 %v627
        %804 = vmatprep.subr.mxu0 %v632
        %805 = vmatpush1.msra.mxu0 %v631
        %806 = vmatprep.subr.mxu0 %v636
        %807 = vmatpush1.msra.mxu0 %v635
        %808 = vmatprep.subr.mxu0 %v640
        %809 = vmatpush1.msra.mxu0 %v639
        %810 = vmatprep.subr.mxu0 %v644
        %811 = vmatpush1.msra.mxu0 %v643
        %812 = vmatprep.subr.mxu0 %v648
        %813 = vmatpush1.msra.mxu0 %v647
        %814 = vmatprep.mubr.f32.mxu0 %v390
        %815 = vmatmul.mubr.f32.gmra.mrb[0].mxu0 %v389
        %v816 = vpop.f32.mrb[0].mxu0
        %v817 = vadd.f32 %v740, %v816
        %v818 = vpop.f32.mrb[0].mxu0
        %v819 = vadd.f32 %v742, %v818
        %820 = vmatprep.mubr.f32.mxu0 %v394
        %821 = vmatmul.mubr.f32.gmra.mrb[0].mxu0 %v393
        %v822 = vpop.f32.mrb[0].mxu0
        %v823 = vadd.f32 %v746, %v822
        %v824 = vpop.f32.mrb[0].mxu0
        %v825 = vadd.f32 %v748, %v824
        %826 = vdwg.mxu0
        %827 = vmatprep.subr.mxu0 %v398
        %828 = vmatpush1.msra.mxu0 %v397
        %829 = vmatprep.subr.mxu0 %v402
        %830 = vmatpush1.msra.mxu0 %v401
        %831 = vmatprep.subr.mxu0 %v406
        %832 = vmatpush1.msra.mxu0 %v405
        %833 = vmatprep.subr.mxu0 %v410
        %834 = vmatpush1.msra.mxu0 %v409
        %835 = vmatprep.subr.mxu0 %v414
        %836 = vmatpush1.msra.mxu0 %v413
        %837 = vmatprep.subr.mxu0 %v418
        %838 = vmatpush1.msra.mxu0 %v417
        %839 = vmatprep.subr.mxu0 %v422
        %840 = vmatpush1.msra.mxu0 %v421
        %841 = vmatprep.subr.mxu0 %v426
        %842 = vmatpush1.msra.mxu0 %v425
        %843 = vmatprep.subr.mxu0 %v430
        %844 = vmatpush1.msra.mxu0 %v429
        %845 = vmatprep.subr.mxu0 %v434
        %846 = vmatpush1.msra.mxu0 %v433
        %847 = vmatprep.subr.mxu0 %v438
        %848 = vmatpush1.msra.mxu0 %v437
        %849 = vmatprep.subr.mxu0 %v442
        %850 = vmatpush1.msra.mxu0 %v441
        %851 = vmatprep.subr.mxu0 %v446
        %852 = vmatpush1.msra.mxu0 %v445
        %853 = vmatprep.subr.mxu0 %v450
        %854 = vmatpush1.msra.mxu0 %v449
        %855 = vmatprep.subr.mxu0 %v454
        %856 = vmatpush1.msra.mxu0 %v453
        %857 = vmatprep.subr.mxu0 %v458
        %858 = vmatpush1.msra.mxu0 %v457
        %859 = vmatprep.subr.mxu0 %v462
        %860 = vmatpush1.msra.mxu0 %v461
        %861 = vmatprep.subr.mxu0 %v466
        %862 = vmatpush1.msra.mxu0 %v465
        %863 = vmatprep.subr.mxu0 %v470
        %864 = vmatpush1.msra.mxu0 %v469
        %865 = vmatprep.subr.mxu0 %v474
        %866 = vmatpush1.msra.mxu0 %v473
        %867 = vmatprep.subr.mxu0 %v478
        %868 = vmatpush1.msra.mxu0 %v477
        %869 = vmatprep.subr.mxu0 %v482
        %870 = vmatpush1.msra.mxu0 %v481
        %871 = vmatprep.subr.mxu0 %v486
        %872 = vmatpush1.msra.mxu0 %v485
        %873 = vmatprep.subr.mxu0 %v490
        %874 = vmatpush1.msra.mxu0 %v489
        %875 = vmatprep.subr.mxu0 %v494
        %876 = vmatpush1.msra.mxu0 %v493
        %877 = vmatprep.subr.mxu0 %v498
        %878 = vmatpush1.msra.mxu0 %v497
        %879 = vmatprep.subr.mxu0 %v502
        %880 = vmatpush1.msra.mxu0 %v501
        %881 = vmatprep.subr.mxu0 %v506
        %882 = vmatpush1.msra.mxu0 %v505
        %883 = vmatprep.subr.mxu0 %v510
        %884 = vmatpush1.msra.mxu0 %v509
        %885 = vmatprep.subr.mxu0 %v514
        %886 = vmatpush1.msra.mxu0 %v513
        %887 = vmatprep.subr.mxu0 %v518
        %888 = vmatpush1.msra.mxu0 %v517
        %889 = vmatprep.subr.mxu0 %v522
        %890 = vmatpush1.msra.mxu0 %v521
        %891 = vmatprep.mubr.f32.mxu0 %v388
        %892 = vmatmul.mubr.f32.gmra.mrb[0].mxu0 %v387
        %v893 = vpop.f32.mrb[0].mxu0
        %v894 = vadd.f32 %v664, %v893
        %v895 = vpop.f32.mrb[0].mxu0
        %v896 = vadd.f32 %v668, %v895
        %897 = vmatprep.mubr.f32.mxu0 %v392
        %898 = vmatmul.mubr.f32.gmra.mrb[0].mxu0 %v391
        %v899 = vpop.f32.mrb[0].mxu0
        %v900 = vadd.f32 %v664, %v899
        %v901 = vpop.f32.mrb[0].mxu0
        %v902 = vadd.f32 %v668, %v901
        %903 = vdwg.mxu0
        %904 = vmatprep.subr.mxu0 %v526
        %905 = vmatpush1.msra.mxu0 %v525
        %906 = vmatprep.subr.mxu0 %v530
        %907 = vmatpush1.msra.mxu0 %v529
        %908 = vmatprep.subr.mxu0 %v534
        %909 = vmatpush1.msra.mxu0 %v533
        %910 = vmatprep.subr.mxu0 %v538
        %911 = vmatpush1.msra.mxu0 %v537
        %912 = vmatprep.subr.mxu0 %v542
        %913 = vmatpush1.msra.mxu0 %v541
        %914 = vmatprep.subr.mxu0 %v546
        %915 = vmatpush1.msra.mxu0 %v545
        %916 = vmatprep.subr.mxu0 %v550
        %917 = vmatpush1.msra.mxu0 %v549
        %918 = vmatprep.subr.mxu0 %v554
        %919 = vmatpush1.msra.mxu0 %v553
        %920 = vmatprep.subr.mxu0 %v558
        %921 = vmatpush1.msra.mxu0 %v557
        %922 = vmatprep.subr.mxu0 %v562
        %923 = vmatpush1.msra.mxu0 %v561
        %924 = vmatprep.subr.mxu0 %v566
        %925 = vmatpush1.msra.mxu0 %v565
        %926 = vmatprep.subr.mxu0 %v570
        %927 = vmatpush1.msra.mxu0 %v569
        %928 = vmatprep.subr.mxu0 %v574
        %929 = vmatpush1.msra.mxu0 %v573
        %930 = vmatprep.subr.mxu0 %v578
        %931 = vmatpush1.msra.mxu0 %v577
        %932 = vmatprep.subr.mxu0 %v582
        %933 = vmatpush1.msra.mxu0 %v581
        %934 = vmatprep.subr.mxu0 %v586
        %935 = vmatpush1.msra.mxu0 %v585
        %936 = vmatprep.subr.mxu0 %v590
        %937 = vmatpush1.msra.mxu0 %v589
        %938 = vmatprep.subr.mxu0 %v594
        %939 = vmatpush1.msra.mxu0 %v593
        %940 = vmatprep.subr.mxu0 %v598
        %941 = vmatpush1.msra.mxu0 %v597
        %942 = vmatprep.subr.mxu0 %v602
        %943 = vmatpush1.msra.mxu0 %v601
        %944 = vmatprep.subr.mxu0 %v606
        %945 = vmatpush1.msra.mxu0 %v605
        %946 = vmatprep.subr.mxu0 %v610
        %947 = vmatpush1.msra.mxu0 %v609
        %948 = vmatprep.subr.mxu0 %v614
        %949 = vmatpush1.msra.mxu0 %v613
        %950 = vmatprep.subr.mxu0 %v618
        %951 = vmatpush1.msra.mxu0 %v617
        %952 = vmatprep.subr.mxu0 %v622
        %953 = vmatpush1.msra.mxu0 %v621
        %954 = vmatprep.subr.mxu0 %v626
        %955 = vmatpush1.msra.mxu0 %v625
        %956 = vmatprep.subr.mxu0 %v630
        %957 = vmatpush1.msra.mxu0 %v629
        %958 = vmatprep.subr.mxu0 %v634
        %959 = vmatpush1.msra.mxu0 %v633
        %960 = vmatprep.subr.mxu0 %v638
        %961 = vmatpush1.msra.mxu0 %v637
        %962 = vmatprep.subr.mxu0 %v642
        %963 = vmatpush1.msra.mxu0 %v641
        %964 = vmatprep.subr.mxu0 %v646
        %965 = vmatpush1.msra.mxu0 %v645
        %966 = vmatprep.subr.mxu0 %v650
        %967 = vmatpush1.msra.mxu0 %v649
        %968 = vmatprep.mubr.f32.mxu0 %v390
        %969 = vmatmul.mubr.f32.gmra.mrb[0].mxu0 %v389
        %v970 = vpop.f32.mrb[0].mxu0
        %v971 = vadd.f32 %v894, %v970
        %v972 = vpop.f32.mrb[0].mxu0
        %v973 = vadd.f32 %v896, %v972
        %974 = vmatprep.mubr.f32.mxu0 %v394
        %975 = vmatmul.mubr.f32.gmra.mrb[0].mxu0 %v393
        %v976 = vpop.f32.mrb[0].mxu0
        %v977 = vadd.f32 %v900, %v976
        %v978 = vpop.f32.mrb[0].mxu0
        %v979 = vadd.f32 %v902, %v978
        %980 = vdwg.mxu0
        %vm989 = vcmask 1040384
        %v990 = vrot.slane %v817, 7
        %v991 = vrot.slane %v819, 7
        %v992 = vrot.slane %v971, 7
        %v993 = vrot.slane %v973, 7
        %v994 = vrot.slane %v823, 7
        %v995 = vsel %vm989, %v990, %v994
        %v996 = vrot.slane %v825, 7
        %v997 = vsel %vm989, %v991, %v996
        %v998 = vrot.slane %v977, 7
        %v999 = vsel %vm989, %v992, %v998
        %v1000 = vrot.slane %v979, 7
        %v1001 = vsel %vm989, %v993, %v1000
        %1014 = vst [vmem:[#allocation2] sm:$0xfe] %v990
        %1015 = vst [vmem:[#allocation2 + $0x8] sm:$0xfe] %v991
        %1016 = vst [vmem:[#allocation2 + $0x10] sm:$0xfe] %v992
        %1017 = vst [vmem:[#allocation2 + $0x18] sm:$0xfe] %v993
        %1018 = vst [vmem:[#allocation2 + $0x20] sm:$0xff] %v995
        %1019 = vst [vmem:[#allocation2 + $0x28] sm:$0xff] %v997
        %1020 = vst [vmem:[#allocation2 + $0x30] sm:$0xff] %v999
        %1021 = vst [vmem:[#allocation2 + $0x38] sm:$0xff] %v1001
        %1022 = vst [vmem:[#allocation2 + $0x40] sm:$0x1] %v994
        %1023 = vst [vmem:[#allocation2 + $0x48] sm:$0x1] %v996
        %1024 = vst [vmem:[#allocation2 + $0x50] sm:$0x1] %v998
        %1025 = vst [vmem:[#allocation2 + $0x58] sm:$0x1] %v1000
        %v1026 = vld [vmem:[#allocation2] sm:$0xff]
        %v1027 = vld [vmem:[#allocation2 + $0x8] sm:$0xff]
        %v1028 = vld [vmem:[#allocation2 + $0x10] sm:$0xff]
        %v1029 = vld [vmem:[#allocation2 + $0x18] sm:$0xff]
        %v1030 = vld [vmem:[#allocation2 + $0x20] sm:$0xff]
        %v1031 = vld [vmem:[#allocation2 + $0x28] sm:$0xff]
        %v1032 = vld [vmem:[#allocation2 + $0x30] sm:$0xff]
        %v1033 = vld [vmem:[#allocation2 + $0x38] sm:$0xff]
        %v1034 = vld [vmem:[#allocation9] sm:$0xff]
        %v1035 = vld [vmem:[#allocation9 + $0x8] sm:$0xff]
        %v1036 = vld [vmem:[#allocation9 + $0x10] sm:$0xff]
        %v1037 = vld [vmem:[#allocation9 + $0x18] sm:$0xff]
        %v1038 = vld [vmem:[#allocation9 + $0x20] sm:$0xff]
        %v1039 = vld [vmem:[#allocation9 + $0x28] sm:$0xff]
        %v1040 = vld [vmem:[#allocation9 + $0x30] sm:$0xff]
        %v1041 = vld [vmem:[#allocation9 + $0x38] sm:$0xff]
        %v1042 = vld [vmem:[#allocation9 + $0x40] sm:$0xff]
        %v1043 = vld [vmem:[#allocation9 + $0x48] sm:$0xff]
        %v1044 = vld [vmem:[#allocation9 + $0x50] sm:$0xff]
        %v1045 = vld [vmem:[#allocation9 + $0x58] sm:$0xff]
        %v1046 = vld [vmem:[#allocation9 + $0x60] sm:$0xff]
        %v1047 = vld [vmem:[#allocation9 + $0x68] sm:$0xff]
        %v1048 = vld [vmem:[#allocation9 + $0x70] sm:$0xff]
        %v1049 = vld [vmem:[#allocation9 + $0x78] sm:$0xff]
        %v1050 = vld [vmem:[#allocation9 + $0x80] sm:$0xff]
        %v1051 = vld [vmem:[#allocation9 + $0x88] sm:$0xff]
        %v1052 = vld [vmem:[#allocation9 + $0x90] sm:$0xff]
        %v1053 = vld [vmem:[#allocation9 + $0x98] sm:$0xff]
        %v1054 = vld [vmem:[#allocation9 + $0xa0] sm:$0xff]
        %v1055 = vld [vmem:[#allocation9 + $0xa8] sm:$0xff]
        %v1056 = vld [vmem:[#allocation9 + $0xb0] sm:$0xff]
        %v1057 = vld [vmem:[#allocation9 + $0xb8] sm:$0xff]
        %v1058 = vld [vmem:[#allocation9 + $0xc0] sm:$0xff]
        %v1059 = vld [vmem:[#allocation9 + $0xc8] sm:$0xff]
        %v1060 = vld [vmem:[#allocation9 + $0xd0] sm:$0xff]
        %v1061 = vld [vmem:[#allocation9 + $0xd8] sm:$0xff]
        %v1062 = vld [vmem:[#allocation9 + $0xe0] sm:$0xff]
        %v1063 = vld [vmem:[#allocation9 + $0xe8] sm:$0xff]
        %v1064 = vld [vmem:[#allocation9 + $0xf0] sm:$0xff]
        %v1065 = vld [vmem:[#allocation9 + $0xf8] sm:$0xff]
        %v1066 = vld [vmem:[#allocation9 + $0x100] sm:$0xff]
        %v1067 = vld [vmem:[#allocation9 + $0x108] sm:$0xff]
        %v1068 = vld [vmem:[#allocation9 + $0x110] sm:$0xff]
        %v1069 = vld [vmem:[#allocation9 + $0x118] sm:$0xff]
        %v1070 = vld [vmem:[#allocation9 + $0x120] sm:$0xff]
        %v1071 = vld [vmem:[#allocation9 + $0x128] sm:$0xff]
        %v1072 = vld [vmem:[#allocation9 + $0x130] sm:$0xff]
        %v1073 = vld [vmem:[#allocation9 + $0x138] sm:$0xff]
        %v1074 = vld [vmem:[#allocation9 + $0x140] sm:$0xff]
        %v1075 = vld [vmem:[#allocation9 + $0x148] sm:$0xff]
        %v1076 = vld [vmem:[#allocation9 + $0x150] sm:$0xff]
        %v1077 = vld [vmem:[#allocation9 + $0x158] sm:$0xff]
        %v1078 = vld [vmem:[#allocation9 + $0x160] sm:$0xff]
        %v1079 = vld [vmem:[#allocation9 + $0x168] sm:$0xff]
        %v1080 = vld [vmem:[#allocation9 + $0x170] sm:$0xff]
        %v1081 = vld [vmem:[#allocation9 + $0x178] sm:$0xff]
        %v1082 = vld [vmem:[#allocation9 + $0x180] sm:$0xff]
        %v1083 = vld [vmem:[#allocation9 + $0x188] sm:$0xff]
        %v1084 = vld [vmem:[#allocation9 + $0x190] sm:$0xff]
        %v1085 = vld [vmem:[#allocation9 + $0x198] sm:$0xff]
        %v1086 = vld [vmem:[#allocation9 + $0x1a0] sm:$0xff]
        %v1087 = vld [vmem:[#allocation9 + $0x1a8] sm:$0xff]
        %v1088 = vld [vmem:[#allocation9 + $0x1b0] sm:$0xff]
        %v1089 = vld [vmem:[#allocation9 + $0x1b8] sm:$0xff]
        %v1090 = vld [vmem:[#allocation9 + $0x1c0] sm:$0xff]
        %v1091 = vld [vmem:[#allocation9 + $0x1c8] sm:$0xff]
        %v1092 = vld [vmem:[#allocation9 + $0x1d0] sm:$0xff]
        %v1093 = vld [vmem:[#allocation9 + $0x1d8] sm:$0xff]
        %v1094 = vld [vmem:[#allocation9 + $0x1e0] sm:$0xff]
        %v1095 = vld [vmem:[#allocation9 + $0x1e8] sm:$0xff]
        %v1096 = vld [vmem:[#allocation9 + $0x1f0] sm:$0xff]
        %v1097 = vld [vmem:[#allocation9 + $0x1f8] sm:$0xff]
        %v1098 = vld [vmem:[#allocation9 + $0x200] sm:$0xff]
        %v1099 = vld [vmem:[#allocation9 + $0x208] sm:$0xff]
        %v1100 = vld [vmem:[#allocation9 + $0x210] sm:$0xff]
        %v1101 = vld [vmem:[#allocation9 + $0x218] sm:$0xff]
        %v1102 = vld [vmem:[#allocation9 + $0x220] sm:$0xff]
        %v1103 = vld [vmem:[#allocation9 + $0x228] sm:$0xff]
        %v1104 = vld [vmem:[#allocation9 + $0x230] sm:$0xff]
        %v1105 = vld [vmem:[#allocation9 + $0x238] sm:$0xff]
        %v1106 = vld [vmem:[#allocation9 + $0x240] sm:$0xff]
        %v1107 = vld [vmem:[#allocation9 + $0x248] sm:$0xff]
        %v1108 = vld [vmem:[#allocation9 + $0x250] sm:$0xff]
        %v1109 = vld [vmem:[#allocation9 + $0x258] sm:$0xff]
        %v1110 = vld [vmem:[#allocation9 + $0x260] sm:$0xff]
        %v1111 = vld [vmem:[#allocation9 + $0x268] sm:$0xff]
        %v1112 = vld [vmem:[#allocation9 + $0x270] sm:$0xff]
        %v1113 = vld [vmem:[#allocation9 + $0x278] sm:$0xff]
        %v1114 = vld [vmem:[#allocation9 + $0x280] sm:$0xff]
        %v1115 = vld [vmem:[#allocation9 + $0x288] sm:$0xff]
        %v1116 = vld [vmem:[#allocation9 + $0x290] sm:$0xff]
        %v1117 = vld [vmem:[#allocation9 + $0x298] sm:$0xff]
        %v1118 = vld [vmem:[#allocation9 + $0x2a0] sm:$0xff]
        %v1119 = vld [vmem:[#allocation9 + $0x2a8] sm:$0xff]
        %v1120 = vld [vmem:[#allocation9 + $0x2b0] sm:$0xff]
        %v1121 = vld [vmem:[#allocation9 + $0x2b8] sm:$0xff]
        %v1122 = vld [vmem:[#allocation9 + $0x2c0] sm:$0xff]
        %v1123 = vld [vmem:[#allocation9 + $0x2c8] sm:$0xff]
        %v1124 = vld [vmem:[#allocation9 + $0x2d0] sm:$0xff]
        %v1125 = vld [vmem:[#allocation9 + $0x2d8] sm:$0xff]
        %v1126 = vld [vmem:[#allocation9 + $0x2e0] sm:$0xff]
        %v1127 = vld [vmem:[#allocation9 + $0x2e8] sm:$0xff]
        %v1128 = vld [vmem:[#allocation9 + $0x2f0] sm:$0xff]
        %v1129 = vld [vmem:[#allocation9 + $0x2f8] sm:$0xff]
        %v1130 = vld [vmem:[#allocation9 + $0x300] sm:$0xff]
        %v1131 = vld [vmem:[#allocation9 + $0x308] sm:$0xff]
        %v1132 = vld [vmem:[#allocation9 + $0x310] sm:$0xff]
        %v1133 = vld [vmem:[#allocation9 + $0x318] sm:$0xff]
        %v1134 = vld [vmem:[#allocation9 + $0x320] sm:$0xff]
        %v1135 = vld [vmem:[#allocation9 + $0x328] sm:$0xff]
        %v1136 = vld [vmem:[#allocation9 + $0x330] sm:$0xff]
        %v1137 = vld [vmem:[#allocation9 + $0x338] sm:$0xff]
        %v1138 = vld [vmem:[#allocation9 + $0x340] sm:$0xff]
        %v1139 = vld [vmem:[#allocation9 + $0x348] sm:$0xff]
        %v1140 = vld [vmem:[#allocation9 + $0x350] sm:$0xff]
        %v1141 = vld [vmem:[#allocation9 + $0x358] sm:$0xff]
        %v1142 = vld [vmem:[#allocation9 + $0x360] sm:$0xff]
        %v1143 = vld [vmem:[#allocation9 + $0x368] sm:$0xff]
        %v1144 = vld [vmem:[#allocation9 + $0x370] sm:$0xff]
        %v1145 = vld [vmem:[#allocation9 + $0x378] sm:$0xff]
        %v1146 = vld [vmem:[#allocation9 + $0x380] sm:$0xff]
        %v1147 = vld [vmem:[#allocation9 + $0x388] sm:$0xff]
        %v1148 = vld [vmem:[#allocation9 + $0x390] sm:$0xff]
        %v1149 = vld [vmem:[#allocation9 + $0x398] sm:$0xff]
        %v1150 = vld [vmem:[#allocation9 + $0x3a0] sm:$0xff]
        %v1151 = vld [vmem:[#allocation9 + $0x3a8] sm:$0xff]
        %v1152 = vld [vmem:[#allocation9 + $0x3b0] sm:$0xff]
        %v1153 = vld [vmem:[#allocation9 + $0x3b8] sm:$0xff]
        %v1154 = vld [vmem:[#allocation9 + $0x3c0] sm:$0xff]
        %v1155 = vld [vmem:[#allocation9 + $0x3c8] sm:$0xff]
        %v1156 = vld [vmem:[#allocation9 + $0x3d0] sm:$0xff]
        %v1157 = vld [vmem:[#allocation9 + $0x3d8] sm:$0xff]
        %v1158 = vld [vmem:[#allocation9 + $0x3e0] sm:$0xff]
        %v1159 = vld [vmem:[#allocation9 + $0x3e8] sm:$0xff]
        %v1160 = vld [vmem:[#allocation9 + $0x3f0] sm:$0xff]
        %v1161 = vld [vmem:[#allocation9 + $0x3f8] sm:$0xff]
        %v1162 = vld [vmem:[#allocation9 + $0x400] sm:$0xff]
        %v1163 = vld [vmem:[#allocation9 + $0x408] sm:$0xff]
        %v1164 = vld [vmem:[#allocation9 + $0x410] sm:$0xff]
        %v1165 = vld [vmem:[#allocation9 + $0x418] sm:$0xff]
        %v1166 = vld [vmem:[#allocation9 + $0x420] sm:$0xff]
        %v1167 = vld [vmem:[#allocation9 + $0x428] sm:$0xff]
        %v1168 = vld [vmem:[#allocation9 + $0x430] sm:$0xff]
        %v1169 = vld [vmem:[#allocation9 + $0x438] sm:$0xff]
        %v1170 = vld [vmem:[#allocation9 + $0x440] sm:$0xff]
        %v1171 = vld [vmem:[#allocation9 + $0x448] sm:$0xff]
        %v1172 = vld [vmem:[#allocation9 + $0x450] sm:$0xff]
        %v1173 = vld [vmem:[#allocation9 + $0x458] sm:$0xff]
        %v1174 = vld [vmem:[#allocation9 + $0x460] sm:$0xff]
        %v1175 = vld [vmem:[#allocation9 + $0x468] sm:$0xff]
        %v1176 = vld [vmem:[#allocation9 + $0x470] sm:$0xff]
        %v1177 = vld [vmem:[#allocation9 + $0x478] sm:$0xff]
        %v1178 = vld [vmem:[#allocation9 + $0x480] sm:$0xff]
        %v1179 = vld [vmem:[#allocation9 + $0x488] sm:$0xff]
        %v1180 = vld [vmem:[#allocation9 + $0x490] sm:$0xff]
        %v1181 = vld [vmem:[#allocation9 + $0x498] sm:$0xff]
        %v1182 = vld [vmem:[#allocation9 + $0x4a0] sm:$0xff]
        %v1183 = vld [vmem:[#allocation9 + $0x4a8] sm:$0xff]
        %v1184 = vld [vmem:[#allocation9 + $0x4b0] sm:$0xff]
        %v1185 = vld [vmem:[#allocation9 + $0x4b8] sm:$0xff]
        %v1186 = vld [vmem:[#allocation9 + $0x4c0] sm:$0xff]
        %v1187 = vld [vmem:[#allocation9 + $0x4c8] sm:$0xff]
        %v1188 = vld [vmem:[#allocation9 + $0x4d0] sm:$0xff]
        %v1189 = vld [vmem:[#allocation9 + $0x4d8] sm:$0xff]
        %v1190 = vld [vmem:[#allocation9 + $0x4e0] sm:$0xff]
        %v1191 = vld [vmem:[#allocation9 + $0x4e8] sm:$0xff]
        %v1192 = vld [vmem:[#allocation9 + $0x4f0] sm:$0xff]
        %v1193 = vld [vmem:[#allocation9 + $0x4f8] sm:$0xff]
        %v1194 = vld [vmem:[#allocation9 + $0x500] sm:$0xff]
        %v1195 = vld [vmem:[#allocation9 + $0x508] sm:$0xff]
        %v1196 = vld [vmem:[#allocation9 + $0x510] sm:$0xff]
        %v1197 = vld [vmem:[#allocation9 + $0x518] sm:$0xff]
        %v1198 = vld [vmem:[#allocation9 + $0x520] sm:$0xff]
        %v1199 = vld [vmem:[#allocation9 + $0x528] sm:$0xff]
        %v1200 = vld [vmem:[#allocation9 + $0x530] sm:$0xff]
        %v1201 = vld [vmem:[#allocation9 + $0x538] sm:$0xff]
        %v1202 = vld [vmem:[#allocation9 + $0x540] sm:$0xff]
        %v1203 = vld [vmem:[#allocation9 + $0x548] sm:$0xff]
        %v1204 = vld [vmem:[#allocation9 + $0x550] sm:$0xff]
        %v1205 = vld [vmem:[#allocation9 + $0x558] sm:$0xff]
        %v1206 = vld [vmem:[#allocation9 + $0x560] sm:$0xff]
        %v1207 = vld [vmem:[#allocation9 + $0x568] sm:$0xff]
        %v1208 = vld [vmem:[#allocation9 + $0x570] sm:$0xff]
        %v1209 = vld [vmem:[#allocation9 + $0x578] sm:$0xff]
        %v1210 = vld [vmem:[#allocation9 + $0x580] sm:$0xff]
        %v1211 = vld [vmem:[#allocation9 + $0x588] sm:$0xff]
        %v1212 = vld [vmem:[#allocation9 + $0x590] sm:$0xff]
        %v1213 = vld [vmem:[#allocation9 + $0x598] sm:$0xff]
        %v1214 = vld [vmem:[#allocation9 + $0x5a0] sm:$0xff]
        %v1215 = vld [vmem:[#allocation9 + $0x5a8] sm:$0xff]
        %v1216 = vld [vmem:[#allocation9 + $0x5b0] sm:$0xff]
        %v1217 = vld [vmem:[#allocation9 + $0x5b8] sm:$0xff]
        %v1218 = vld [vmem:[#allocation9 + $0x5c0] sm:$0xff]
        %v1219 = vld [vmem:[#allocation9 + $0x5c8] sm:$0xff]
        %v1220 = vld [vmem:[#allocation9 + $0x5d0] sm:$0xff]
        %v1221 = vld [vmem:[#allocation9 + $0x5d8] sm:$0xff]
        %v1222 = vld [vmem:[#allocation9 + $0x5e0] sm:$0xff]
        %v1223 = vld [vmem:[#allocation9 + $0x5e8] sm:$0xff]
        %v1224 = vld [vmem:[#allocation9 + $0x5f0] sm:$0xff]
        %v1225 = vld [vmem:[#allocation9 + $0x5f8] sm:$0xff]
        %v1226 = vld [vmem:[#allocation9 + $0x600] sm:$0xff]
        %v1227 = vld [vmem:[#allocation9 + $0x608] sm:$0xff]
        %v1228 = vld [vmem:[#allocation9 + $0x610] sm:$0xff]
        %v1229 = vld [vmem:[#allocation9 + $0x618] sm:$0xff]
        %v1230 = vld [vmem:[#allocation9 + $0x620] sm:$0xff]
        %v1231 = vld [vmem:[#allocation9 + $0x628] sm:$0xff]
        %v1232 = vld [vmem:[#allocation9 + $0x630] sm:$0xff]
        %v1233 = vld [vmem:[#allocation9 + $0x638] sm:$0xff]
        %v1234 = vld [vmem:[#allocation9 + $0x640] sm:$0xff]
        %v1235 = vld [vmem:[#allocation9 + $0x648] sm:$0xff]
        %v1236 = vld [vmem:[#allocation9 + $0x650] sm:$0xff]
        %v1237 = vld [vmem:[#allocation9 + $0x658] sm:$0xff]
        %v1238 = vld [vmem:[#allocation9 + $0x660] sm:$0xff]
        %v1239 = vld [vmem:[#allocation9 + $0x668] sm:$0xff]
        %v1240 = vld [vmem:[#allocation9 + $0x670] sm:$0xff]
        %v1241 = vld [vmem:[#allocation9 + $0x678] sm:$0xff]
        %v1242 = vld [vmem:[#allocation9 + $0x680] sm:$0xff]
        %v1243 = vld [vmem:[#allocation9 + $0x688] sm:$0xff]
        %v1244 = vld [vmem:[#allocation9 + $0x690] sm:$0xff]
        %v1245 = vld [vmem:[#allocation9 + $0x698] sm:$0xff]
        %v1246 = vld [vmem:[#allocation9 + $0x6a0] sm:$0xff]
        %v1247 = vld [vmem:[#allocation9 + $0x6a8] sm:$0xff]
        %v1248 = vld [vmem:[#allocation9 + $0x6b0] sm:$0xff]
        %v1249 = vld [vmem:[#allocation9 + $0x6b8] sm:$0xff]
        %v1250 = vld [vmem:[#allocation9 + $0x6c0] sm:$0xff]
        %v1251 = vld [vmem:[#allocation9 + $0x6c8] sm:$0xff]
        %v1252 = vld [vmem:[#allocation9 + $0x6d0] sm:$0xff]
        %v1253 = vld [vmem:[#allocation9 + $0x6d8] sm:$0xff]
        %v1254 = vld [vmem:[#allocation9 + $0x6e0] sm:$0xff]
        %v1255 = vld [vmem:[#allocation9 + $0x6e8] sm:$0xff]
        %v1256 = vld [vmem:[#allocation9 + $0x6f0] sm:$0xff]
        %v1257 = vld [vmem:[#allocation9 + $0x6f8] sm:$0xff]
        %v1258 = vld [vmem:[#allocation9 + $0x700] sm:$0xff]
        %v1259 = vld [vmem:[#allocation9 + $0x708] sm:$0xff]
        %v1260 = vld [vmem:[#allocation9 + $0x710] sm:$0xff]
        %v1261 = vld [vmem:[#allocation9 + $0x718] sm:$0xff]
        %v1262 = vld [vmem:[#allocation9 + $0x720] sm:$0xff]
        %v1263 = vld [vmem:[#allocation9 + $0x728] sm:$0xff]
        %v1264 = vld [vmem:[#allocation9 + $0x730] sm:$0xff]
        %v1265 = vld [vmem:[#allocation9 + $0x738] sm:$0xff]
        %v1266 = vld [vmem:[#allocation9 + $0x740] sm:$0xff]
        %v1267 = vld [vmem:[#allocation9 + $0x748] sm:$0xff]
        %v1268 = vld [vmem:[#allocation9 + $0x750] sm:$0xff]
        %v1269 = vld [vmem:[#allocation9 + $0x758] sm:$0xff]
        %v1270 = vld [vmem:[#allocation9 + $0x760] sm:$0xff]
        %v1271 = vld [vmem:[#allocation9 + $0x768] sm:$0xff]
        %v1272 = vld [vmem:[#allocation9 + $0x770] sm:$0xff]
        %v1273 = vld [vmem:[#allocation9 + $0x778] sm:$0xff]
        %v1274 = vld [vmem:[#allocation9 + $0x780] sm:$0xff]
        %v1275 = vld [vmem:[#allocation9 + $0x788] sm:$0xff]
        %v1276 = vld [vmem:[#allocation9 + $0x790] sm:$0xff]
        %v1277 = vld [vmem:[#allocation9 + $0x798] sm:$0xff]
        %v1278 = vld [vmem:[#allocation9 + $0x7a0] sm:$0xff]
        %v1279 = vld [vmem:[#allocation9 + $0x7a8] sm:$0xff]
        %v1280 = vld [vmem:[#allocation9 + $0x7b0] sm:$0xff]
        %v1281 = vld [vmem:[#allocation9 + $0x7b8] sm:$0xff]
        %v1282 = vld [vmem:[#allocation9 + $0x7c0] sm:$0xff]
        %v1283 = vld [vmem:[#allocation9 + $0x7c8] sm:$0xff]
        %v1284 = vld [vmem:[#allocation9 + $0x7d0] sm:$0xff]
        %v1285 = vld [vmem:[#allocation9 + $0x7d8] sm:$0xff]
        %v1286 = vld [vmem:[#allocation9 + $0x7e0] sm:$0xff]
        %v1287 = vld [vmem:[#allocation9 + $0x7e8] sm:$0xff]
        %v1288 = vld [vmem:[#allocation9 + $0x7f0] sm:$0xff]
        %v1289 = vld [vmem:[#allocation9 + $0x7f8] sm:$0xff]
        %v1290 = vld [vmem:[#allocation2] sm:$0xfe]
        %v1291 = vld [vmem:[#allocation2 + $0x8] sm:$0xfe]
        %v1292 = vld [vmem:[#allocation2 + $0x10] sm:$0xfe]
        %v1293 = vld [vmem:[#allocation2 + $0x18] sm:$0xfe]
        %v1294 = vld [vmem:[#allocation2 + $0x40] sm:$0x1]
        %v1295 = vld [vmem:[#allocation2 + $0x48] sm:$0x1]
        %v1296 = vld [vmem:[#allocation2 + $0x50] sm:$0x1]
        %v1297 = vld [vmem:[#allocation2 + $0x58] sm:$0x1]
        %s1298 = scalar_lea.vmem [#allocation9], 2048
        %v1299 = vld [vmem:[%s1298] sm:$0xff]
        %v1300 = vld [vmem:[%s1298 + $0x8] sm:$0xff]
        %v1301 = vld [vmem:[%s1298 + $0x10] sm:$0xff]
        %v1302 = vld [vmem:[%s1298 + $0x18] sm:$0xff]
        %v1303 = vld [vmem:[%s1298 + $0x20] sm:$0xff]
        %v1304 = vld [vmem:[%s1298 + $0x28] sm:$0xff]
        %v1305 = vld [vmem:[%s1298 + $0x30] sm:$0xff]
        %v1306 = vld [vmem:[%s1298 + $0x38] sm:$0xff]
        %v1307 = vld [vmem:[%s1298 + $0x40] sm:$0xff]
        %v1308 = vld [vmem:[%s1298 + $0x48] sm:$0xff]
        %v1309 = vld [vmem:[%s1298 + $0x50] sm:$0xff]
        %v1310 = vld [vmem:[%s1298 + $0x58] sm:$0xff]
        %v1311 = vld [vmem:[%s1298 + $0x60] sm:$0xff]
        %v1312 = vld [vmem:[%s1298 + $0x68] sm:$0xff]
        %v1313 = vld [vmem:[%s1298 + $0x70] sm:$0xff]
        %v1314 = vld [vmem:[%s1298 + $0x78] sm:$0xff]
        %v1315 = vld [vmem:[%s1298 + $0x80] sm:$0xff]
        %v1316 = vld [vmem:[%s1298 + $0x88] sm:$0xff]
        %v1317 = vld [vmem:[%s1298 + $0x90] sm:$0xff]
        %v1318 = vld [vmem:[%s1298 + $0x98] sm:$0xff]
        %v1319 = vld [vmem:[%s1298 + $0xa0] sm:$0xff]
        %v1320 = vld [vmem:[%s1298 + $0xa8] sm:$0xff]
        %v1321 = vld [vmem:[%s1298 + $0xb0] sm:$0xff]
        %v1322 = vld [vmem:[%s1298 + $0xb8] sm:$0xff]
        %v1323 = vld [vmem:[%s1298 + $0xc0] sm:$0xff]
        %v1324 = vld [vmem:[%s1298 + $0xc8] sm:$0xff]
        %v1325 = vld [vmem:[%s1298 + $0xd0] sm:$0xff]
        %v1326 = vld [vmem:[%s1298 + $0xd8] sm:$0xff]
        %v1327 = vld [vmem:[%s1298 + $0xe0] sm:$0xff]
        %v1328 = vld [vmem:[%s1298 + $0xe8] sm:$0xff]
        %v1329 = vld [vmem:[%s1298 + $0xf0] sm:$0xff]
        %v1330 = vld [vmem:[%s1298 + $0xf8] sm:$0xff]
        %v1331 = vld [vmem:[%s1298 + $0x100] sm:$0xff]
        %v1332 = vld [vmem:[%s1298 + $0x108] sm:$0xff]
        %v1333 = vld [vmem:[%s1298 + $0x110] sm:$0xff]
        %v1334 = vld [vmem:[%s1298 + $0x118] sm:$0xff]
        %v1335 = vld [vmem:[%s1298 + $0x120] sm:$0xff]
        %v1336 = vld [vmem:[%s1298 + $0x128] sm:$0xff]
        %v1337 = vld [vmem:[%s1298 + $0x130] sm:$0xff]
        %v1338 = vld [vmem:[%s1298 + $0x138] sm:$0xff]
        %v1339 = vld [vmem:[%s1298 + $0x140] sm:$0xff]
        %v1340 = vld [vmem:[%s1298 + $0x148] sm:$0xff]
        %v1341 = vld [vmem:[%s1298 + $0x150] sm:$0xff]
        %v1342 = vld [vmem:[%s1298 + $0x158] sm:$0xff]
        %v1343 = vld [vmem:[%s1298 + $0x160] sm:$0xff]
        %v1344 = vld [vmem:[%s1298 + $0x168] sm:$0xff]
        %v1345 = vld [vmem:[%s1298 + $0x170] sm:$0xff]
        %v1346 = vld [vmem:[%s1298 + $0x178] sm:$0xff]
        %v1347 = vld [vmem:[%s1298 + $0x180] sm:$0xff]
        %v1348 = vld [vmem:[%s1298 + $0x188] sm:$0xff]
        %v1349 = vld [vmem:[%s1298 + $0x190] sm:$0xff]
        %v1350 = vld [vmem:[%s1298 + $0x198] sm:$0xff]
        %v1351 = vld [vmem:[%s1298 + $0x1a0] sm:$0xff]
        %v1352 = vld [vmem:[%s1298 + $0x1a8] sm:$0xff]
        %v1353 = vld [vmem:[%s1298 + $0x1b0] sm:$0xff]
        %v1354 = vld [vmem:[%s1298 + $0x1b8] sm:$0xff]
        %v1355 = vld [vmem:[%s1298 + $0x1c0] sm:$0xff]
        %v1356 = vld [vmem:[%s1298 + $0x1c8] sm:$0xff]
        %v1357 = vld [vmem:[%s1298 + $0x1d0] sm:$0xff]
        %v1358 = vld [vmem:[%s1298 + $0x1d8] sm:$0xff]
        %v1359 = vld [vmem:[%s1298 + $0x1e0] sm:$0xff]
        %v1360 = vld [vmem:[%s1298 + $0x1e8] sm:$0xff]
        %v1361 = vld [vmem:[%s1298 + $0x1f0] sm:$0xff]
        %v1362 = vld [vmem:[%s1298 + $0x1f8] sm:$0xff]
        %v1363 = vld [vmem:[%s1298 + $0x200] sm:$0xff]
        %v1364 = vld [vmem:[%s1298 + $0x208] sm:$0xff]
        %v1365 = vld [vmem:[%s1298 + $0x210] sm:$0xff]
        %v1366 = vld [vmem:[%s1298 + $0x218] sm:$0xff]
        %v1367 = vld [vmem:[%s1298 + $0x220] sm:$0xff]
        %v1368 = vld [vmem:[%s1298 + $0x228] sm:$0xff]
        %v1369 = vld [vmem:[%s1298 + $0x230] sm:$0xff]
        %v1370 = vld [vmem:[%s1298 + $0x238] sm:$0xff]
        %v1371 = vld [vmem:[%s1298 + $0x240] sm:$0xff]
        %v1372 = vld [vmem:[%s1298 + $0x248] sm:$0xff]
        %v1373 = vld [vmem:[%s1298 + $0x250] sm:$0xff]
        %v1374 = vld [vmem:[%s1298 + $0x258] sm:$0xff]
        %v1375 = vld [vmem:[%s1298 + $0x260] sm:$0xff]
        %v1376 = vld [vmem:[%s1298 + $0x268] sm:$0xff]
        %v1377 = vld [vmem:[%s1298 + $0x270] sm:$0xff]
        %v1378 = vld [vmem:[%s1298 + $0x278] sm:$0xff]
        %v1379 = vld [vmem:[%s1298 + $0x280] sm:$0xff]
        %v1380 = vld [vmem:[%s1298 + $0x288] sm:$0xff]
        %v1381 = vld [vmem:[%s1298 + $0x290] sm:$0xff]
        %v1382 = vld [vmem:[%s1298 + $0x298] sm:$0xff]
        %v1383 = vld [vmem:[%s1298 + $0x2a0] sm:$0xff]
        %v1384 = vld [vmem:[%s1298 + $0x2a8] sm:$0xff]
        %v1385 = vld [vmem:[%s1298 + $0x2b0] sm:$0xff]
        %v1386 = vld [vmem:[%s1298 + $0x2b8] sm:$0xff]
        %v1387 = vld [vmem:[%s1298 + $0x2c0] sm:$0xff]
        %v1388 = vld [vmem:[%s1298 + $0x2c8] sm:$0xff]
        %v1389 = vld [vmem:[%s1298 + $0x2d0] sm:$0xff]
        %v1390 = vld [vmem:[%s1298 + $0x2d8] sm:$0xff]
        %v1391 = vld [vmem:[%s1298 + $0x2e0] sm:$0xff]
        %v1392 = vld [vmem:[%s1298 + $0x2e8] sm:$0xff]
        %v1393 = vld [vmem:[%s1298 + $0x2f0] sm:$0xff]
        %v1394 = vld [vmem:[%s1298 + $0x2f8] sm:$0xff]
        %v1395 = vld [vmem:[%s1298 + $0x300] sm:$0xff]
        %v1396 = vld [vmem:[%s1298 + $0x308] sm:$0xff]
        %v1397 = vld [vmem:[%s1298 + $0x310] sm:$0xff]
        %v1398 = vld [vmem:[%s1298 + $0x318] sm:$0xff]
        %v1399 = vld [vmem:[%s1298 + $0x320] sm:$0xff]
        %v1400 = vld [vmem:[%s1298 + $0x328] sm:$0xff]
        %v1401 = vld [vmem:[%s1298 + $0x330] sm:$0xff]
        %v1402 = vld [vmem:[%s1298 + $0x338] sm:$0xff]
        %v1403 = vld [vmem:[%s1298 + $0x340] sm:$0xff]
        %v1404 = vld [vmem:[%s1298 + $0x348] sm:$0xff]
        %v1405 = vld [vmem:[%s1298 + $0x350] sm:$0xff]
        %v1406 = vld [vmem:[%s1298 + $0x358] sm:$0xff]
        %v1407 = vld [vmem:[%s1298 + $0x360] sm:$0xff]
        %v1408 = vld [vmem:[%s1298 + $0x368] sm:$0xff]
        %v1409 = vld [vmem:[%s1298 + $0x370] sm:$0xff]
        %v1410 = vld [vmem:[%s1298 + $0x378] sm:$0xff]
        %v1411 = vld [vmem:[%s1298 + $0x380] sm:$0xff]
        %v1412 = vld [vmem:[%s1298 + $0x388] sm:$0xff]
        %v1413 = vld [vmem:[%s1298 + $0x390] sm:$0xff]
        %v1414 = vld [vmem:[%s1298 + $0x398] sm:$0xff]
        %v1415 = vld [vmem:[%s1298 + $0x3a0] sm:$0xff]
        %v1416 = vld [vmem:[%s1298 + $0x3a8] sm:$0xff]
        %v1417 = vld [vmem:[%s1298 + $0x3b0] sm:$0xff]
        %v1418 = vld [vmem:[%s1298 + $0x3b8] sm:$0xff]
        %v1419 = vld [vmem:[%s1298 + $0x3c0] sm:$0xff]
        %v1420 = vld [vmem:[%s1298 + $0x3c8] sm:$0xff]
        %v1421 = vld [vmem:[%s1298 + $0x3d0] sm:$0xff]
        %v1422 = vld [vmem:[%s1298 + $0x3d8] sm:$0xff]
        %v1423 = vld [vmem:[%s1298 + $0x3e0] sm:$0xff]
        %v1424 = vld [vmem:[%s1298 + $0x3e8] sm:$0xff]
        %v1425 = vld [vmem:[%s1298 + $0x3f0] sm:$0xff]
        %v1426 = vld [vmem:[%s1298 + $0x3f8] sm:$0xff]
        %v1427 = vld [vmem:[%s1298 + $0x400] sm:$0xff]
        %v1428 = vld [vmem:[%s1298 + $0x408] sm:$0xff]
        %v1429 = vld [vmem:[%s1298 + $0x410] sm:$0xff]
        %v1430 = vld [vmem:[%s1298 + $0x418] sm:$0xff]
        %v1431 = vld [vmem:[%s1298 + $0x420] sm:$0xff]
        %v1432 = vld [vmem:[%s1298 + $0x428] sm:$0xff]
        %v1433 = vld [vmem:[%s1298 + $0x430] sm:$0xff]
        %v1434 = vld [vmem:[%s1298 + $0x438] sm:$0xff]
        %v1435 = vld [vmem:[%s1298 + $0x440] sm:$0xff]
        %v1436 = vld [vmem:[%s1298 + $0x448] sm:$0xff]
        %v1437 = vld [vmem:[%s1298 + $0x450] sm:$0xff]
        %v1438 = vld [vmem:[%s1298 + $0x458] sm:$0xff]
        %v1439 = vld [vmem:[%s1298 + $0x460] sm:$0xff]
        %v1440 = vld [vmem:[%s1298 + $0x468] sm:$0xff]
        %v1441 = vld [vmem:[%s1298 + $0x470] sm:$0xff]
        %v1442 = vld [vmem:[%s1298 + $0x478] sm:$0xff]
        %v1443 = vld [vmem:[%s1298 + $0x480] sm:$0xff]
        %v1444 = vld [vmem:[%s1298 + $0x488] sm:$0xff]
        %v1445 = vld [vmem:[%s1298 + $0x490] sm:$0xff]
        %v1446 = vld [vmem:[%s1298 + $0x498] sm:$0xff]
        %v1447 = vld [vmem:[%s1298 + $0x4a0] sm:$0xff]
        %v1448 = vld [vmem:[%s1298 + $0x4a8] sm:$0xff]
        %v1449 = vld [vmem:[%s1298 + $0x4b0] sm:$0xff]
        %v1450 = vld [vmem:[%s1298 + $0x4b8] sm:$0xff]
        %v1451 = vld [vmem:[%s1298 + $0x4c0] sm:$0xff]
        %v1452 = vld [vmem:[%s1298 + $0x4c8] sm:$0xff]
        %v1453 = vld [vmem:[%s1298 + $0x4d0] sm:$0xff]
        %v1454 = vld [vmem:[%s1298 + $0x4d8] sm:$0xff]
        %v1455 = vld [vmem:[%s1298 + $0x4e0] sm:$0xff]
        %v1456 = vld [vmem:[%s1298 + $0x4e8] sm:$0xff]
        %v1457 = vld [vmem:[%s1298 + $0x4f0] sm:$0xff]
        %v1458 = vld [vmem:[%s1298 + $0x4f8] sm:$0xff]
        %v1459 = vld [vmem:[%s1298 + $0x500] sm:$0xff]
        %v1460 = vld [vmem:[%s1298 + $0x508] sm:$0xff]
        %v1461 = vld [vmem:[%s1298 + $0x510] sm:$0xff]
        %v1462 = vld [vmem:[%s1298 + $0x518] sm:$0xff]
        %v1463 = vld [vmem:[%s1298 + $0x520] sm:$0xff]
        %v1464 = vld [vmem:[%s1298 + $0x528] sm:$0xff]
        %v1465 = vld [vmem:[%s1298 + $0x530] sm:$0xff]
        %v1466 = vld [vmem:[%s1298 + $0x538] sm:$0xff]
        %v1467 = vld [vmem:[%s1298 + $0x540] sm:$0xff]
        %v1468 = vld [vmem:[%s1298 + $0x548] sm:$0xff]
        %v1469 = vld [vmem:[%s1298 + $0x550] sm:$0xff]
        %v1470 = vld [vmem:[%s1298 + $0x558] sm:$0xff]
        %v1471 = vld [vmem:[%s1298 + $0x560] sm:$0xff]
        %v1472 = vld [vmem:[%s1298 + $0x568] sm:$0xff]
        %v1473 = vld [vmem:[%s1298 + $0x570] sm:$0xff]
        %v1474 = vld [vmem:[%s1298 + $0x578] sm:$0xff]
        %v1475 = vld [vmem:[%s1298 + $0x580] sm:$0xff]
        %v1476 = vld [vmem:[%s1298 + $0x588] sm:$0xff]
        %v1477 = vld [vmem:[%s1298 + $0x590] sm:$0xff]
        %v1478 = vld [vmem:[%s1298 + $0x598] sm:$0xff]
        %v1479 = vld [vmem:[%s1298 + $0x5a0] sm:$0xff]
        %v1480 = vld [vmem:[%s1298 + $0x5a8] sm:$0xff]
        %v1481 = vld [vmem:[%s1298 + $0x5b0] sm:$0xff]
        %v1482 = vld [vmem:[%s1298 + $0x5b8] sm:$0xff]
        %v1483 = vld [vmem:[%s1298 + $0x5c0] sm:$0xff]
        %v1484 = vld [vmem:[%s1298 + $0x5c8] sm:$0xff]
        %v1485 = vld [vmem:[%s1298 + $0x5d0] sm:$0xff]
        %v1486 = vld [vmem:[%s1298 + $0x5d8] sm:$0xff]
        %v1487 = vld [vmem:[%s1298 + $0x5e0] sm:$0xff]
        %v1488 = vld [vmem:[%s1298 + $0x5e8] sm:$0xff]
        %v1489 = vld [vmem:[%s1298 + $0x5f0] sm:$0xff]
        %v1490 = vld [vmem:[%s1298 + $0x5f8] sm:$0xff]
        %v1491 = vld [vmem:[%s1298 + $0x600] sm:$0xff]
        %v1492 = vld [vmem:[%s1298 + $0x608] sm:$0xff]
        %v1493 = vld [vmem:[%s1298 + $0x610] sm:$0xff]
        %v1494 = vld [vmem:[%s1298 + $0x618] sm:$0xff]
        %v1495 = vld [vmem:[%s1298 + $0x620] sm:$0xff]
        %v1496 = vld [vmem:[%s1298 + $0x628] sm:$0xff]
        %v1497 = vld [vmem:[%s1298 + $0x630] sm:$0xff]
        %v1498 = vld [vmem:[%s1298 + $0x638] sm:$0xff]
        %v1499 = vld [vmem:[%s1298 + $0x640] sm:$0xff]
        %v1500 = vld [vmem:[%s1298 + $0x648] sm:$0xff]
        %v1501 = vld [vmem:[%s1298 + $0x650] sm:$0xff]
        %v1502 = vld [vmem:[%s1298 + $0x658] sm:$0xff]
        %v1503 = vld [vmem:[%s1298 + $0x660] sm:$0xff]
        %v1504 = vld [vmem:[%s1298 + $0x668] sm:$0xff]
        %v1505 = vld [vmem:[%s1298 + $0x670] sm:$0xff]
        %v1506 = vld [vmem:[%s1298 + $0x678] sm:$0xff]
        %v1507 = vld [vmem:[%s1298 + $0x680] sm:$0xff]
        %v1508 = vld [vmem:[%s1298 + $0x688] sm:$0xff]
        %v1509 = vld [vmem:[%s1298 + $0x690] sm:$0xff]
        %v1510 = vld [vmem:[%s1298 + $0x698] sm:$0xff]
        %v1511 = vld [vmem:[%s1298 + $0x6a0] sm:$0xff]
        %v1512 = vld [vmem:[%s1298 + $0x6a8] sm:$0xff]
        %v1513 = vld [vmem:[%s1298 + $0x6b0] sm:$0xff]
        %v1514 = vld [vmem:[%s1298 + $0x6b8] sm:$0xff]
        %v1515 = vld [vmem:[%s1298 + $0x6c0] sm:$0xff]
        %v1516 = vld [vmem:[%s1298 + $0x6c8] sm:$0xff]
        %v1517 = vld [vmem:[%s1298 + $0x6d0] sm:$0xff]
        %v1518 = vld [vmem:[%s1298 + $0x6d8] sm:$0xff]
        %v1519 = vld [vmem:[%s1298 + $0x6e0] sm:$0xff]
        %v1520 = vld [vmem:[%s1298 + $0x6e8] sm:$0xff]
        %v1521 = vld [vmem:[%s1298 + $0x6f0] sm:$0xff]
        %v1522 = vld [vmem:[%s1298 + $0x6f8] sm:$0xff]
        %v1523 = vld [vmem:[%s1298 + $0x700] sm:$0xff]
        %v1524 = vld [vmem:[%s1298 + $0x708] sm:$0xff]
        %v1525 = vld [vmem:[%s1298 + $0x710] sm:$0xff]
        %v1526 = vld [vmem:[%s1298 + $0x718] sm:$0xff]
        %v1527 = vld [vmem:[%s1298 + $0x720] sm:$0xff]
        %v1528 = vld [vmem:[%s1298 + $0x728] sm:$0xff]
        %v1529 = vld [vmem:[%s1298 + $0x730] sm:$0xff]
        %v1530 = vld [vmem:[%s1298 + $0x738] sm:$0xff]
        %v1531 = vld [vmem:[%s1298 + $0x740] sm:$0xff]
        %v1532 = vld [vmem:[%s1298 + $0x748] sm:$0xff]
        %v1533 = vld [vmem:[%s1298 + $0x750] sm:$0xff]
        %v1534 = vld [vmem:[%s1298 + $0x758] sm:$0xff]
        %v1535 = vld [vmem:[%s1298 + $0x760] sm:$0xff]
        %v1536 = vld [vmem:[%s1298 + $0x768] sm:$0xff]
        %v1537 = vld [vmem:[%s1298 + $0x770] sm:$0xff]
        %v1538 = vld [vmem:[%s1298 + $0x778] sm:$0xff]
        %v1539 = vld [vmem:[%s1298 + $0x780] sm:$0xff]
        %v1540 = vld [vmem:[%s1298 + $0x788] sm:$0xff]
        %v1541 = vld [vmem:[%s1298 + $0x790] sm:$0xff]
        %v1542 = vld [vmem:[%s1298 + $0x798] sm:$0xff]
        %v1543 = vld [vmem:[%s1298 + $0x7a0] sm:$0xff]
        %v1544 = vld [vmem:[%s1298 + $0x7a8] sm:$0xff]
        %v1545 = vld [vmem:[%s1298 + $0x7b0] sm:$0xff]
        %v1546 = vld [vmem:[%s1298 + $0x7b8] sm:$0xff]
        %v1547 = vld [vmem:[%s1298 + $0x7c0] sm:$0xff]
        %v1548 = vld [vmem:[%s1298 + $0x7c8] sm:$0xff]
        %v1549 = vld [vmem:[%s1298 + $0x7d0] sm:$0xff]
        %v1550 = vld [vmem:[%s1298 + $0x7d8] sm:$0xff]
        %v1551 = vld [vmem:[%s1298 + $0x7e0] sm:$0xff]
        %v1552 = vld [vmem:[%s1298 + $0x7e8] sm:$0xff]
        %v1553 = vld [vmem:[%s1298 + $0x7f0] sm:$0xff]
        %v1554 = vld [vmem:[%s1298 + $0x7f8] sm:$0xff]
        %vm1567 = vcmask 1046528
        %v1568 = vrot.slane %v1290, 1
        %v1569 = vrot.slane %v1030, 1
        %v1570 = vsel %vm1567, %v1568, %v1569
        %v1571 = vrot.slane %v1291, 1
        %v1572 = vrot.slane %v1031, 1
        %v1573 = vsel %vm1567, %v1571, %v1572
        %v1574 = vrot.slane %v1292, 1
        %v1575 = vrot.slane %v1032, 1
        %v1576 = vsel %vm1567, %v1574, %v1575
        %v1577 = vrot.slane %v1293, 1
        %v1578 = vrot.slane %v1033, 1
        %v1579 = vsel %vm1567, %v1577, %v1578
        %v1580 = vrot.slane %v1294, 1
        %v1581 = vsel %vm1567, %v1569, %v1580
        %v1582 = vrot.slane %v1295, 1
        %v1583 = vsel %vm1567, %v1572, %v1582
        %v1584 = vrot.slane %v1296, 1
        %v1585 = vsel %vm1567, %v1575, %v1584
        %v1586 = vrot.slane %v1297, 1
        %v1587 = vsel %vm1567, %v1578, %v1586
        %1596 = vmatprep.subr.mxu0 %v1300
        %1597 = vmatpush1.msra.mxu0 %v1299
        %1598 = vmatprep.subr.mxu0 %v1304
        %1599 = vmatpush1.msra.mxu0 %v1303
        %1600 = vmatprep.subr.mxu0 %v1308
        %1601 = vmatpush1.msra.mxu0 %v1307
        %1602 = vmatprep.subr.mxu0 %v1312
        %1603 = vmatpush1.msra.mxu0 %v1311
        %1604 = vmatprep.subr.mxu0 %v1316
        %1605 = vmatpush1.msra.mxu0 %v1315
        %1606 = vmatprep.subr.mxu0 %v1320
        %1607 = vmatpush1.msra.mxu0 %v1319
        %1608 = vmatprep.subr.mxu0 %v1324
        %1609 = vmatpush1.msra.mxu0 %v1323
        %1610 = vmatprep.subr.mxu0 %v1328
        %1611 = vmatpush1.msra.mxu0 %v1327
        %1612 = vmatprep.subr.mxu0 %v1332
        %1613 = vmatpush1.msra.mxu0 %v1331
        %1614 = vmatprep.subr.mxu0 %v1336
        %1615 = vmatpush1.msra.mxu0 %v1335
        %1616 = vmatprep.subr.mxu0 %v1340
        %1617 = vmatpush1.msra.mxu0 %v1339
        %1618 = vmatprep.subr.mxu0 %v1344
        %1619 = vmatpush1.msra.mxu0 %v1343
        %1620 = vmatprep.subr.mxu0 %v1348
        %1621 = vmatpush1.msra.mxu0 %v1347
        %1622 = vmatprep.subr.mxu0 %v1352
        %1623 = vmatpush1.msra.mxu0 %v1351
        %1624 = vmatprep.subr.mxu0 %v1356
        %1625 = vmatpush1.msra.mxu0 %v1355
        %1626 = vmatprep.subr.mxu0 %v1360
        %1627 = vmatpush1.msra.mxu0 %v1359
        %1628 = vmatprep.subr.mxu0 %v1364
        %1629 = vmatpush1.msra.mxu0 %v1363
        %1630 = vmatprep.subr.mxu0 %v1368
        %1631 = vmatpush1.msra.mxu0 %v1367
        %1632 = vmatprep.subr.mxu0 %v1372
        %1633 = vmatpush1.msra.mxu0 %v1371
        %1634 = vmatprep.subr.mxu0 %v1376
        %1635 = vmatpush1.msra.mxu0 %v1375
        %1636 = vmatprep.subr.mxu0 %v1380
        %1637 = vmatpush1.msra.mxu0 %v1379
        %1638 = vmatprep.subr.mxu0 %v1384
        %1639 = vmatpush1.msra.mxu0 %v1383
        %1640 = vmatprep.subr.mxu0 %v1388
        %1641 = vmatpush1.msra.mxu0 %v1387
        %1642 = vmatprep.subr.mxu0 %v1392
        %1643 = vmatpush1.msra.mxu0 %v1391
        %1644 = vmatprep.subr.mxu0 %v1396
        %1645 = vmatpush1.msra.mxu0 %v1395
        %1646 = vmatprep.subr.mxu0 %v1400
        %1647 = vmatpush1.msra.mxu0 %v1399
        %1648 = vmatprep.subr.mxu0 %v1404
        %1649 = vmatpush1.msra.mxu0 %v1403
        %1650 = vmatprep.subr.mxu0 %v1408
        %1651 = vmatpush1.msra.mxu0 %v1407
        %1652 = vmatprep.subr.mxu0 %v1412
        %1653 = vmatpush1.msra.mxu0 %v1411
        %1654 = vmatprep.subr.mxu0 %v1416
        %1655 = vmatpush1.msra.mxu0 %v1415
        %1656 = vmatprep.subr.mxu0 %v1420
        %1657 = vmatpush1.msra.mxu0 %v1419
        %1658 = vmatprep.subr.mxu0 %v1424
        %1659 = vmatpush1.msra.mxu0 %v1423
        %1660 = vmatprep.mubr.f32.mxu0 %v1573
        %1661 = vmatmul.mubr.f32.gmra.mrb[0].mxu0 %v1570
        %v1662 = vpop.f32.mrb[0].mxu0
        %v1663 = vadd.f32 0.0, %v1662
        %v1664 = vpop.f32.mrb[0].mxu0
        %v1665 = vadd.f32 0.0, %v1664
        %1666 = vmatprep.mubr.f32.mxu0 %v1583
        %1667 = vmatmul.mubr.f32.gmra.mrb[0].mxu0 %v1581
        %v1668 = vpop.f32.mrb[0].mxu0
        %v1669 = vadd.f32 0.0, %v1668
        %v1670 = vpop.f32.mrb[0].mxu0
        %v1671 = vadd.f32 0.0, %v1670
        %1672 = vdwg.mxu0
        %1673 = vmatprep.subr.mxu0 %v1428
        %1674 = vmatpush1.msra.mxu0 %v1427
        %1675 = vmatprep.subr.mxu0 %v1432
        %1676 = vmatpush1.msra.mxu0 %v1431
        %1677 = vmatprep.subr.mxu0 %v1436
        %1678 = vmatpush1.msra.mxu0 %v1435
        %1679 = vmatprep.subr.mxu0 %v1440
        %1680 = vmatpush1.msra.mxu0 %v1439
        %1681 = vmatprep.subr.mxu0 %v1444
        %1682 = vmatpush1.msra.mxu0 %v1443
        %1683 = vmatprep.subr.mxu0 %v1448
        %1684 = vmatpush1.msra.mxu0 %v1447
        %1685 = vmatprep.subr.mxu0 %v1452
        %1686 = vmatpush1.msra.mxu0 %v1451
        %1687 = vmatprep.subr.mxu0 %v1456
        %1688 = vmatpush1.msra.mxu0 %v1455
        %1689 = vmatprep.subr.mxu0 %v1460
        %1690 = vmatpush1.msra.mxu0 %v1459
        %1691 = vmatprep.subr.mxu0 %v1464
        %1692 = vmatpush1.msra.mxu0 %v1463
        %1693 = vmatprep.subr.mxu0 %v1468
        %1694 = vmatpush1.msra.mxu0 %v1467
        %1695 = vmatprep.subr.mxu0 %v1472
        %1696 = vmatpush1.msra.mxu0 %v1471
        %1697 = vmatprep.subr.mxu0 %v1476
        %1698 = vmatpush1.msra.mxu0 %v1475
        %1699 = vmatprep.subr.mxu0 %v1480
        %1700 = vmatpush1.msra.mxu0 %v1479
        %1701 = vmatprep.subr.mxu0 %v1484
        %1702 = vmatpush1.msra.mxu0 %v1483
        %1703 = vmatprep.subr.mxu0 %v1488
        %1704 = vmatpush1.msra.mxu0 %v1487
        %1705 = vmatprep.subr.mxu0 %v1492
        %1706 = vmatpush1.msra.mxu0 %v1491
        %1707 = vmatprep.subr.mxu0 %v1496
        %1708 = vmatpush1.msra.mxu0 %v1495
        %1709 = vmatprep.subr.mxu0 %v1500
        %1710 = vmatpush1.msra.mxu0 %v1499
        %1711 = vmatprep.subr.mxu0 %v1504
        %1712 = vmatpush1.msra.mxu0 %v1503
        %1713 = vmatprep.subr.mxu0 %v1508
        %1714 = vmatpush1.msra.mxu0 %v1507
        %1715 = vmatprep.subr.mxu0 %v1512
        %1716 = vmatpush1.msra.mxu0 %v1511
        %1717 = vmatprep.subr.mxu0 %v1516
        %1718 = vmatpush1.msra.mxu0 %v1515
        %1719 = vmatprep.subr.mxu0 %v1520
        %1720 = vmatpush1.msra.mxu0 %v1519
        %1721 = vmatprep.subr.mxu0 %v1524
        %1722 = vmatpush1.msra.mxu0 %v1523
        %1723 = vmatprep.subr.mxu0 %v1528
        %1724 = vmatpush1.msra.mxu0 %v1527
        %1725 = vmatprep.subr.mxu0 %v1532
        %1726 = vmatpush1.msra.mxu0 %v1531
        %1727 = vmatprep.subr.mxu0 %v1536
        %1728 = vmatpush1.msra.mxu0 %v1535
        %1729 = vmatprep.subr.mxu0 %v1540
        %1730 = vmatpush1.msra.mxu0 %v1539
        %1731 = vmatprep.subr.mxu0 %v1544
        %1732 = vmatpush1.msra.mxu0 %v1543
        %1733 = vmatprep.subr.mxu0 %v1548
        %1734 = vmatpush1.msra.mxu0 %v1547
        %1735 = vmatprep.subr.mxu0 %v1552
        %1736 = vmatpush1.msra.mxu0 %v1551
        %1737 = vmatprep.mubr.f32.mxu0 %v1579
        %1738 = vmatmul.mubr.f32.gmra.mrb[0].mxu0 %v1576
        %v1739 = vpop.f32.mrb[0].mxu0
        %v1740 = vadd.f32 %v1663, %v1739
        %v1741 = vpop.f32.mrb[0].mxu0
        %v1742 = vadd.f32 %v1665, %v1741
        %1743 = vmatprep.mubr.f32.mxu0 %v1587
        %1744 = vmatmul.mubr.f32.gmra.mrb[0].mxu0 %v1585
        %v1745 = vpop.f32.mrb[0].mxu0
        %v1746 = vadd.f32 %v1669, %v1745
        %v1747 = vpop.f32.mrb[0].mxu0
        %v1748 = vadd.f32 %v1671, %v1747
        %1749 = vdwg.mxu0
        %1750 = vmatprep.subr.mxu0 %v1302
        %1751 = vmatpush1.msra.mxu0 %v1301
        %1752 = vmatprep.subr.mxu0 %v1306
        %1753 = vmatpush1.msra.mxu0 %v1305
        %1754 = vmatprep.subr.mxu0 %v1310
        %1755 = vmatpush1.msra.mxu0 %v1309
        %1756 = vmatprep.subr.mxu0 %v1314
        %1757 = vmatpush1.msra.mxu0 %v1313
        %1758 = vmatprep.subr.mxu0 %v1318
        %1759 = vmatpush1.msra.mxu0 %v1317
        %1760 = vmatprep.subr.mxu0 %v1322
        %1761 = vmatpush1.msra.mxu0 %v1321
        %1762 = vmatprep.subr.mxu0 %v1326
        %1763 = vmatpush1.msra.mxu0 %v1325
        %1764 = vmatprep.subr.mxu0 %v1330
        %1765 = vmatpush1.msra.mxu0 %v1329
        %1766 = vmatprep.subr.mxu0 %v1334
        %1767 = vmatpush1.msra.mxu0 %v1333
        %1768 = vmatprep.subr.mxu0 %v1338
        %1769 = vmatpush1.msra.mxu0 %v1337
        %1770 = vmatprep.subr.mxu0 %v1342
        %1771 = vmatpush1.msra.mxu0 %v1341
        %1772 = vmatprep.subr.mxu0 %v1346
        %1773 = vmatpush1.msra.mxu0 %v1345
        %1774 = vmatprep.subr.mxu0 %v1350
        %1775 = vmatpush1.msra.mxu0 %v1349
        %1776 = vmatprep.subr.mxu0 %v1354
        %1777 = vmatpush1.msra.mxu0 %v1353
        %1778 = vmatprep.subr.mxu0 %v1358
        %1779 = vmatpush1.msra.mxu0 %v1357
        %1780 = vmatprep.subr.mxu0 %v1362
        %1781 = vmatpush1.msra.mxu0 %v1361
        %1782 = vmatprep.subr.mxu0 %v1366
        %1783 = vmatpush1.msra.mxu0 %v1365
        %1784 = vmatprep.subr.mxu0 %v1370
        %1785 = vmatpush1.msra.mxu0 %v1369
        %1786 = vmatprep.subr.mxu0 %v1374
        %1787 = vmatpush1.msra.mxu0 %v1373
        %1788 = vmatprep.subr.mxu0 %v1378
        %1789 = vmatpush1.msra.mxu0 %v1377
        %1790 = vmatprep.subr.mxu0 %v1382
        %1791 = vmatpush1.msra.mxu0 %v1381
        %1792 = vmatprep.subr.mxu0 %v1386
        %1793 = vmatpush1.msra.mxu0 %v1385
        %1794 = vmatprep.subr.mxu0 %v1390
        %1795 = vmatpush1.msra.mxu0 %v1389
        %1796 = vmatprep.subr.mxu0 %v1394
        %1797 = vmatpush1.msra.mxu0 %v1393
        %1798 = vmatprep.subr.mxu0 %v1398
        %1799 = vmatpush1.msra.mxu0 %v1397
        %1800 = vmatprep.subr.mxu0 %v1402
        %1801 = vmatpush1.msra.mxu0 %v1401
        %1802 = vmatprep.subr.mxu0 %v1406
        %1803 = vmatpush1.msra.mxu0 %v1405
        %1804 = vmatprep.subr.mxu0 %v1410
        %1805 = vmatpush1.msra.mxu0 %v1409
        %1806 = vmatprep.subr.mxu0 %v1414
        %1807 = vmatpush1.msra.mxu0 %v1413
        %1808 = vmatprep.subr.mxu0 %v1418
        %1809 = vmatpush1.msra.mxu0 %v1417
        %1810 = vmatprep.subr.mxu0 %v1422
        %1811 = vmatpush1.msra.mxu0 %v1421
        %1812 = vmatprep.subr.mxu0 %v1426
        %1813 = vmatpush1.msra.mxu0 %v1425
        %1814 = vmatprep.mubr.f32.mxu0 %v1573
        %1815 = vmatmul.mubr.f32.gmra.mrb[0].mxu0 %v1570
        %v1816 = vpop.f32.mrb[0].mxu0
        %v1817 = vadd.f32 0.0, %v1816
        %v1818 = vpop.f32.mrb[0].mxu0
        %v1819 = vadd.f32 0.0, %v1818
        %1820 = vmatprep.mubr.f32.mxu0 %v1583
        %1821 = vmatmul.mubr.f32.gmra.mrb[0].mxu0 %v1581
        %v1822 = vpop.f32.mrb[0].mxu0
        %v1823 = vadd.f32 0.0, %v1822
        %v1824 = vpop.f32.mrb[0].mxu0
        %v1825 = vadd.f32 0.0, %v1824
        %1826 = vdwg.mxu0
        %1827 = vmatprep.subr.mxu0 %v1430
        %1828 = vmatpush1.msra.mxu0 %v1429
        %1829 = vmatprep.subr.mxu0 %v1434
        %1830 = vmatpush1.msra.mxu0 %v1433
        %1831 = vmatprep.subr.mxu0 %v1438
        %1832 = vmatpush1.msra.mxu0 %v1437
        %1833 = vmatprep.subr.mxu0 %v1442
        %1834 = vmatpush1.msra.mxu0 %v1441
        %1835 = vmatprep.subr.mxu0 %v1446
        %1836 = vmatpush1.msra.mxu0 %v1445
        %1837 = vmatprep.subr.mxu0 %v1450
        %1838 = vmatpush1.msra.mxu0 %v1449
        %1839 = vmatprep.subr.mxu0 %v1454
        %1840 = vmatpush1.msra.mxu0 %v1453
        %1841 = vmatprep.subr.mxu0 %v1458
        %1842 = vmatpush1.msra.mxu0 %v1457
        %1843 = vmatprep.subr.mxu0 %v1462
        %1844 = vmatpush1.msra.mxu0 %v1461
        %1845 = vmatprep.subr.mxu0 %v1466
        %1846 = vmatpush1.msra.mxu0 %v1465
        %1847 = vmatprep.subr.mxu0 %v1470
        %1848 = vmatpush1.msra.mxu0 %v1469
        %1849 = vmatprep.subr.mxu0 %v1474
        %1850 = vmatpush1.msra.mxu0 %v1473
        %1851 = vmatprep.subr.mxu0 %v1478
        %1852 = vmatpush1.msra.mxu0 %v1477
        %1853 = vmatprep.subr.mxu0 %v1482
        %1854 = vmatpush1.msra.mxu0 %v1481
        %1855 = vmatprep.subr.mxu0 %v1486
        %1856 = vmatpush1.msra.mxu0 %v1485
        %1857 = vmatprep.subr.mxu0 %v1490
        %1858 = vmatpush1.msra.mxu0 %v1489
        %1859 = vmatprep.subr.mxu0 %v1494
        %1860 = vmatpush1.msra.mxu0 %v1493
        %1861 = vmatprep.subr.mxu0 %v1498
        %1862 = vmatpush1.msra.mxu0 %v1497
        %1863 = vmatprep.subr.mxu0 %v1502
        %1864 = vmatpush1.msra.mxu0 %v1501
        %1865 = vmatprep.subr.mxu0 %v1506
        %1866 = vmatpush1.msra.mxu0 %v1505
        %1867 = vmatprep.subr.mxu0 %v1510
        %1868 = vmatpush1.msra.mxu0 %v1509
        %1869 = vmatprep.subr.mxu0 %v1514
        %1870 = vmatpush1.msra.mxu0 %v1513
        %1871 = vmatprep.subr.mxu0 %v1518
        %1872 = vmatpush1.msra.mxu0 %v1517
        %1873 = vmatprep.subr.mxu0 %v1522
        %1874 = vmatpush1.msra.mxu0 %v1521
        %1875 = vmatprep.subr.mxu0 %v1526
        %1876 = vmatpush1.msra.mxu0 %v1525
        %1877 = vmatprep.subr.mxu0 %v1530
        %1878 = vmatpush1.msra.mxu0 %v1529
        %1879 = vmatprep.subr.mxu0 %v1534
        %1880 = vmatpush1.msra.mxu0 %v1533
        %1881 = vmatprep.subr.mxu0 %v1538
        %1882 = vmatpush1.msra.mxu0 %v1537
        %1883 = vmatprep.subr.mxu0 %v1542
        %1884 = vmatpush1.msra.mxu0 %v1541
        %1885 = vmatprep.subr.mxu0 %v1546
        %1886 = vmatpush1.msra.mxu0 %v1545
        %1887 = vmatprep.subr.mxu0 %v1550
        %1888 = vmatpush1.msra.mxu0 %v1549
        %1889 = vmatprep.subr.mxu0 %v1554
        %1890 = vmatpush1.msra.mxu0 %v1553
        %1891 = vmatprep.mubr.f32.mxu0 %v1579
        %1892 = vmatmul.mubr.f32.gmra.mrb[0].mxu0 %v1576
        %v1893 = vpop.f32.mrb[0].mxu0
        %v1894 = vadd.f32 %v1817, %v1893
        %v1895 = vpop.f32.mrb[0].mxu0
        %v1896 = vadd.f32 %v1819, %v1895
        %1897 = vmatprep.mubr.f32.mxu0 %v1587
        %1898 = vmatmul.mubr.f32.gmra.mrb[0].mxu0 %v1585
        %v1899 = vpop.f32.mrb[0].mxu0
        %v1900 = vadd.f32 %v1823, %v1899
        %v1901 = vpop.f32.mrb[0].mxu0
        %v1902 = vadd.f32 %v1825, %v1901
        %1903 = vdwg.mxu0
        %1904 = vmatprep.subr.mxu0 %v1035
        %1905 = vmatpush1.msra.mxu0 %v1034
        %1906 = vmatprep.subr.mxu0 %v1039
        %1907 = vmatpush1.msra.mxu0 %v1038
        %1908 = vmatprep.subr.mxu0 %v1043
        %1909 = vmatpush1.msra.mxu0 %v1042
        %1910 = vmatprep.subr.mxu0 %v1047
        %1911 = vmatpush1.msra.mxu0 %v1046
        %1912 = vmatprep.subr.mxu0 %v1051
        %1913 = vmatpush1.msra.mxu0 %v1050
        %1914 = vmatprep.subr.mxu0 %v1055
        %1915 = vmatpush1.msra.mxu0 %v1054
        %1916 = vmatprep.subr.mxu0 %v1059
        %1917 = vmatpush1.msra.mxu0 %v1058
        %1918 = vmatprep.subr.mxu0 %v1063
        %1919 = vmatpush1.msra.mxu0 %v1062
        %1920 = vmatprep.subr.mxu0 %v1067
        %1921 = vmatpush1.msra.mxu0 %v1066
        %1922 = vmatprep.subr.mxu0 %v1071
        %1923 = vmatpush1.msra.mxu0 %v1070
        %1924 = vmatprep.subr.mxu0 %v1075
        %1925 = vmatpush1.msra.mxu0 %v1074
        %1926 = vmatprep.subr.mxu0 %v1079
        %1927 = vmatpush1.msra.mxu0 %v1078
        %1928 = vmatprep.subr.mxu0 %v1083
        %1929 = vmatpush1.msra.mxu0 %v1082
        %1930 = vmatprep.subr.mxu0 %v1087
        %1931 = vmatpush1.msra.mxu0 %v1086
        %1932 = vmatprep.subr.mxu0 %v1091
        %1933 = vmatpush1.msra.mxu0 %v1090
        %1934 = vmatprep.subr.mxu0 %v1095
        %1935 = vmatpush1.msra.mxu0 %v1094
        %1936 = vmatprep.subr.mxu0 %v1099
        %1937 = vmatpush1.msra.mxu0 %v1098
        %1938 = vmatprep.subr.mxu0 %v1103
        %1939 = vmatpush1.msra.mxu0 %v1102
        %1940 = vmatprep.subr.mxu0 %v1107
        %1941 = vmatpush1.msra.mxu0 %v1106
        %1942 = vmatprep.subr.mxu0 %v1111
        %1943 = vmatpush1.msra.mxu0 %v1110
        %1944 = vmatprep.subr.mxu0 %v1115
        %1945 = vmatpush1.msra.mxu0 %v1114
        %1946 = vmatprep.subr.mxu0 %v1119
        %1947 = vmatpush1.msra.mxu0 %v1118
        %1948 = vmatprep.subr.mxu0 %v1123
        %1949 = vmatpush1.msra.mxu0 %v1122
        %1950 = vmatprep.subr.mxu0 %v1127
        %1951 = vmatpush1.msra.mxu0 %v1126
        %1952 = vmatprep.subr.mxu0 %v1131
        %1953 = vmatpush1.msra.mxu0 %v1130
        %1954 = vmatprep.subr.mxu0 %v1135
        %1955 = vmatpush1.msra.mxu0 %v1134
        %1956 = vmatprep.subr.mxu0 %v1139
        %1957 = vmatpush1.msra.mxu0 %v1138
        %1958 = vmatprep.subr.mxu0 %v1143
        %1959 = vmatpush1.msra.mxu0 %v1142
        %1960 = vmatprep.subr.mxu0 %v1147
        %1961 = vmatpush1.msra.mxu0 %v1146
        %1962 = vmatprep.subr.mxu0 %v1151
        %1963 = vmatpush1.msra.mxu0 %v1150
        %1964 = vmatprep.subr.mxu0 %v1155
        %1965 = vmatpush1.msra.mxu0 %v1154
        %1966 = vmatprep.subr.mxu0 %v1159
        %1967 = vmatpush1.msra.mxu0 %v1158
        %1968 = vmatprep.mubr.f32.mxu0 %v1027
        %1969 = vmatmul.mubr.f32.gmra.mrb[0].mxu0 %v1026
        %v1970 = vpop.f32.mrb[0].mxu0
        %v1971 = vadd.f32 %v1740, %v1970
        %v1972 = vpop.f32.mrb[0].mxu0
        %v1973 = vadd.f32 %v1742, %v1972
        %1974 = vmatprep.mubr.f32.mxu0 %v1031
        %1975 = vmatmul.mubr.f32.gmra.mrb[0].mxu0 %v1030
        %v1976 = vpop.f32.mrb[0].mxu0
        %v1977 = vadd.f32 %v1746, %v1976
        %v1978 = vpop.f32.mrb[0].mxu0
        %v1979 = vadd.f32 %v1748, %v1978
        %1980 = vdwg.mxu0
        %1981 = vmatprep.subr.mxu0 %v1163
        %1982 = vmatpush1.msra.mxu0 %v1162
        %1983 = vmatprep.subr.mxu0 %v1167
        %1984 = vmatpush1.msra.mxu0 %v1166
        %1985 = vmatprep.subr.mxu0 %v1171
        %1986 = vmatpush1.msra.mxu0 %v1170
        %1987 = vmatprep.subr.mxu0 %v1175
        %1988 = vmatpush1.msra.mxu0 %v1174
        %1989 = vmatprep.subr.mxu0 %v1179
        %1990 = vmatpush1.msra.mxu0 %v1178
        %1991 = vmatprep.subr.mxu0 %v1183
        %1992 = vmatpush1.msra.mxu0 %v1182
        %1993 = vmatprep.subr.mxu0 %v1187
        %1994 = vmatpush1.msra.mxu0 %v1186
        %1995 = vmatprep.subr.mxu0 %v1191
        %1996 = vmatpush1.msra.mxu0 %v1190
        %1997 = vmatprep.subr.mxu0 %v1195
        %1998 = vmatpush1.msra.mxu0 %v1194
        %1999 = vmatprep.subr.mxu0 %v1199
        %2000 = vmatpush1.msra.mxu0 %v1198
        %2001 = vmatprep.subr.mxu0 %v1203
        %2002 = vmatpush1.msra.mxu0 %v1202
        %2003 = vmatprep.subr.mxu0 %v1207
        %2004 = vmatpush1.msra.mxu0 %v1206
        %2005 = vmatprep.subr.mxu0 %v1211
        %2006 = vmatpush1.msra.mxu0 %v1210
        %2007 = vmatprep.subr.mxu0 %v1215
        %2008 = vmatpush1.msra.mxu0 %v1214
        %2009 = vmatprep.subr.mxu0 %v1219
        %2010 = vmatpush1.msra.mxu0 %v1218
        %2011 = vmatprep.subr.mxu0 %v1223
        %2012 = vmatpush1.msra.mxu0 %v1222
        %2013 = vmatprep.subr.mxu0 %v1227
        %2014 = vmatpush1.msra.mxu0 %v1226
        %2015 = vmatprep.subr.mxu0 %v1231
        %2016 = vmatpush1.msra.mxu0 %v1230
        %2017 = vmatprep.subr.mxu0 %v1235
        %2018 = vmatpush1.msra.mxu0 %v1234
        %2019 = vmatprep.subr.mxu0 %v1239
        %2020 = vmatpush1.msra.mxu0 %v1238
        %2021 = vmatprep.subr.mxu0 %v1243
        %2022 = vmatpush1.msra.mxu0 %v1242
        %2023 = vmatprep.subr.mxu0 %v1247
        %2024 = vmatpush1.msra.mxu0 %v1246
        %2025 = vmatprep.subr.mxu0 %v1251
        %2026 = vmatpush1.msra.mxu0 %v1250
        %2027 = vmatprep.subr.mxu0 %v1255
        %2028 = vmatpush1.msra.mxu0 %v1254
        %2029 = vmatprep.subr.mxu0 %v1259
        %2030 = vmatpush1.msra.mxu0 %v1258
        %2031 = vmatprep.subr.mxu0 %v1263
        %2032 = vmatpush1.msra.mxu0 %v1262
        %2033 = vmatprep.subr.mxu0 %v1267
        %2034 = vmatpush1.msra.mxu0 %v1266
        %2035 = vmatprep.subr.mxu0 %v1271
        %2036 = vmatpush1.msra.mxu0 %v1270
        %2037 = vmatprep.subr.mxu0 %v1275
        %2038 = vmatpush1.msra.mxu0 %v1274
        %2039 = vmatprep.subr.mxu0 %v1279
        %2040 = vmatpush1.msra.mxu0 %v1278
        %2041 = vmatprep.subr.mxu0 %v1283
        %2042 = vmatpush1.msra.mxu0 %v1282
        %2043 = vmatprep.subr.mxu0 %v1287
        %2044 = vmatpush1.msra.mxu0 %v1286
        %2045 = vmatprep.mubr.f32.mxu0 %v1029
        %2046 = vmatmul.mubr.f32.gmra.mrb[0].mxu0 %v1028
        %v2047 = vpop.f32.mrb[0].mxu0
        %v2048 = vadd.f32 %v1971, %v2047
        %v2049 = vpop.f32.mrb[0].mxu0
        %v2050 = vadd.f32 %v1973, %v2049
        %2051 = vmatprep.mubr.f32.mxu0 %v1033
        %2052 = vmatmul.mubr.f32.gmra.mrb[0].mxu0 %v1032
        %v2053 = vpop.f32.mrb[0].mxu0
        %v2054 = vadd.f32 %v1977, %v2053
        %v2055 = vpop.f32.mrb[0].mxu0
        %v2056 = vadd.f32 %v1979, %v2055
        %2057 = vdwg.mxu0
        %2058 = vmatprep.subr.mxu0 %v1037
        %2059 = vmatpush1.msra.mxu0 %v1036
        %2060 = vmatprep.subr.mxu0 %v1041
        %2061 = vmatpush1.msra.mxu0 %v1040
        %2062 = vmatprep.subr.mxu0 %v1045
        %2063 = vmatpush1.msra.mxu0 %v1044
        %2064 = vmatprep.subr.mxu0 %v1049
        %2065 = vmatpush1.msra.mxu0 %v1048
        %2066 = vmatprep.subr.mxu0 %v1053
        %2067 = vmatpush1.msra.mxu0 %v1052
        %2068 = vmatprep.subr.mxu0 %v1057
        %2069 = vmatpush1.msra.mxu0 %v1056
        %2070 = vmatprep.subr.mxu0 %v1061
        %2071 = vmatpush1.msra.mxu0 %v1060
        %2072 = vmatprep.subr.mxu0 %v1065
        %2073 = vmatpush1.msra.mxu0 %v1064
        %2074 = vmatprep.subr.mxu0 %v1069
        %2075 = vmatpush1.msra.mxu0 %v1068
        %2076 = vmatprep.subr.mxu0 %v1073
        %2077 = vmatpush1.msra.mxu0 %v1072
        %2078 = vmatprep.subr.mxu0 %v1077
        %2079 = vmatpush1.msra.mxu0 %v1076
        %2080 = vmatprep.subr.mxu0 %v1081
        %2081 = vmatpush1.msra.mxu0 %v1080
        %2082 = vmatprep.subr.mxu0 %v1085
        %2083 = vmatpush1.msra.mxu0 %v1084
        %2084 = vmatprep.subr.mxu0 %v1089
        %2085 = vmatpush1.msra.mxu0 %v1088
        %2086 = vmatprep.subr.mxu0 %v1093
        %2087 = vmatpush1.msra.mxu0 %v1092
        %2088 = vmatprep.subr.mxu0 %v1097
        %2089 = vmatpush1.msra.mxu0 %v1096
        %2090 = vmatprep.subr.mxu0 %v1101
        %2091 = vmatpush1.msra.mxu0 %v1100
        %2092 = vmatprep.subr.mxu0 %v1105
        %2093 = vmatpush1.msra.mxu0 %v1104
        %2094 = vmatprep.subr.mxu0 %v1109
        %2095 = vmatpush1.msra.mxu0 %v1108
        %2096 = vmatprep.subr.mxu0 %v1113
        %2097 = vmatpush1.msra.mxu0 %v1112
        %2098 = vmatprep.subr.mxu0 %v1117
        %2099 = vmatpush1.msra.mxu0 %v1116
        %2100 = vmatprep.subr.mxu0 %v1121
        %2101 = vmatpush1.msra.mxu0 %v1120
        %2102 = vmatprep.subr.mxu0 %v1125
        %2103 = vmatpush1.msra.mxu0 %v1124
        %2104 = vmatprep.subr.mxu0 %v1129
        %2105 = vmatpush1.msra.mxu0 %v1128
        %2106 = vmatprep.subr.mxu0 %v1133
        %2107 = vmatpush1.msra.mxu0 %v1132
        %2108 = vmatprep.subr.mxu0 %v1137
        %2109 = vmatpush1.msra.mxu0 %v1136
        %2110 = vmatprep.subr.mxu0 %v1141
        %2111 = vmatpush1.msra.mxu0 %v1140
        %2112 = vmatprep.subr.mxu0 %v1145
        %2113 = vmatpush1.msra.mxu0 %v1144
        %2114 = vmatprep.subr.mxu0 %v1149
        %2115 = vmatpush1.msra.mxu0 %v1148
        %2116 = vmatprep.subr.mxu0 %v1153
        %2117 = vmatpush1.msra.mxu0 %v1152
        %2118 = vmatprep.subr.mxu0 %v1157
        %2119 = vmatpush1.msra.mxu0 %v1156
        %2120 = vmatprep.subr.mxu0 %v1161
        %2121 = vmatpush1.msra.mxu0 %v1160
        %2122 = vmatprep.mubr.f32.mxu0 %v1027
        %2123 = vmatmul.mubr.f32.gmra.mrb[0].mxu0 %v1026
        %v2124 = vpop.f32.mrb[0].mxu0
        %v2125 = vadd.f32 %v1894, %v2124
        %v2126 = vpop.f32.mrb[0].mxu0
        %v2127 = vadd.f32 %v1896, %v2126
        %2128 = vmatprep.mubr.f32.mxu0 %v1031
        %2129 = vmatmul.mubr.f32.gmra.mrb[0].mxu0 %v1030
        %v2130 = vpop.f32.mrb[0].mxu0
        %v2131 = vadd.f32 %v1900, %v2130
        %v2132 = vpop.f32.mrb[0].mxu0
        %v2133 = vadd.f32 %v1902, %v2132
        %2134 = vdwg.mxu0
        %2135 = vmatprep.subr.mxu0 %v1165
        %2136 = vmatpush1.msra.mxu0 %v1164
        %2137 = vmatprep.subr.mxu0 %v1169
        %2138 = vmatpush1.msra.mxu0 %v1168
        %2139 = vmatprep.subr.mxu0 %v1173
        %2140 = vmatpush1.msra.mxu0 %v1172
        %2141 = vmatprep.subr.mxu0 %v1177
        %2142 = vmatpush1.msra.mxu0 %v1176
        %2143 = vmatprep.subr.mxu0 %v1181
        %2144 = vmatpush1.msra.mxu0 %v1180
        %2145 = vmatprep.subr.mxu0 %v1185
        %2146 = vmatpush1.msra.mxu0 %v1184
        %2147 = vmatprep.subr.mxu0 %v1189
        %2148 = vmatpush1.msra.mxu0 %v1188
        %2149 = vmatprep.subr.mxu0 %v1193
        %2150 = vmatpush1.msra.mxu0 %v1192
        %2151 = vmatprep.subr.mxu0 %v1197
        %2152 = vmatpush1.msra.mxu0 %v1196
        %2153 = vmatprep.subr.mxu0 %v1201
        %2154 = vmatpush1.msra.mxu0 %v1200
        %2155 = vmatprep.subr.mxu0 %v1205
        %2156 = vmatpush1.msra.mxu0 %v1204
        %2157 = vmatprep.subr.mxu0 %v1209
        %2158 = vmatpush1.msra.mxu0 %v1208
        %2159 = vmatprep.subr.mxu0 %v1213
        %2160 = vmatpush1.msra.mxu0 %v1212
        %2161 = vmatprep.subr.mxu0 %v1217
        %2162 = vmatpush1.msra.mxu0 %v1216
        %2163 = vmatprep.subr.mxu0 %v1221
        %2164 = vmatpush1.msra.mxu0 %v1220
        %2165 = vmatprep.subr.mxu0 %v1225
        %2166 = vmatpush1.msra.mxu0 %v1224
        %2167 = vmatprep.subr.mxu0 %v1229
        %2168 = vmatpush1.msra.mxu0 %v1228
        %2169 = vmatprep.subr.mxu0 %v1233
        %2170 = vmatpush1.msra.mxu0 %v1232
        %2171 = vmatprep.subr.mxu0 %v1237
        %2172 = vmatpush1.msra.mxu0 %v1236
        %2173 = vmatprep.subr.mxu0 %v1241
        %2174 = vmatpush1.msra.mxu0 %v1240
        %2175 = vmatprep.subr.mxu0 %v1245
        %2176 = vmatpush1.msra.mxu0 %v1244
        %2177 = vmatprep.subr.mxu0 %v1249
        %2178 = vmatpush1.msra.mxu0 %v1248
        %2179 = vmatprep.subr.mxu0 %v1253
        %2180 = vmatpush1.msra.mxu0 %v1252
        %2181 = vmatprep.subr.mxu0 %v1257
        %2182 = vmatpush1.msra.mxu0 %v1256
        %2183 = vmatprep.subr.mxu0 %v1261
        %2184 = vmatpush1.msra.mxu0 %v1260
        %2185 = vmatprep.subr.mxu0 %v1265
        %2186 = vmatpush1.msra.mxu0 %v1264
        %2187 = vmatprep.subr.mxu0 %v1269
        %2188 = vmatpush1.msra.mxu0 %v1268
        %2189 = vmatprep.subr.mxu0 %v1273
        %2190 = vmatpush1.msra.mxu0 %v1272
        %2191 = vmatprep.subr.mxu0 %v1277
        %2192 = vmatpush1.msra.mxu0 %v1276
        %2193 = vmatprep.subr.mxu0 %v1281
        %2194 = vmatpush1.msra.mxu0 %v1280
        %2195 = vmatprep.subr.mxu0 %v1285
        %2196 = vmatpush1.msra.mxu0 %v1284
        %2197 = vmatprep.subr.mxu0 %v1289
        %2198 = vmatpush1.msra.mxu0 %v1288
        %2199 = vmatprep.mubr.f32.mxu0 %v1029
        %2200 = vmatmul.mubr.f32.gmra.mrb[0].mxu0 %v1028
        %v2201 = vpop.f32.mrb[0].mxu0
        %v2202 = vadd.f32 %v2125, %v2201
        %v2203 = vpop.f32.mrb[0].mxu0
        %v2204 = vadd.f32 %v2127, %v2203
        %2205 = vmatprep.mubr.f32.mxu0 %v1033
        %2206 = vmatmul.mubr.f32.gmra.mrb[0].mxu0 %v1032
        %v2207 = vpop.f32.mrb[0].mxu0
        %v2208 = vadd.f32 %v2131, %v2207
        %v2209 = vpop.f32.mrb[0].mxu0
        %v2210 = vadd.f32 %v2133, %v2209
        %2211 = vdwg.mxu0
        %v2212 = vld [vmem:[#allocation2] sm:$0xfc]
        %v2213 = vld [vmem:[#allocation2 + $0x8] sm:$0xfc]
        %v2214 = vld [vmem:[#allocation2 + $0x10] sm:$0xfc]
        %v2215 = vld [vmem:[#allocation2 + $0x18] sm:$0xfc]
        %v2216 = vld [vmem:[#allocation2 + $0x40] sm:$0x3]
        %v2217 = vld [vmem:[#allocation2 + $0x48] sm:$0x3]
        %v2218 = vld [vmem:[#allocation2 + $0x50] sm:$0x3]
        %v2219 = vld [vmem:[#allocation2 + $0x58] sm:$0x3]
        %s2220 = scalar_lea.vmem [#allocation9], 4096
        %v2221 = vld [vmem:[%s2220] sm:$0xff]
        %v2222 = vld [vmem:[%s2220 + $0x8] sm:$0xff]
        %v2223 = vld [vmem:[%s2220 + $0x10] sm:$0xff]
        %v2224 = vld [vmem:[%s2220 + $0x18] sm:$0xff]
        %v2225 = vld [vmem:[%s2220 + $0x20] sm:$0xff]
        %v2226 = vld [vmem:[%s2220 + $0x28] sm:$0xff]
        %v2227 = vld [vmem:[%s2220 + $0x30] sm:$0xff]
        %v2228 = vld [vmem:[%s2220 + $0x38] sm:$0xff]
        %v2229 = vld [vmem:[%s2220 + $0x40] sm:$0xff]
        %v2230 = vld [vmem:[%s2220 + $0x48] sm:$0xff]
        %v2231 = vld [vmem:[%s2220 + $0x50] sm:$0xff]
        %v2232 = vld [vmem:[%s2220 + $0x58] sm:$0xff]
        %v2233 = vld [vmem:[%s2220 + $0x60] sm:$0xff]
        %v2234 = vld [vmem:[%s2220 + $0x68] sm:$0xff]
        %v2235 = vld [vmem:[%s2220 + $0x70] sm:$0xff]
        %v2236 = vld [vmem:[%s2220 + $0x78] sm:$0xff]
        %v2237 = vld [vmem:[%s2220 + $0x80] sm:$0xff]
        %v2238 = vld [vmem:[%s2220 + $0x88] sm:$0xff]
        %v2239 = vld [vmem:[%s2220 + $0x90] sm:$0xff]
        %v2240 = vld [vmem:[%s2220 + $0x98] sm:$0xff]
        %v2241 = vld [vmem:[%s2220 + $0xa0] sm:$0xff]
        %v2242 = vld [vmem:[%s2220 + $0xa8] sm:$0xff]
        %v2243 = vld [vmem:[%s2220 + $0xb0] sm:$0xff]
        %v2244 = vld [vmem:[%s2220 + $0xb8] sm:$0xff]
        %v2245 = vld [vmem:[%s2220 + $0xc0] sm:$0xff]
        %v2246 = vld [vmem:[%s2220 + $0xc8] sm:$0xff]
        %v2247 = vld [vmem:[%s2220 + $0xd0] sm:$0xff]
        %v2248 = vld [vmem:[%s2220 + $0xd8] sm:$0xff]
        %v2249 = vld [vmem:[%s2220 + $0xe0] sm:$0xff]
        %v2250 = vld [vmem:[%s2220 + $0xe8] sm:$0xff]
        %v2251 = vld [vmem:[%s2220 + $0xf0] sm:$0xff]
        %v2252 = vld [vmem:[%s2220 + $0xf8] sm:$0xff]
        %v2253 = vld [vmem:[%s2220 + $0x100] sm:$0xff]
        %v2254 = vld [vmem:[%s2220 + $0x108] sm:$0xff]
        %v2255 = vld [vmem:[%s2220 + $0x110] sm:$0xff]
        %v2256 = vld [vmem:[%s2220 + $0x118] sm:$0xff]
        %v2257 = vld [vmem:[%s2220 + $0x120] sm:$0xff]
        %v2258 = vld [vmem:[%s2220 + $0x128] sm:$0xff]
        %v2259 = vld [vmem:[%s2220 + $0x130] sm:$0xff]
        %v2260 = vld [vmem:[%s2220 + $0x138] sm:$0xff]
        %v2261 = vld [vmem:[%s2220 + $0x140] sm:$0xff]
        %v2262 = vld [vmem:[%s2220 + $0x148] sm:$0xff]
        %v2263 = vld [vmem:[%s2220 + $0x150] sm:$0xff]
        %v2264 = vld [vmem:[%s2220 + $0x158] sm:$0xff]
        %v2265 = vld [vmem:[%s2220 + $0x160] sm:$0xff]
        %v2266 = vld [vmem:[%s2220 + $0x168] sm:$0xff]
        %v2267 = vld [vmem:[%s2220 + $0x170] sm:$0xff]
        %v2268 = vld [vmem:[%s2220 + $0x178] sm:$0xff]
        %v2269 = vld [vmem:[%s2220 + $0x180] sm:$0xff]
        %v2270 = vld [vmem:[%s2220 + $0x188] sm:$0xff]
        %v2271 = vld [vmem:[%s2220 + $0x190] sm:$0xff]
        %v2272 = vld [vmem:[%s2220 + $0x198] sm:$0xff]
        %v2273 = vld [vmem:[%s2220 + $0x1a0] sm:$0xff]
        %v2274 = vld [vmem:[%s2220 + $0x1a8] sm:$0xff]
        %v2275 = vld [vmem:[%s2220 + $0x1b0] sm:$0xff]
        %v2276 = vld [vmem:[%s2220 + $0x1b8] sm:$0xff]
        %v2277 = vld [vmem:[%s2220 + $0x1c0] sm:$0xff]
        %v2278 = vld [vmem:[%s2220 + $0x1c8] sm:$0xff]
        %v2279 = vld [vmem:[%s2220 + $0x1d0] sm:$0xff]
        %v2280 = vld [vmem:[%s2220 + $0x1d8] sm:$0xff]
        %v2281 = vld [vmem:[%s2220 + $0x1e0] sm:$0xff]
        %v2282 = vld [vmem:[%s2220 + $0x1e8] sm:$0xff]
        %v2283 = vld [vmem:[%s2220 + $0x1f0] sm:$0xff]
        %v2284 = vld [vmem:[%s2220 + $0x1f8] sm:$0xff]
        %v2285 = vld [vmem:[%s2220 + $0x200] sm:$0xff]
        %v2286 = vld [vmem:[%s2220 + $0x208] sm:$0xff]
        %v2287 = vld [vmem:[%s2220 + $0x210] sm:$0xff]
        %v2288 = vld [vmem:[%s2220 + $0x218] sm:$0xff]
        %v2289 = vld [vmem:[%s2220 + $0x220] sm:$0xff]
        %v2290 = vld [vmem:[%s2220 + $0x228] sm:$0xff]
        %v2291 = vld [vmem:[%s2220 + $0x230] sm:$0xff]
        %v2292 = vld [vmem:[%s2220 + $0x238] sm:$0xff]
        %v2293 = vld [vmem:[%s2220 + $0x240] sm:$0xff]
        %v2294 = vld [vmem:[%s2220 + $0x248] sm:$0xff]
        %v2295 = vld [vmem:[%s2220 + $0x250] sm:$0xff]
        %v2296 = vld [vmem:[%s2220 + $0x258] sm:$0xff]
        %v2297 = vld [vmem:[%s2220 + $0x260] sm:$0xff]
        %v2298 = vld [vmem:[%s2220 + $0x268] sm:$0xff]
        %v2299 = vld [vmem:[%s2220 + $0x270] sm:$0xff]
        %v2300 = vld [vmem:[%s2220 + $0x278] sm:$0xff]
        %v2301 = vld [vmem:[%s2220 + $0x280] sm:$0xff]
        %v2302 = vld [vmem:[%s2220 + $0x288] sm:$0xff]
        %v2303 = vld [vmem:[%s2220 + $0x290] sm:$0xff]
        %v2304 = vld [vmem:[%s2220 + $0x298] sm:$0xff]
        %v2305 = vld [vmem:[%s2220 + $0x2a0] sm:$0xff]
        %v2306 = vld [vmem:[%s2220 + $0x2a8] sm:$0xff]
        %v2307 = vld [vmem:[%s2220 + $0x2b0] sm:$0xff]
        %v2308 = vld [vmem:[%s2220 + $0x2b8] sm:$0xff]
        %v2309 = vld [vmem:[%s2220 + $0x2c0] sm:$0xff]
        %v2310 = vld [vmem:[%s2220 + $0x2c8] sm:$0xff]
        %v2311 = vld [vmem:[%s2220 + $0x2d0] sm:$0xff]
        %v2312 = vld [vmem:[%s2220 + $0x2d8] sm:$0xff]
        %v2313 = vld [vmem:[%s2220 + $0x2e0] sm:$0xff]
        %v2314 = vld [vmem:[%s2220 + $0x2e8] sm:$0xff]
        %v2315 = vld [vmem:[%s2220 + $0x2f0] sm:$0xff]
        %v2316 = vld [vmem:[%s2220 + $0x2f8] sm:$0xff]
        %v2317 = vld [vmem:[%s2220 + $0x300] sm:$0xff]
        %v2318 = vld [vmem:[%s2220 + $0x308] sm:$0xff]
        %v2319 = vld [vmem:[%s2220 + $0x310] sm:$0xff]
        %v2320 = vld [vmem:[%s2220 + $0x318] sm:$0xff]
        %v2321 = vld [vmem:[%s2220 + $0x320] sm:$0xff]
        %v2322 = vld [vmem:[%s2220 + $0x328] sm:$0xff]
        %v2323 = vld [vmem:[%s2220 + $0x330] sm:$0xff]
        %v2324 = vld [vmem:[%s2220 + $0x338] sm:$0xff]
        %v2325 = vld [vmem:[%s2220 + $0x340] sm:$0xff]
        %v2326 = vld [vmem:[%s2220 + $0x348] sm:$0xff]
        %v2327 = vld [vmem:[%s2220 + $0x350] sm:$0xff]
        %v2328 = vld [vmem:[%s2220 + $0x358] sm:$0xff]
        %v2329 = vld [vmem:[%s2220 + $0x360] sm:$0xff]
        %v2330 = vld [vmem:[%s2220 + $0x368] sm:$0xff]
        %v2331 = vld [vmem:[%s2220 + $0x370] sm:$0xff]
        %v2332 = vld [vmem:[%s2220 + $0x378] sm:$0xff]
        %v2333 = vld [vmem:[%s2220 + $0x380] sm:$0xff]
        %v2334 = vld [vmem:[%s2220 + $0x388] sm:$0xff]
        %v2335 = vld [vmem:[%s2220 + $0x390] sm:$0xff]
        %v2336 = vld [vmem:[%s2220 + $0x398] sm:$0xff]
        %v2337 = vld [vmem:[%s2220 + $0x3a0] sm:$0xff]
        %v2338 = vld [vmem:[%s2220 + $0x3a8] sm:$0xff]
        %v2339 = vld [vmem:[%s2220 + $0x3b0] sm:$0xff]
        %v2340 = vld [vmem:[%s2220 + $0x3b8] sm:$0xff]
        %v2341 = vld [vmem:[%s2220 + $0x3c0] sm:$0xff]
        %v2342 = vld [vmem:[%s2220 + $0x3c8] sm:$0xff]
        %v2343 = vld [vmem:[%s2220 + $0x3d0] sm:$0xff]
        %v2344 = vld [vmem:[%s2220 + $0x3d8] sm:$0xff]
        %v2345 = vld [vmem:[%s2220 + $0x3e0] sm:$0xff]
        %v2346 = vld [vmem:[%s2220 + $0x3e8] sm:$0xff]
        %v2347 = vld [vmem:[%s2220 + $0x3f0] sm:$0xff]
        %v2348 = vld [vmem:[%s2220 + $0x3f8] sm:$0xff]
        %v2349 = vld [vmem:[%s2220 + $0x400] sm:$0xff]
        %v2350 = vld [vmem:[%s2220 + $0x408] sm:$0xff]
        %v2351 = vld [vmem:[%s2220 + $0x410] sm:$0xff]
        %v2352 = vld [vmem:[%s2220 + $0x418] sm:$0xff]
        %v2353 = vld [vmem:[%s2220 + $0x420] sm:$0xff]
        %v2354 = vld [vmem:[%s2220 + $0x428] sm:$0xff]
        %v2355 = vld [vmem:[%s2220 + $0x430] sm:$0xff]
        %v2356 = vld [vmem:[%s2220 + $0x438] sm:$0xff]
        %v2357 = vld [vmem:[%s2220 + $0x440] sm:$0xff]
        %v2358 = vld [vmem:[%s2220 + $0x448] sm:$0xff]
        %v2359 = vld [vmem:[%s2220 + $0x450] sm:$0xff]
        %v2360 = vld [vmem:[%s2220 + $0x458] sm:$0xff]
        %v2361 = vld [vmem:[%s2220 + $0x460] sm:$0xff]
        %v2362 = vld [vmem:[%s2220 + $0x468] sm:$0xff]
        %v2363 = vld [vmem:[%s2220 + $0x470] sm:$0xff]
        %v2364 = vld [vmem:[%s2220 + $0x478] sm:$0xff]
        %v2365 = vld [vmem:[%s2220 + $0x480] sm:$0xff]
        %v2366 = vld [vmem:[%s2220 + $0x488] sm:$0xff]
        %v2367 = vld [vmem:[%s2220 + $0x490] sm:$0xff]
        %v2368 = vld [vmem:[%s2220 + $0x498] sm:$0xff]
        %v2369 = vld [vmem:[%s2220 + $0x4a0] sm:$0xff]
        %v2370 = vld [vmem:[%s2220 + $0x4a8] sm:$0xff]
        %v2371 = vld [vmem:[%s2220 + $0x4b0] sm:$0xff]
        %v2372 = vld [vmem:[%s2220 + $0x4b8] sm:$0xff]
        %v2373 = vld [vmem:[%s2220 + $0x4c0] sm:$0xff]
        %v2374 = vld [vmem:[%s2220 + $0x4c8] sm:$0xff]
        %v2375 = vld [vmem:[%s2220 + $0x4d0] sm:$0xff]
        %v2376 = vld [vmem:[%s2220 + $0x4d8] sm:$0xff]
        %v2377 = vld [vmem:[%s2220 + $0x4e0] sm:$0xff]
        %v2378 = vld [vmem:[%s2220 + $0x4e8] sm:$0xff]
        %v2379 = vld [vmem:[%s2220 + $0x4f0] sm:$0xff]
        %v2380 = vld [vmem:[%s2220 + $0x4f8] sm:$0xff]
        %v2381 = vld [vmem:[%s2220 + $0x500] sm:$0xff]
        %v2382 = vld [vmem:[%s2220 + $0x508] sm:$0xff]
        %v2383 = vld [vmem:[%s2220 + $0x510] sm:$0xff]
        %v2384 = vld [vmem:[%s2220 + $0x518] sm:$0xff]
        %v2385 = vld [vmem:[%s2220 + $0x520] sm:$0xff]
        %v2386 = vld [vmem:[%s2220 + $0x528] sm:$0xff]
        %v2387 = vld [vmem:[%s2220 + $0x530] sm:$0xff]
        %v2388 = vld [vmem:[%s2220 + $0x538] sm:$0xff]
        %v2389 = vld [vmem:[%s2220 + $0x540] sm:$0xff]
        %v2390 = vld [vmem:[%s2220 + $0x548] sm:$0xff]
        %v2391 = vld [vmem:[%s2220 + $0x550] sm:$0xff]
        %v2392 = vld [vmem:[%s2220 + $0x558] sm:$0xff]
        %v2393 = vld [vmem:[%s2220 + $0x560] sm:$0xff]
        %v2394 = vld [vmem:[%s2220 + $0x568] sm:$0xff]
        %v2395 = vld [vmem:[%s2220 + $0x570] sm:$0xff]
        %v2396 = vld [vmem:[%s2220 + $0x578] sm:$0xff]
        %v2397 = vld [vmem:[%s2220 + $0x580] sm:$0xff]
        %v2398 = vld [vmem:[%s2220 + $0x588] sm:$0xff]
        %v2399 = vld [vmem:[%s2220 + $0x590] sm:$0xff]
        %v2400 = vld [vmem:[%s2220 + $0x598] sm:$0xff]
        %v2401 = vld [vmem:[%s2220 + $0x5a0] sm:$0xff]
        %v2402 = vld [vmem:[%s2220 + $0x5a8] sm:$0xff]
        %v2403 = vld [vmem:[%s2220 + $0x5b0] sm:$0xff]
        %v2404 = vld [vmem:[%s2220 + $0x5b8] sm:$0xff]
        %v2405 = vld [vmem:[%s2220 + $0x5c0] sm:$0xff]
        %v2406 = vld [vmem:[%s2220 + $0x5c8] sm:$0xff]
        %v2407 = vld [vmem:[%s2220 + $0x5d0] sm:$0xff]
        %v2408 = vld [vmem:[%s2220 + $0x5d8] sm:$0xff]
        %v2409 = vld [vmem:[%s2220 + $0x5e0] sm:$0xff]
        %v2410 = vld [vmem:[%s2220 + $0x5e8] sm:$0xff]
        %v2411 = vld [vmem:[%s2220 + $0x5f0] sm:$0xff]
        %v2412 = vld [vmem:[%s2220 + $0x5f8] sm:$0xff]
        %v2413 = vld [vmem:[%s2220 + $0x600] sm:$0xff]
        %v2414 = vld [vmem:[%s2220 + $0x608] sm:$0xff]
        %v2415 = vld [vmem:[%s2220 + $0x610] sm:$0xff]
        %v2416 = vld [vmem:[%s2220 + $0x618] sm:$0xff]
        %v2417 = vld [vmem:[%s2220 + $0x620] sm:$0xff]
        %v2418 = vld [vmem:[%s2220 + $0x628] sm:$0xff]
        %v2419 = vld [vmem:[%s2220 + $0x630] sm:$0xff]
        %v2420 = vld [vmem:[%s2220 + $0x638] sm:$0xff]
        %v2421 = vld [vmem:[%s2220 + $0x640] sm:$0xff]
        %v2422 = vld [vmem:[%s2220 + $0x648] sm:$0xff]
        %v2423 = vld [vmem:[%s2220 + $0x650] sm:$0xff]
        %v2424 = vld [vmem:[%s2220 + $0x658] sm:$0xff]
        %v2425 = vld [vmem:[%s2220 + $0x660] sm:$0xff]
        %v2426 = vld [vmem:[%s2220 + $0x668] sm:$0xff]
        %v2427 = vld [vmem:[%s2220 + $0x670] sm:$0xff]
        %v2428 = vld [vmem:[%s2220 + $0x678] sm:$0xff]
        %v2429 = vld [vmem:[%s2220 + $0x680] sm:$0xff]
        %v2430 = vld [vmem:[%s2220 + $0x688] sm:$0xff]
        %v2431 = vld [vmem:[%s2220 + $0x690] sm:$0xff]
        %v2432 = vld [vmem:[%s2220 + $0x698] sm:$0xff]
        %v2433 = vld [vmem:[%s2220 + $0x6a0] sm:$0xff]
        %v2434 = vld [vmem:[%s2220 + $0x6a8] sm:$0xff]
        %v2435 = vld [vmem:[%s2220 + $0x6b0] sm:$0xff]
        %v2436 = vld [vmem:[%s2220 + $0x6b8] sm:$0xff]
        %v2437 = vld [vmem:[%s2220 + $0x6c0] sm:$0xff]
        %v2438 = vld [vmem:[%s2220 + $0x6c8] sm:$0xff]
        %v2439 = vld [vmem:[%s2220 + $0x6d0] sm:$0xff]
        %v2440 = vld [vmem:[%s2220 + $0x6d8] sm:$0xff]
        %v2441 = vld [vmem:[%s2220 + $0x6e0] sm:$0xff]
        %v2442 = vld [vmem:[%s2220 + $0x6e8] sm:$0xff]
        %v2443 = vld [vmem:[%s2220 + $0x6f0] sm:$0xff]
        %v2444 = vld [vmem:[%s2220 + $0x6f8] sm:$0xff]
        %v2445 = vld [vmem:[%s2220 + $0x700] sm:$0xff]
        %v2446 = vld [vmem:[%s2220 + $0x708] sm:$0xff]
        %v2447 = vld [vmem:[%s2220 + $0x710] sm:$0xff]
        %v2448 = vld [vmem:[%s2220 + $0x718] sm:$0xff]
        %v2449 = vld [vmem:[%s2220 + $0x720] sm:$0xff]
        %v2450 = vld [vmem:[%s2220 + $0x728] sm:$0xff]
        %v2451 = vld [vmem:[%s2220 + $0x730] sm:$0xff]
        %v2452 = vld [vmem:[%s2220 + $0x738] sm:$0xff]
        %v2453 = vld [vmem:[%s2220 + $0x740] sm:$0xff]
        %v2454 = vld [vmem:[%s2220 + $0x748] sm:$0xff]
        %v2455 = vld [vmem:[%s2220 + $0x750] sm:$0xff]
        %v2456 = vld [vmem:[%s2220 + $0x758] sm:$0xff]
        %v2457 = vld [vmem:[%s2220 + $0x760] sm:$0xff]
        %v2458 = vld [vmem:[%s2220 + $0x768] sm:$0xff]
        %v2459 = vld [vmem:[%s2220 + $0x770] sm:$0xff]
        %v2460 = vld [vmem:[%s2220 + $0x778] sm:$0xff]
        %v2461 = vld [vmem:[%s2220 + $0x780] sm:$0xff]
        %v2462 = vld [vmem:[%s2220 + $0x788] sm:$0xff]
        %v2463 = vld [vmem:[%s2220 + $0x790] sm:$0xff]
        %v2464 = vld [vmem:[%s2220 + $0x798] sm:$0xff]
        %v2465 = vld [vmem:[%s2220 + $0x7a0] sm:$0xff]
        %v2466 = vld [vmem:[%s2220 + $0x7a8] sm:$0xff]
        %v2467 = vld [vmem:[%s2220 + $0x7b0] sm:$0xff]
        %v2468 = vld [vmem:[%s2220 + $0x7b8] sm:$0xff]
        %v2469 = vld [vmem:[%s2220 + $0x7c0] sm:$0xff]
        %v2470 = vld [vmem:[%s2220 + $0x7c8] sm:$0xff]
        %v2471 = vld [vmem:[%s2220 + $0x7d0] sm:$0xff]
        %v2472 = vld [vmem:[%s2220 + $0x7d8] sm:$0xff]
        %v2473 = vld [vmem:[%s2220 + $0x7e0] sm:$0xff]
        %v2474 = vld [vmem:[%s2220 + $0x7e8] sm:$0xff]
        %v2475 = vld [vmem:[%s2220 + $0x7f0] sm:$0xff]
        %v2476 = vld [vmem:[%s2220 + $0x7f8] sm:$0xff]
        %vm2485 = vcmask 1045504
        %v2486 = vrot.slane %v2212, 2
        %v2487 = vrot.slane %v1030, 2
        %v2488 = vsel %vm2485, %v2486, %v2487
        %v2489 = vrot.slane %v2213, 2
        %v2490 = vrot.slane %v1031, 2
        %v2491 = vsel %vm2485, %v2489, %v2490
        %v2492 = vrot.slane %v2214, 2
        %v2493 = vrot.slane %v1032, 2
        %v2494 = vsel %vm2485, %v2492, %v2493
        %v2495 = vrot.slane %v2215, 2
        %v2496 = vrot.slane %v1033, 2
        %v2497 = vsel %vm2485, %v2495, %v2496
        %v2498 = vrot.slane %v2216, 2
        %v2499 = vsel %vm2485, %v2487, %v2498
        %v2500 = vrot.slane %v2217, 2
        %v2501 = vsel %vm2485, %v2490, %v2500
        %v2502 = vrot.slane %v2218, 2
        %v2503 = vsel %vm2485, %v2493, %v2502
        %v2504 = vrot.slane %v2219, 2
        %v2505 = vsel %vm2485, %v2496, %v2504
        %2514 = vmatprep.subr.mxu0 %v2222
        %2515 = vmatpush1.msra.mxu0 %v2221
        %2516 = vmatprep.subr.mxu0 %v2226
        %2517 = vmatpush1.msra.mxu0 %v2225
        %2518 = vmatprep.subr.mxu0 %v2230
        %2519 = vmatpush1.msra.mxu0 %v2229
        %2520 = vmatprep.subr.mxu0 %v2234
        %2521 = vmatpush1.msra.mxu0 %v2233
        %2522 = vmatprep.subr.mxu0 %v2238
        %2523 = vmatpush1.msra.mxu0 %v2237
        %2524 = vmatprep.subr.mxu0 %v2242
        %2525 = vmatpush1.msra.mxu0 %v2241
        %2526 = vmatprep.subr.mxu0 %v2246
        %2527 = vmatpush1.msra.mxu0 %v2245
        %2528 = vmatprep.subr.mxu0 %v2250
        %2529 = vmatpush1.msra.mxu0 %v2249
        %2530 = vmatprep.subr.mxu0 %v2254
        %2531 = vmatpush1.msra.mxu0 %v2253
        %2532 = vmatprep.subr.mxu0 %v2258
        %2533 = vmatpush1.msra.mxu0 %v2257
        %2534 = vmatprep.subr.mxu0 %v2262
        %2535 = vmatpush1.msra.mxu0 %v2261
        %2536 = vmatprep.subr.mxu0 %v2266
        %2537 = vmatpush1.msra.mxu0 %v2265
        %2538 = vmatprep.subr.mxu0 %v2270
        %2539 = vmatpush1.msra.mxu0 %v2269
        %2540 = vmatprep.subr.mxu0 %v2274
        %2541 = vmatpush1.msra.mxu0 %v2273
        %2542 = vmatprep.subr.mxu0 %v2278
        %2543 = vmatpush1.msra.mxu0 %v2277
        %2544 = vmatprep.subr.mxu0 %v2282
        %2545 = vmatpush1.msra.mxu0 %v2281
        %2546 = vmatprep.subr.mxu0 %v2286
        %2547 = vmatpush1.msra.mxu0 %v2285
        %2548 = vmatprep.subr.mxu0 %v2290
        %2549 = vmatpush1.msra.mxu0 %v2289
        %2550 = vmatprep.subr.mxu0 %v2294
        %2551 = vmatpush1.msra.mxu0 %v2293
        %2552 = vmatprep.subr.mxu0 %v2298
        %2553 = vmatpush1.msra.mxu0 %v2297
        %2554 = vmatprep.subr.mxu0 %v2302
        %2555 = vmatpush1.msra.mxu0 %v2301
        %2556 = vmatprep.subr.mxu0 %v2306
        %2557 = vmatpush1.msra.mxu0 %v2305
        %2558 = vmatprep.subr.mxu0 %v2310
        %2559 = vmatpush1.msra.mxu0 %v2309
        %2560 = vmatprep.subr.mxu0 %v2314
        %2561 = vmatpush1.msra.mxu0 %v2313
        %2562 = vmatprep.subr.mxu0 %v2318
        %2563 = vmatpush1.msra.mxu0 %v2317
        %2564 = vmatprep.subr.mxu0 %v2322
        %2565 = vmatpush1.msra.mxu0 %v2321
        %2566 = vmatprep.subr.mxu0 %v2326
        %2567 = vmatpush1.msra.mxu0 %v2325
        %2568 = vmatprep.subr.mxu0 %v2330
        %2569 = vmatpush1.msra.mxu0 %v2329
        %2570 = vmatprep.subr.mxu0 %v2334
        %2571 = vmatpush1.msra.mxu0 %v2333
        %2572 = vmatprep.subr.mxu0 %v2338
        %2573 = vmatpush1.msra.mxu0 %v2337
        %2574 = vmatprep.subr.mxu0 %v2342
        %2575 = vmatpush1.msra.mxu0 %v2341
        %2576 = vmatprep.subr.mxu0 %v2346
        %2577 = vmatpush1.msra.mxu0 %v2345
        %2578 = vmatprep.mubr.f32.mxu0 %v2491
        %2579 = vmatmul.mubr.f32.gmra.mrb[0].mxu0 %v2488
        %v2580 = vpop.f32.mrb[0].mxu0
        %v2581 = vadd.f32 0.0, %v2580
        %v2582 = vpop.f32.mrb[0].mxu0
        %v2583 = vadd.f32 0.0, %v2582
        %2584 = vmatprep.mubr.f32.mxu0 %v2501
        %2585 = vmatmul.mubr.f32.gmra.mrb[0].mxu0 %v2499
        %v2586 = vpop.f32.mrb[0].mxu0
        %v2587 = vadd.f32 0.0, %v2586
        %v2588 = vpop.f32.mrb[0].mxu0
        %v2589 = vadd.f32 0.0, %v2588
        %2590 = vdwg.mxu0
        %2591 = vmatprep.subr.mxu0 %v2350
        %2592 = vmatpush1.msra.mxu0 %v2349
        %2593 = vmatprep.subr.mxu0 %v2354
        %2594 = vmatpush1.msra.mxu0 %v2353
        %2595 = vmatprep.subr.mxu0 %v2358
        %2596 = vmatpush1.msra.mxu0 %v2357
        %2597 = vmatprep.subr.mxu0 %v2362
        %2598 = vmatpush1.msra.mxu0 %v2361
        %2599 = vmatprep.subr.mxu0 %v2366
        %2600 = vmatpush1.msra.mxu0 %v2365
        %2601 = vmatprep.subr.mxu0 %v2370
        %2602 = vmatpush1.msra.mxu0 %v2369
        %2603 = vmatprep.subr.mxu0 %v2374
        %2604 = vmatpush1.msra.mxu0 %v2373
        %2605 = vmatprep.subr.mxu0 %v2378
        %2606 = vmatpush1.msra.mxu0 %v2377
        %2607 = vmatprep.subr.mxu0 %v2382
        %2608 = vmatpush1.msra.mxu0 %v2381
        %2609 = vmatprep.subr.mxu0 %v2386
        %2610 = vmatpush1.msra.mxu0 %v2385
        %2611 = vmatprep.subr.mxu0 %v2390
        %2612 = vmatpush1.msra.mxu0 %v2389
        %2613 = vmatprep.subr.mxu0 %v2394
        %2614 = vmatpush1.msra.mxu0 %v2393
        %2615 = vmatprep.subr.mxu0 %v2398
        %2616 = vmatpush1.msra.mxu0 %v2397
        %2617 = vmatprep.subr.mxu0 %v2402
        %2618 = vmatpush1.msra.mxu0 %v2401
        %2619 = vmatprep.subr.mxu0 %v2406
        %2620 = vmatpush1.msra.mxu0 %v2405
        %2621 = vmatprep.subr.mxu0 %v2410
        %2622 = vmatpush1.msra.mxu0 %v2409
        %2623 = vmatprep.subr.mxu0 %v2414
        %2624 = vmatpush1.msra.mxu0 %v2413
        %2625 = vmatprep.subr.mxu0 %v2418
        %2626 = vmatpush1.msra.mxu0 %v2417
        %2627 = vmatprep.subr.mxu0 %v2422
        %2628 = vmatpush1.msra.mxu0 %v2421
        %2629 = vmatprep.subr.mxu0 %v2426
        %2630 = vmatpush1.msra.mxu0 %v2425
        %2631 = vmatprep.subr.mxu0 %v2430
        %2632 = vmatpush1.msra.mxu0 %v2429
        %2633 = vmatprep.subr.mxu0 %v2434
        %2634 = vmatpush1.msra.mxu0 %v2433
        %2635 = vmatprep.subr.mxu0 %v2438
        %2636 = vmatpush1.msra.mxu0 %v2437
        %2637 = vmatprep.subr.mxu0 %v2442
        %2638 = vmatpush1.msra.mxu0 %v2441
        %2639 = vmatprep.subr.mxu0 %v2446
        %2640 = vmatpush1.msra.mxu0 %v2445
        %2641 = vmatprep.subr.mxu0 %v2450
        %2642 = vmatpush1.msra.mxu0 %v2449
        %2643 = vmatprep.subr.mxu0 %v2454
        %2644 = vmatpush1.msra.mxu0 %v2453
        %2645 = vmatprep.subr.mxu0 %v2458
        %2646 = vmatpush1.msra.mxu0 %v2457
        %2647 = vmatprep.subr.mxu0 %v2462
        %2648 = vmatpush1.msra.mxu0 %v2461
        %2649 = vmatprep.subr.mxu0 %v2466
        %2650 = vmatpush1.msra.mxu0 %v2465
        %2651 = vmatprep.subr.mxu0 %v2470
        %2652 = vmatpush1.msra.mxu0 %v2469
        %2653 = vmatprep.subr.mxu0 %v2474
        %2654 = vmatpush1.msra.mxu0 %v2473
        %2655 = vmatprep.mubr.f32.mxu0 %v2497
        %2656 = vmatmul.mubr.f32.gmra.mrb[0].mxu0 %v2494
        %v2657 = vpop.f32.mrb[0].mxu0
        %v2658 = vadd.f32 %v2581, %v2657
        %v2659 = vpop.f32.mrb[0].mxu0
        %v2660 = vadd.f32 %v2583, %v2659
        %2661 = vmatprep.mubr.f32.mxu0 %v2505
        %2662 = vmatmul.mubr.f32.gmra.mrb[0].mxu0 %v2503
        %v2663 = vpop.f32.mrb[0].mxu0
        %v2664 = vadd.f32 %v2587, %v2663
        %v2665 = vpop.f32.mrb[0].mxu0
        %v2666 = vadd.f32 %v2589, %v2665
        %2667 = vdwg.mxu0
        %2668 = vmatprep.subr.mxu0 %v2224
        %2669 = vmatpush1.msra.mxu0 %v2223
        %2670 = vmatprep.subr.mxu0 %v2228
        %2671 = vmatpush1.msra.mxu0 %v2227
        %2672 = vmatprep.subr.mxu0 %v2232
        %2673 = vmatpush1.msra.mxu0 %v2231
        %2674 = vmatprep.subr.mxu0 %v2236
        %2675 = vmatpush1.msra.mxu0 %v2235
        %2676 = vmatprep.subr.mxu0 %v2240
        %2677 = vmatpush1.msra.mxu0 %v2239
        %2678 = vmatprep.subr.mxu0 %v2244
        %2679 = vmatpush1.msra.mxu0 %v2243
        %2680 = vmatprep.subr.mxu0 %v2248
        %2681 = vmatpush1.msra.mxu0 %v2247
        %2682 = vmatprep.subr.mxu0 %v2252
        %2683 = vmatpush1.msra.mxu0 %v2251
        %2684 = vmatprep.subr.mxu0 %v2256
        %2685 = vmatpush1.msra.mxu0 %v2255
        %2686 = vmatprep.subr.mxu0 %v2260
        %2687 = vmatpush1.msra.mxu0 %v2259
        %2688 = vmatprep.subr.mxu0 %v2264
        %2689 = vmatpush1.msra.mxu0 %v2263
        %2690 = vmatprep.subr.mxu0 %v2268
        %2691 = vmatpush1.msra.mxu0 %v2267
        %2692 = vmatprep.subr.mxu0 %v2272
        %2693 = vmatpush1.msra.mxu0 %v2271
        %2694 = vmatprep.subr.mxu0 %v2276
        %2695 = vmatpush1.msra.mxu0 %v2275
        %2696 = vmatprep.subr.mxu0 %v2280
        %2697 = vmatpush1.msra.mxu0 %v2279
        %2698 = vmatprep.subr.mxu0 %v2284
        %2699 = vmatpush1.msra.mxu0 %v2283
        %2700 = vmatprep.subr.mxu0 %v2288
        %2701 = vmatpush1.msra.mxu0 %v2287
        %2702 = vmatprep.subr.mxu0 %v2292
        %2703 = vmatpush1.msra.mxu0 %v2291
        %2704 = vmatprep.subr.mxu0 %v2296
        %2705 = vmatpush1.msra.mxu0 %v2295
        %2706 = vmatprep.subr.mxu0 %v2300
        %2707 = vmatpush1.msra.mxu0 %v2299
        %2708 = vmatprep.subr.mxu0 %v2304
        %2709 = vmatpush1.msra.mxu0 %v2303
        %2710 = vmatprep.subr.mxu0 %v2308
        %2711 = vmatpush1.msra.mxu0 %v2307
        %2712 = vmatprep.subr.mxu0 %v2312
        %2713 = vmatpush1.msra.mxu0 %v2311
        %2714 = vmatprep.subr.mxu0 %v2316
        %2715 = vmatpush1.msra.mxu0 %v2315
        %2716 = vmatprep.subr.mxu0 %v2320
        %2717 = vmatpush1.msra.mxu0 %v2319
        %2718 = vmatprep.subr.mxu0 %v2324
        %2719 = vmatpush1.msra.mxu0 %v2323
        %2720 = vmatprep.subr.mxu0 %v2328
        %2721 = vmatpush1.msra.mxu0 %v2327
        %2722 = vmatprep.subr.mxu0 %v2332
        %2723 = vmatpush1.msra.mxu0 %v2331
        %2724 = vmatprep.subr.mxu0 %v2336
        %2725 = vmatpush1.msra.mxu0 %v2335
        %2726 = vmatprep.subr.mxu0 %v2340
        %2727 = vmatpush1.msra.mxu0 %v2339
        %2728 = vmatprep.subr.mxu0 %v2344
        %2729 = vmatpush1.msra.mxu0 %v2343
        %2730 = vmatprep.subr.mxu0 %v2348
        %2731 = vmatpush1.msra.mxu0 %v2347
        %2732 = vmatprep.mubr.f32.mxu0 %v2491
        %2733 = vmatmul.mubr.f32.gmra.mrb[0].mxu0 %v2488
        %v2734 = vpop.f32.mrb[0].mxu0
        %v2735 = vadd.f32 0.0, %v2734
        %v2736 = vpop.f32.mrb[0].mxu0
        %v2737 = vadd.f32 0.0, %v2736
        %2738 = vmatprep.mubr.f32.mxu0 %v2501
        %2739 = vmatmul.mubr.f32.gmra.mrb[0].mxu0 %v2499
        %v2740 = vpop.f32.mrb[0].mxu0
        %v2741 = vadd.f32 0.0, %v2740
        %v2742 = vpop.f32.mrb[0].mxu0
        %v2743 = vadd.f32 0.0, %v2742
        %2744 = vdwg.mxu0
        %2745 = vmatprep.subr.mxu0 %v2352
        %2746 = vmatpush1.msra.mxu0 %v2351
        %2747 = vmatprep.subr.mxu0 %v2356
        %2748 = vmatpush1.msra.mxu0 %v2355
        %2749 = vmatprep.subr.mxu0 %v2360
        %2750 = vmatpush1.msra.mxu0 %v2359
        %2751 = vmatprep.subr.mxu0 %v2364
        %2752 = vmatpush1.msra.mxu0 %v2363
        %2753 = vmatprep.subr.mxu0 %v2368
        %2754 = vmatpush1.msra.mxu0 %v2367
        %2755 = vmatprep.subr.mxu0 %v2372
        %2756 = vmatpush1.msra.mxu0 %v2371
        %2757 = vmatprep.subr.mxu0 %v2376
        %2758 = vmatpush1.msra.mxu0 %v2375
        %2759 = vmatprep.subr.mxu0 %v2380
        %2760 = vmatpush1.msra.mxu0 %v2379
        %2761 = vmatprep.subr.mxu0 %v2384
        %2762 = vmatpush1.msra.mxu0 %v2383
        %2763 = vmatprep.subr.mxu0 %v2388
        %2764 = vmatpush1.msra.mxu0 %v2387
        %2765 = vmatprep.subr.mxu0 %v2392
        %2766 = vmatpush1.msra.mxu0 %v2391
        %2767 = vmatprep.subr.mxu0 %v2396
        %2768 = vmatpush1.msra.mxu0 %v2395
        %2769 = vmatprep.subr.mxu0 %v2400
        %2770 = vmatpush1.msra.mxu0 %v2399
        %2771 = vmatprep.subr.mxu0 %v2404
        %2772 = vmatpush1.msra.mxu0 %v2403
        %2773 = vmatprep.subr.mxu0 %v2408
        %2774 = vmatpush1.msra.mxu0 %v2407
        %2775 = vmatprep.subr.mxu0 %v2412
        %2776 = vmatpush1.msra.mxu0 %v2411
        %2777 = vmatprep.subr.mxu0 %v2416
        %2778 = vmatpush1.msra.mxu0 %v2415
        %2779 = vmatprep.subr.mxu0 %v2420
        %2780 = vmatpush1.msra.mxu0 %v2419
        %2781 = vmatprep.subr.mxu0 %v2424
        %2782 = vmatpush1.msra.mxu0 %v2423
        %2783 = vmatprep.subr.mxu0 %v2428
        %2784 = vmatpush1.msra.mxu0 %v2427
        %2785 = vmatprep.subr.mxu0 %v2432
        %2786 = vmatpush1.msra.mxu0 %v2431
        %2787 = vmatprep.subr.mxu0 %v2436
        %2788 = vmatpush1.msra.mxu0 %v2435
        %2789 = vmatprep.subr.mxu0 %v2440
        %2790 = vmatpush1.msra.mxu0 %v2439
        %2791 = vmatprep.subr.mxu0 %v2444
        %2792 = vmatpush1.msra.mxu0 %v2443
        %2793 = vmatprep.subr.mxu0 %v2448
        %2794 = vmatpush1.msra.mxu0 %v2447
        %2795 = vmatprep.subr.mxu0 %v2452
        %2796 = vmatpush1.msra.mxu0 %v2451
        %2797 = vmatprep.subr.mxu0 %v2456
        %2798 = vmatpush1.msra.mxu0 %v2455
        %2799 = vmatprep.subr.mxu0 %v2460
        %2800 = vmatpush1.msra.mxu0 %v2459
        %2801 = vmatprep.subr.mxu0 %v2464
        %2802 = vmatpush1.msra.mxu0 %v2463
        %2803 = vmatprep.subr.mxu0 %v2468
        %2804 = vmatpush1.msra.mxu0 %v2467
        %2805 = vmatprep.subr.mxu0 %v2472
        %2806 = vmatpush1.msra.mxu0 %v2471
        %2807 = vmatprep.subr.mxu0 %v2476
        %2808 = vmatpush1.msra.mxu0 %v2475
        %2809 = vmatprep.mubr.f32.mxu0 %v2497
        %2810 = vmatmul.mubr.f32.gmra.mrb[0].mxu0 %v2494
        %v2811 = vpop.f32.mrb[0].mxu0
        %v2812 = vadd.f32 %v2735, %v2811
        %v2813 = vpop.f32.mrb[0].mxu0
        %v2814 = vadd.f32 %v2737, %v2813
        %2815 = vmatprep.mubr.f32.mxu0 %v2505
        %2816 = vmatmul.mubr.f32.gmra.mrb[0].mxu0 %v2503
        %v2817 = vpop.f32.mrb[0].mxu0
        %v2818 = vadd.f32 %v2741, %v2817
        %v2819 = vpop.f32.mrb[0].mxu0
        %v2820 = vadd.f32 %v2743, %v2819
        %2821 = vdwg.mxu0
        %v2822 = vadd.f32 %v2048, %v2658
        %v2823 = vadd.f32 %v2050, %v2660
        %v2824 = vadd.f32 %v2202, %v2812
        %v2825 = vadd.f32 %v2204, %v2814
        %v2826 = vadd.f32 %v2054, %v2664
        %v2827 = vadd.f32 %v2056, %v2666
        %v2828 = vadd.f32 %v2208, %v2818
        %v2829 = vadd.f32 %v2210, %v2820
        %v2830 = vld [vmem:[#allocation11] sm:$0xf]
        %v2832 = vlaneseq
        %v2833 = vshrl.u32 %v2832, 7
        %v2834 = vsub.s32 0, %v2833
        %v2835 = vrot.slane %v2830, %v2834
        %v2836 = vlaneseq
        %v2837 = vshrl.u32 %v2836, 7
        %v2838 = vsub.s32 1, %v2837
        %v2839 = vrot.slane %v2830, %v2838
        %v2840 = vlaneseq
        %v2841 = vshrl.u32 %v2840, 7
        %v2842 = vsub.s32 2, %v2841
        %v2843 = vrot.slane %v2830, %v2842
        %v2844 = vlaneseq
        %v2845 = vshrl.u32 %v2844, 7
        %v2846 = vsub.s32 3, %v2845
        %v2847 = vrot.slane %v2830, %v2846
        %v2852 = vadd.f32 %v2822, %v2835
        %v2853 = vadd.f32 %v2823, %v2839
        %v2854 = vadd.f32 %v2824, %v2843
        %v2855 = vadd.f32 %v2825, %v2847
        %v2856 = vadd.f32 %v2826, %v2835
        %v2857 = vadd.f32 %v2827, %v2839
        %v2858 = vadd.f32 %v2828, %v2843
        %v2859 = vadd.f32 %v2829, %v2847
        %v2868 = vrot.slane %v2852, 7
        %v2869 = vrot.slane %v2853, 7
        %v2870 = vrot.slane %v2854, 7
        %v2871 = vrot.slane %v2855, 7
        %v2872 = vrot.slane %v2856, 7
        %v2873 = vsel %vm989, %v2868, %v2872
        %v2874 = vrot.slane %v2857, 7
        %v2875 = vsel %vm989, %v2869, %v2874
        %v2876 = vrot.slane %v2858, 7
        %v2877 = vsel %vm989, %v2870, %v2876
        %v2878 = vrot.slane %v2859, 7
        %v2879 = vsel %vm989, %v2871, %v2878
        %2892 = vst [vmem:[#allocation2] sm:$0xfe] %v2868
        %2893 = vst [vmem:[#allocation2 + $0x8] sm:$0xfe] %v2869
        %2894 = vst [vmem:[#allocation2 + $0x10] sm:$0xfe] %v2870
        %2895 = vst [vmem:[#allocation2 + $0x18] sm:$0xfe] %v2871
        %2896 = vst [vmem:[#allocation2 + $0x20] sm:$0xff] %v2873
        %2897 = vst [vmem:[#allocation2 + $0x28] sm:$0xff] %v2875
        %2898 = vst [vmem:[#allocation2 + $0x30] sm:$0xff] %v2877
        %2899 = vst [vmem:[#allocation2 + $0x38] sm:$0xff] %v2879
        %2900 = vst [vmem:[#allocation2 + $0x40] sm:$0x1] %v2872
        %2901 = vst [vmem:[#allocation2 + $0x48] sm:$0x1] %v2874
        %2902 = vst [vmem:[#allocation2 + $0x50] sm:$0x1] %v2876
        %2903 = vst [vmem:[#allocation2 + $0x58] sm:$0x1] %v2878
        %v2904 = vld [vmem:[#allocation2] sm:$0xff]
        %v2905 = vld [vmem:[#allocation2 + $0x8] sm:$0xff]
        %v2906 = vld [vmem:[#allocation2 + $0x10] sm:$0xff]
        %v2907 = vld [vmem:[#allocation2 + $0x18] sm:$0xff]
        %v2908 = vld [vmem:[#allocation2 + $0x20] sm:$0xff]
        %v2909 = vld [vmem:[#allocation2 + $0x28] sm:$0xff]
        %v2910 = vld [vmem:[#allocation2 + $0x30] sm:$0xff]
        %v2911 = vld [vmem:[#allocation2 + $0x38] sm:$0xff]
        %v2912 = vld [vmem:[#allocation12] sm:$0xff]
        %v2913 = vld [vmem:[#allocation12 + $0x8] sm:$0xff]
        %v2914 = vld [vmem:[#allocation12 + $0x10] sm:$0xff]
        %v2915 = vld [vmem:[#allocation12 + $0x18] sm:$0xff]
        %v2916 = vld [vmem:[#allocation12 + $0x20] sm:$0xff]
        %v2917 = vld [vmem:[#allocation12 + $0x28] sm:$0xff]
        %v2918 = vld [vmem:[#allocation12 + $0x30] sm:$0xff]
        %v2919 = vld [vmem:[#allocation12 + $0x38] sm:$0xff]
        %v2920 = vld [vmem:[#allocation12 + $0x40] sm:$0xff]
        %v2921 = vld [vmem:[#allocation12 + $0x48] sm:$0xff]
        %v2922 = vld [vmem:[#allocation12 + $0x50] sm:$0xff]
        %v2923 = vld [vmem:[#allocation12 + $0x58] sm:$0xff]
        %v2924 = vld [vmem:[#allocation12 + $0x60] sm:$0xff]
        %v2925 = vld [vmem:[#allocation12 + $0x68] sm:$0xff]
        %v2926 = vld [vmem:[#allocation12 + $0x70] sm:$0xff]
        %v2927 = vld [vmem:[#allocation12 + $0x78] sm:$0xff]
        %v2928 = vld [vmem:[#allocation12 + $0x80] sm:$0xff]
        %v2929 = vld [vmem:[#allocation12 + $0x88] sm:$0xff]
        %v2930 = vld [vmem:[#allocation12 + $0x90] sm:$0xff]
        %v2931 = vld [vmem:[#allocation12 + $0x98] sm:$0xff]
        %v2932 = vld [vmem:[#allocation12 + $0xa0] sm:$0xff]
        %v2933 = vld [vmem:[#allocation12 + $0xa8] sm:$0xff]
        %v2934 = vld [vmem:[#allocation12 + $0xb0] sm:$0xff]
        %v2935 = vld [vmem:[#allocation12 + $0xb8] sm:$0xff]
        %v2936 = vld [vmem:[#allocation12 + $0xc0] sm:$0xff]
        %v2937 = vld [vmem:[#allocation12 + $0xc8] sm:$0xff]
        %v2938 = vld [vmem:[#allocation12 + $0xd0] sm:$0xff]
        %v2939 = vld [vmem:[#allocation12 + $0xd8] sm:$0xff]
        %v2940 = vld [vmem:[#allocation12 + $0xe0] sm:$0xff]
        %v2941 = vld [vmem:[#allocation12 + $0xe8] sm:$0xff]
        %v2942 = vld [vmem:[#allocation12 + $0xf0] sm:$0xff]
        %v2943 = vld [vmem:[#allocation12 + $0xf8] sm:$0xff]
        %v2944 = vld [vmem:[#allocation12 + $0x100] sm:$0xff]
        %v2945 = vld [vmem:[#allocation12 + $0x108] sm:$0xff]
        %v2946 = vld [vmem:[#allocation12 + $0x110] sm:$0xff]
        %v2947 = vld [vmem:[#allocation12 + $0x118] sm:$0xff]
        %v2948 = vld [vmem:[#allocation12 + $0x120] sm:$0xff]
        %v2949 = vld [vmem:[#allocation12 + $0x128] sm:$0xff]
        %v2950 = vld [vmem:[#allocation12 + $0x130] sm:$0xff]
        %v2951 = vld [vmem:[#allocation12 + $0x138] sm:$0xff]
        %v2952 = vld [vmem:[#allocation12 + $0x140] sm:$0xff]
        %v2953 = vld [vmem:[#allocation12 + $0x148] sm:$0xff]
        %v2954 = vld [vmem:[#allocation12 + $0x150] sm:$0xff]
        %v2955 = vld [vmem:[#allocation12 + $0x158] sm:$0xff]
        %v2956 = vld [vmem:[#allocation12 + $0x160] sm:$0xff]
        %v2957 = vld [vmem:[#allocation12 + $0x168] sm:$0xff]
        %v2958 = vld [vmem:[#allocation12 + $0x170] sm:$0xff]
        %v2959 = vld [vmem:[#allocation12 + $0x178] sm:$0xff]
        %v2960 = vld [vmem:[#allocation12 + $0x180] sm:$0xff]
        %v2961 = vld [vmem:[#allocation12 + $0x188] sm:$0xff]
        %v2962 = vld [vmem:[#allocation12 + $0x190] sm:$0xff]
        %v2963 = vld [vmem:[#allocation12 + $0x198] sm:$0xff]
        %v2964 = vld [vmem:[#allocation12 + $0x1a0] sm:$0xff]
        %v2965 = vld [vmem:[#allocation12 + $0x1a8] sm:$0xff]
        %v2966 = vld [vmem:[#allocation12 + $0x1b0] sm:$0xff]
        %v2967 = vld [vmem:[#allocation12 + $0x1b8] sm:$0xff]
        %v2968 = vld [vmem:[#allocation12 + $0x1c0] sm:$0xff]
        %v2969 = vld [vmem:[#allocation12 + $0x1c8] sm:$0xff]
        %v2970 = vld [vmem:[#allocation12 + $0x1d0] sm:$0xff]
        %v2971 = vld [vmem:[#allocation12 + $0x1d8] sm:$0xff]
        %v2972 = vld [vmem:[#allocation12 + $0x1e0] sm:$0xff]
        %v2973 = vld [vmem:[#allocation12 + $0x1e8] sm:$0xff]
        %v2974 = vld [vmem:[#allocation12 + $0x1f0] sm:$0xff]
        %v2975 = vld [vmem:[#allocation12 + $0x1f8] sm:$0xff]
        %v2976 = vld [vmem:[#allocation12 + $0x200] sm:$0xff]
        %v2977 = vld [vmem:[#allocation12 + $0x208] sm:$0xff]
        %v2978 = vld [vmem:[#allocation12 + $0x210] sm:$0xff]
        %v2979 = vld [vmem:[#allocation12 + $0x218] sm:$0xff]
        %v2980 = vld [vmem:[#allocation12 + $0x220] sm:$0xff]
        %v2981 = vld [vmem:[#allocation12 + $0x228] sm:$0xff]
        %v2982 = vld [vmem:[#allocation12 + $0x230] sm:$0xff]
        %v2983 = vld [vmem:[#allocation12 + $0x238] sm:$0xff]
        %v2984 = vld [vmem:[#allocation12 + $0x240] sm:$0xff]
        %v2985 = vld [vmem:[#allocation12 + $0x248] sm:$0xff]
        %v2986 = vld [vmem:[#allocation12 + $0x250] sm:$0xff]
        %v2987 = vld [vmem:[#allocation12 + $0x258] sm:$0xff]
        %v2988 = vld [vmem:[#allocation12 + $0x260] sm:$0xff]
        %v2989 = vld [vmem:[#allocation12 + $0x268] sm:$0xff]
        %v2990 = vld [vmem:[#allocation12 + $0x270] sm:$0xff]
        %v2991 = vld [vmem:[#allocation12 + $0x278] sm:$0xff]
        %v2992 = vld [vmem:[#allocation12 + $0x280] sm:$0xff]
        %v2993 = vld [vmem:[#allocation12 + $0x288] sm:$0xff]
        %v2994 = vld [vmem:[#allocation12 + $0x290] sm:$0xff]
        %v2995 = vld [vmem:[#allocation12 + $0x298] sm:$0xff]
        %v2996 = vld [vmem:[#allocation12 + $0x2a0] sm:$0xff]
        %v2997 = vld [vmem:[#allocation12 + $0x2a8] sm:$0xff]
        %v2998 = vld [vmem:[#allocation12 + $0x2b0] sm:$0xff]
        %v2999 = vld [vmem:[#allocation12 + $0x2b8] sm:$0xff]
        %v3000 = vld [vmem:[#allocation12 + $0x2c0] sm:$0xff]
        %v3001 = vld [vmem:[#allocation12 + $0x2c8] sm:$0xff]
        %v3002 = vld [vmem:[#allocation12 + $0x2d0] sm:$0xff]
        %v3003 = vld [vmem:[#allocation12 + $0x2d8] sm:$0xff]
        %v3004 = vld [vmem:[#allocation12 + $0x2e0] sm:$0xff]
        %v3005 = vld [vmem:[#allocation12 + $0x2e8] sm:$0xff]
        %v3006 = vld [vmem:[#allocation12 + $0x2f0] sm:$0xff]
        %v3007 = vld [vmem:[#allocation12 + $0x2f8] sm:$0xff]
        %v3008 = vld [vmem:[#allocation12 + $0x300] sm:$0xff]
        %v3009 = vld [vmem:[#allocation12 + $0x308] sm:$0xff]
        %v3010 = vld [vmem:[#allocation12 + $0x310] sm:$0xff]
        %v3011 = vld [vmem:[#allocation12 + $0x318] sm:$0xff]
        %v3012 = vld [vmem:[#allocation12 + $0x320] sm:$0xff]
        %v3013 = vld [vmem:[#allocation12 + $0x328] sm:$0xff]
        %v3014 = vld [vmem:[#allocation12 + $0x330] sm:$0xff]
        %v3015 = vld [vmem:[#allocation12 + $0x338] sm:$0xff]
        %v3016 = vld [vmem:[#allocation12 + $0x340] sm:$0xff]
        %v3017 = vld [vmem:[#allocation12 + $0x348] sm:$0xff]
        %v3018 = vld [vmem:[#allocation12 + $0x350] sm:$0xff]
        %v3019 = vld [vmem:[#allocation12 + $0x358] sm:$0xff]
        %v3020 = vld [vmem:[#allocation12 + $0x360] sm:$0xff]
        %v3021 = vld [vmem:[#allocation12 + $0x368] sm:$0xff]
        %v3022 = vld [vmem:[#allocation12 + $0x370] sm:$0xff]
        %v3023 = vld [vmem:[#allocation12 + $0x378] sm:$0xff]
        %v3024 = vld [vmem:[#allocation12 + $0x380] sm:$0xff]
        %v3025 = vld [vmem:[#allocation12 + $0x388] sm:$0xff]
        %v3026 = vld [vmem:[#allocation12 + $0x390] sm:$0xff]
        %v3027 = vld [vmem:[#allocation12 + $0x398] sm:$0xff]
        %v3028 = vld [vmem:[#allocation12 + $0x3a0] sm:$0xff]
        %v3029 = vld [vmem:[#allocation12 + $0x3a8] sm:$0xff]
        %v3030 = vld [vmem:[#allocation12 + $0x3b0] sm:$0xff]
        %v3031 = vld [vmem:[#allocation12 + $0x3b8] sm:$0xff]
        %v3032 = vld [vmem:[#allocation12 + $0x3c0] sm:$0xff]
        %v3033 = vld [vmem:[#allocation12 + $0x3c8] sm:$0xff]
        %v3034 = vld [vmem:[#allocation12 + $0x3d0] sm:$0xff]
        %v3035 = vld [vmem:[#allocation12 + $0x3d8] sm:$0xff]
        %v3036 = vld [vmem:[#allocation12 + $0x3e0] sm:$0xff]
        %v3037 = vld [vmem:[#allocation12 + $0x3e8] sm:$0xff]
        %v3038 = vld [vmem:[#allocation12 + $0x3f0] sm:$0xff]
        %v3039 = vld [vmem:[#allocation12 + $0x3f8] sm:$0xff]
        %v3040 = vld [vmem:[#allocation12 + $0x400] sm:$0xff]
        %v3041 = vld [vmem:[#allocation12 + $0x408] sm:$0xff]
        %v3042 = vld [vmem:[#allocation12 + $0x410] sm:$0xff]
        %v3043 = vld [vmem:[#allocation12 + $0x418] sm:$0xff]
        %v3044 = vld [vmem:[#allocation12 + $0x420] sm:$0xff]
        %v3045 = vld [vmem:[#allocation12 + $0x428] sm:$0xff]
        %v3046 = vld [vmem:[#allocation12 + $0x430] sm:$0xff]
        %v3047 = vld [vmem:[#allocation12 + $0x438] sm:$0xff]
        %v3048 = vld [vmem:[#allocation12 + $0x440] sm:$0xff]
        %v3049 = vld [vmem:[#allocation12 + $0x448] sm:$0xff]
        %v3050 = vld [vmem:[#allocation12 + $0x450] sm:$0xff]
        %v3051 = vld [vmem:[#allocation12 + $0x458] sm:$0xff]
        %v3052 = vld [vmem:[#allocation12 + $0x460] sm:$0xff]
        %v3053 = vld [vmem:[#allocation12 + $0x468] sm:$0xff]
        %v3054 = vld [vmem:[#allocation12 + $0x470] sm:$0xff]
        %v3055 = vld [vmem:[#allocation12 + $0x478] sm:$0xff]
        %v3056 = vld [vmem:[#allocation12 + $0x480] sm:$0xff]
        %v3057 = vld [vmem:[#allocation12 + $0x488] sm:$0xff]
        %v3058 = vld [vmem:[#allocation12 + $0x490] sm:$0xff]
        %v3059 = vld [vmem:[#allocation12 + $0x498] sm:$0xff]
        %v3060 = vld [vmem:[#allocation12 + $0x4a0] sm:$0xff]
        %v3061 = vld [vmem:[#allocation12 + $0x4a8] sm:$0xff]
        %v3062 = vld [vmem:[#allocation12 + $0x4b0] sm:$0xff]
        %v3063 = vld [vmem:[#allocation12 + $0x4b8] sm:$0xff]
        %v3064 = vld [vmem:[#allocation12 + $0x4c0] sm:$0xff]
        %v3065 = vld [vmem:[#allocation12 + $0x4c8] sm:$0xff]
        %v3066 = vld [vmem:[#allocation12 + $0x4d0] sm:$0xff]
        %v3067 = vld [vmem:[#allocation12 + $0x4d8] sm:$0xff]
        %v3068 = vld [vmem:[#allocation12 + $0x4e0] sm:$0xff]
        %v3069 = vld [vmem:[#allocation12 + $0x4e8] sm:$0xff]
        %v3070 = vld [vmem:[#allocation12 + $0x4f0] sm:$0xff]
        %v3071 = vld [vmem:[#allocation12 + $0x4f8] sm:$0xff]
        %v3072 = vld [vmem:[#allocation12 + $0x500] sm:$0xff]
        %v3073 = vld [vmem:[#allocation12 + $0x508] sm:$0xff]
        %v3074 = vld [vmem:[#allocation12 + $0x510] sm:$0xff]
        %v3075 = vld [vmem:[#allocation12 + $0x518] sm:$0xff]
        %v3076 = vld [vmem:[#allocation12 + $0x520] sm:$0xff]
        %v3077 = vld [vmem:[#allocation12 + $0x528] sm:$0xff]
        %v3078 = vld [vmem:[#allocation12 + $0x530] sm:$0xff]
        %v3079 = vld [vmem:[#allocation12 + $0x538] sm:$0xff]
        %v3080 = vld [vmem:[#allocation12 + $0x540] sm:$0xff]
        %v3081 = vld [vmem:[#allocation12 + $0x548] sm:$0xff]
        %v3082 = vld [vmem:[#allocation12 + $0x550] sm:$0xff]
        %v3083 = vld [vmem:[#allocation12 + $0x558] sm:$0xff]
        %v3084 = vld [vmem:[#allocation12 + $0x560] sm:$0xff]
        %v3085 = vld [vmem:[#allocation12 + $0x568] sm:$0xff]
        %v3086 = vld [vmem:[#allocation12 + $0x570] sm:$0xff]
        %v3087 = vld [vmem:[#allocation12 + $0x578] sm:$0xff]
        %v3088 = vld [vmem:[#allocation12 + $0x580] sm:$0xff]
        %v3089 = vld [vmem:[#allocation12 + $0x588] sm:$0xff]
        %v3090 = vld [vmem:[#allocation12 + $0x590] sm:$0xff]
        %v3091 = vld [vmem:[#allocation12 + $0x598] sm:$0xff]
        %v3092 = vld [vmem:[#allocation12 + $0x5a0] sm:$0xff]
        %v3093 = vld [vmem:[#allocation12 + $0x5a8] sm:$0xff]
        %v3094 = vld [vmem:[#allocation12 + $0x5b0] sm:$0xff]
        %v3095 = vld [vmem:[#allocation12 + $0x5b8] sm:$0xff]
        %v3096 = vld [vmem:[#allocation12 + $0x5c0] sm:$0xff]
        %v3097 = vld [vmem:[#allocation12 + $0x5c8] sm:$0xff]
        %v3098 = vld [vmem:[#allocation12 + $0x5d0] sm:$0xff]
        %v3099 = vld [vmem:[#allocation12 + $0x5d8] sm:$0xff]
        %v3100 = vld [vmem:[#allocation12 + $0x5e0] sm:$0xff]
        %v3101 = vld [vmem:[#allocation12 + $0x5e8] sm:$0xff]
        %v3102 = vld [vmem:[#allocation12 + $0x5f0] sm:$0xff]
        %v3103 = vld [vmem:[#allocation12 + $0x5f8] sm:$0xff]
        %v3104 = vld [vmem:[#allocation12 + $0x600] sm:$0xff]
        %v3105 = vld [vmem:[#allocation12 + $0x608] sm:$0xff]
        %v3106 = vld [vmem:[#allocation12 + $0x610] sm:$0xff]
        %v3107 = vld [vmem:[#allocation12 + $0x618] sm:$0xff]
        %v3108 = vld [vmem:[#allocation12 + $0x620] sm:$0xff]
        %v3109 = vld [vmem:[#allocation12 + $0x628] sm:$0xff]
        %v3110 = vld [vmem:[#allocation12 + $0x630] sm:$0xff]
        %v3111 = vld [vmem:[#allocation12 + $0x638] sm:$0xff]
        %v3112 = vld [vmem:[#allocation12 + $0x640] sm:$0xff]
        %v3113 = vld [vmem:[#allocation12 + $0x648] sm:$0xff]
        %v3114 = vld [vmem:[#allocation12 + $0x650] sm:$0xff]
        %v3115 = vld [vmem:[#allocation12 + $0x658] sm:$0xff]
        %v3116 = vld [vmem:[#allocation12 + $0x660] sm:$0xff]
        %v3117 = vld [vmem:[#allocation12 + $0x668] sm:$0xff]
        %v3118 = vld [vmem:[#allocation12 + $0x670] sm:$0xff]
        %v3119 = vld [vmem:[#allocation12 + $0x678] sm:$0xff]
        %v3120 = vld [vmem:[#allocation12 + $0x680] sm:$0xff]
        %v3121 = vld [vmem:[#allocation12 + $0x688] sm:$0xff]
        %v3122 = vld [vmem:[#allocation12 + $0x690] sm:$0xff]
        %v3123 = vld [vmem:[#allocation12 + $0x698] sm:$0xff]
        %v3124 = vld [vmem:[#allocation12 + $0x6a0] sm:$0xff]
        %v3125 = vld [vmem:[#allocation12 + $0x6a8] sm:$0xff]
        %v3126 = vld [vmem:[#allocation12 + $0x6b0] sm:$0xff]
        %v3127 = vld [vmem:[#allocation12 + $0x6b8] sm:$0xff]
        %v3128 = vld [vmem:[#allocation12 + $0x6c0] sm:$0xff]
        %v3129 = vld [vmem:[#allocation12 + $0x6c8] sm:$0xff]
        %v3130 = vld [vmem:[#allocation12 + $0x6d0] sm:$0xff]
        %v3131 = vld [vmem:[#allocation12 + $0x6d8] sm:$0xff]
        %v3132 = vld [vmem:[#allocation12 + $0x6e0] sm:$0xff]
        %v3133 = vld [vmem:[#allocation12 + $0x6e8] sm:$0xff]
        %v3134 = vld [vmem:[#allocation12 + $0x6f0] sm:$0xff]
        %v3135 = vld [vmem:[#allocation12 + $0x6f8] sm:$0xff]
        %v3136 = vld [vmem:[#allocation12 + $0x700] sm:$0xff]
        %v3137 = vld [vmem:[#allocation12 + $0x708] sm:$0xff]
        %v3138 = vld [vmem:[#allocation12 + $0x710] sm:$0xff]
        %v3139 = vld [vmem:[#allocation12 + $0x718] sm:$0xff]
        %v3140 = vld [vmem:[#allocation12 + $0x720] sm:$0xff]
        %v3141 = vld [vmem:[#allocation12 + $0x728] sm:$0xff]
        %v3142 = vld [vmem:[#allocation12 + $0x730] sm:$0xff]
        %v3143 = vld [vmem:[#allocation12 + $0x738] sm:$0xff]
        %v3144 = vld [vmem:[#allocation12 + $0x740] sm:$0xff]
        %v3145 = vld [vmem:[#allocation12 + $0x748] sm:$0xff]
        %v3146 = vld [vmem:[#allocation12 + $0x750] sm:$0xff]
        %v3147 = vld [vmem:[#allocation12 + $0x758] sm:$0xff]
        %v3148 = vld [vmem:[#allocation12 + $0x760] sm:$0xff]
        %v3149 = vld [vmem:[#allocation12 + $0x768] sm:$0xff]
        %v3150 = vld [vmem:[#allocation12 + $0x770] sm:$0xff]
        %v3151 = vld [vmem:[#allocation12 + $0x778] sm:$0xff]
        %v3152 = vld [vmem:[#allocation12 + $0x780] sm:$0xff]
        %v3153 = vld [vmem:[#allocation12 + $0x788] sm:$0xff]
        %v3154 = vld [vmem:[#allocation12 + $0x790] sm:$0xff]
        %v3155 = vld [vmem:[#allocation12 + $0x798] sm:$0xff]
        %v3156 = vld [vmem:[#allocation12 + $0x7a0] sm:$0xff]
        %v3157 = vld [vmem:[#allocation12 + $0x7a8] sm:$0xff]
        %v3158 = vld [vmem:[#allocation12 + $0x7b0] sm:$0xff]
        %v3159 = vld [vmem:[#allocation12 + $0x7b8] sm:$0xff]
        %v3160 = vld [vmem:[#allocation12 + $0x7c0] sm:$0xff]
        %v3161 = vld [vmem:[#allocation12 + $0x7c8] sm:$0xff]
        %v3162 = vld [vmem:[#allocation12 + $0x7d0] sm:$0xff]
        %v3163 = vld [vmem:[#allocation12 + $0x7d8] sm:$0xff]
        %v3164 = vld [vmem:[#allocation12 + $0x7e0] sm:$0xff]
        %v3165 = vld [vmem:[#allocation12 + $0x7e8] sm:$0xff]
        %v3166 = vld [vmem:[#allocation12 + $0x7f0] sm:$0xff]
        %v3167 = vld [vmem:[#allocation12 + $0x7f8] sm:$0xff]
        %v3168 = vld [vmem:[#allocation2] sm:$0xfe]
        %v3169 = vld [vmem:[#allocation2 + $0x8] sm:$0xfe]
        %v3170 = vld [vmem:[#allocation2 + $0x10] sm:$0xfe]
        %v3171 = vld [vmem:[#allocation2 + $0x18] sm:$0xfe]
        %v3172 = vld [vmem:[#allocation2 + $0x40] sm:$0x1]
        %v3173 = vld [vmem:[#allocation2 + $0x48] sm:$0x1]
        %v3174 = vld [vmem:[#allocation2 + $0x50] sm:$0x1]
        %v3175 = vld [vmem:[#allocation2 + $0x58] sm:$0x1]
        %s3176 = scalar_lea.vmem [#allocation12], 2048
        %v3177 = vld [vmem:[%s3176] sm:$0xff]
        %v3178 = vld [vmem:[%s3176 + $0x8] sm:$0xff]
        %v3179 = vld [vmem:[%s3176 + $0x10] sm:$0xff]
        %v3180 = vld [vmem:[%s3176 + $0x18] sm:$0xff]
        %v3181 = vld [vmem:[%s3176 + $0x20] sm:$0xff]
        %v3182 = vld [vmem:[%s3176 + $0x28] sm:$0xff]
        %v3183 = vld [vmem:[%s3176 + $0x30] sm:$0xff]
        %v3184 = vld [vmem:[%s3176 + $0x38] sm:$0xff]
        %v3185 = vld [vmem:[%s3176 + $0x40] sm:$0xff]
        %v3186 = vld [vmem:[%s3176 + $0x48] sm:$0xff]
        %v3187 = vld [vmem:[%s3176 + $0x50] sm:$0xff]
        %v3188 = vld [vmem:[%s3176 + $0x58] sm:$0xff]
        %v3189 = vld [vmem:[%s3176 + $0x60] sm:$0xff]
        %v3190 = vld [vmem:[%s3176 + $0x68] sm:$0xff]
        %v3191 = vld [vmem:[%s3176 + $0x70] sm:$0xff]
        %v3192 = vld [vmem:[%s3176 + $0x78] sm:$0xff]
        %v3193 = vld [vmem:[%s3176 + $0x80] sm:$0xff]
        %v3194 = vld [vmem:[%s3176 + $0x88] sm:$0xff]
        %v3195 = vld [vmem:[%s3176 + $0x90] sm:$0xff]
        %v3196 = vld [vmem:[%s3176 + $0x98] sm:$0xff]
        %v3197 = vld [vmem:[%s3176 + $0xa0] sm:$0xff]
        %v3198 = vld [vmem:[%s3176 + $0xa8] sm:$0xff]
        %v3199 = vld [vmem:[%s3176 + $0xb0] sm:$0xff]
        %v3200 = vld [vmem:[%s3176 + $0xb8] sm:$0xff]
        %v3201 = vld [vmem:[%s3176 + $0xc0] sm:$0xff]
        %v3202 = vld [vmem:[%s3176 + $0xc8] sm:$0xff]
        %v3203 = vld [vmem:[%s3176 + $0xd0] sm:$0xff]
        %v3204 = vld [vmem:[%s3176 + $0xd8] sm:$0xff]
        %v3205 = vld [vmem:[%s3176 + $0xe0] sm:$0xff]
        %v3206 = vld [vmem:[%s3176 + $0xe8] sm:$0xff]
        %v3207 = vld [vmem:[%s3176 + $0xf0] sm:$0xff]
        %v3208 = vld [vmem:[%s3176 + $0xf8] sm:$0xff]
        %v3209 = vld [vmem:[%s3176 + $0x100] sm:$0xff]
        %v3210 = vld [vmem:[%s3176 + $0x108] sm:$0xff]
        %v3211 = vld [vmem:[%s3176 + $0x110] sm:$0xff]
        %v3212 = vld [vmem:[%s3176 + $0x118] sm:$0xff]
        %v3213 = vld [vmem:[%s3176 + $0x120] sm:$0xff]
        %v3214 = vld [vmem:[%s3176 + $0x128] sm:$0xff]
        %v3215 = vld [vmem:[%s3176 + $0x130] sm:$0xff]
        %v3216 = vld [vmem:[%s3176 + $0x138] sm:$0xff]
        %v3217 = vld [vmem:[%s3176 + $0x140] sm:$0xff]
        %v3218 = vld [vmem:[%s3176 + $0x148] sm:$0xff]
        %v3219 = vld [vmem:[%s3176 + $0x150] sm:$0xff]
        %v3220 = vld [vmem:[%s3176 + $0x158] sm:$0xff]
        %v3221 = vld [vmem:[%s3176 + $0x160] sm:$0xff]
        %v3222 = vld [vmem:[%s3176 + $0x168] sm:$0xff]
        %v3223 = vld [vmem:[%s3176 + $0x170] sm:$0xff]
        %v3224 = vld [vmem:[%s3176 + $0x178] sm:$0xff]
        %v3225 = vld [vmem:[%s3176 + $0x180] sm:$0xff]
        %v3226 = vld [vmem:[%s3176 + $0x188] sm:$0xff]
        %v3227 = vld [vmem:[%s3176 + $0x190] sm:$0xff]
        %v3228 = vld [vmem:[%s3176 + $0x198] sm:$0xff]
        %v3229 = vld [vmem:[%s3176 + $0x1a0] sm:$0xff]
        %v3230 = vld [vmem:[%s3176 + $0x1a8] sm:$0xff]
        %v3231 = vld [vmem:[%s3176 + $0x1b0] sm:$0xff]
        %v3232 = vld [vmem:[%s3176 + $0x1b8] sm:$0xff]
        %v3233 = vld [vmem:[%s3176 + $0x1c0] sm:$0xff]
        %v3234 = vld [vmem:[%s3176 + $0x1c8] sm:$0xff]
        %v3235 = vld [vmem:[%s3176 + $0x1d0] sm:$0xff]
        %v3236 = vld [vmem:[%s3176 + $0x1d8] sm:$0xff]
        %v3237 = vld [vmem:[%s3176 + $0x1e0] sm:$0xff]
        %v3238 = vld [vmem:[%s3176 + $0x1e8] sm:$0xff]
        %v3239 = vld [vmem:[%s3176 + $0x1f0] sm:$0xff]
        %v3240 = vld [vmem:[%s3176 + $0x1f8] sm:$0xff]
        %v3241 = vld [vmem:[%s3176 + $0x200] sm:$0xff]
        %v3242 = vld [vmem:[%s3176 + $0x208] sm:$0xff]
        %v3243 = vld [vmem:[%s3176 + $0x210] sm:$0xff]
        %v3244 = vld [vmem:[%s3176 + $0x218] sm:$0xff]
        %v3245 = vld [vmem:[%s3176 + $0x220] sm:$0xff]
        %v3246 = vld [vmem:[%s3176 + $0x228] sm:$0xff]
        %v3247 = vld [vmem:[%s3176 + $0x230] sm:$0xff]
        %v3248 = vld [vmem:[%s3176 + $0x238] sm:$0xff]
        %v3249 = vld [vmem:[%s3176 + $0x240] sm:$0xff]
        %v3250 = vld [vmem:[%s3176 + $0x248] sm:$0xff]
        %v3251 = vld [vmem:[%s3176 + $0x250] sm:$0xff]
        %v3252 = vld [vmem:[%s3176 + $0x258] sm:$0xff]
        %v3253 = vld [vmem:[%s3176 + $0x260] sm:$0xff]
        %v3254 = vld [vmem:[%s3176 + $0x268] sm:$0xff]
        %v3255 = vld [vmem:[%s3176 + $0x270] sm:$0xff]
        %v3256 = vld [vmem:[%s3176 + $0x278] sm:$0xff]
        %v3257 = vld [vmem:[%s3176 + $0x280] sm:$0xff]
        %v3258 = vld [vmem:[%s3176 + $0x288] sm:$0xff]
        %v3259 = vld [vmem:[%s3176 + $0x290] sm:$0xff]
        %v3260 = vld [vmem:[%s3176 + $0x298] sm:$0xff]
        %v3261 = vld [vmem:[%s3176 + $0x2a0] sm:$0xff]
        %v3262 = vld [vmem:[%s3176 + $0x2a8] sm:$0xff]
        %v3263 = vld [vmem:[%s3176 + $0x2b0] sm:$0xff]
        %v3264 = vld [vmem:[%s3176 + $0x2b8] sm:$0xff]
        %v3265 = vld [vmem:[%s3176 + $0x2c0] sm:$0xff]
        %v3266 = vld [vmem:[%s3176 + $0x2c8] sm:$0xff]
        %v3267 = vld [vmem:[%s3176 + $0x2d0] sm:$0xff]
        %v3268 = vld [vmem:[%s3176 + $0x2d8] sm:$0xff]
        %v3269 = vld [vmem:[%s3176 + $0x2e0] sm:$0xff]
        %v3270 = vld [vmem:[%s3176 + $0x2e8] sm:$0xff]
        %v3271 = vld [vmem:[%s3176 + $0x2f0] sm:$0xff]
        %v3272 = vld [vmem:[%s3176 + $0x2f8] sm:$0xff]
        %v3273 = vld [vmem:[%s3176 + $0x300] sm:$0xff]
        %v3274 = vld [vmem:[%s3176 + $0x308] sm:$0xff]
        %v3275 = vld [vmem:[%s3176 + $0x310] sm:$0xff]
        %v3276 = vld [vmem:[%s3176 + $0x318] sm:$0xff]
        %v3277 = vld [vmem:[%s3176 + $0x320] sm:$0xff]
        %v3278 = vld [vmem:[%s3176 + $0x328] sm:$0xff]
        %v3279 = vld [vmem:[%s3176 + $0x330] sm:$0xff]
        %v3280 = vld [vmem:[%s3176 + $0x338] sm:$0xff]
        %v3281 = vld [vmem:[%s3176 + $0x340] sm:$0xff]
        %v3282 = vld [vmem:[%s3176 + $0x348] sm:$0xff]
        %v3283 = vld [vmem:[%s3176 + $0x350] sm:$0xff]
        %v3284 = vld [vmem:[%s3176 + $0x358] sm:$0xff]
        %v3285 = vld [vmem:[%s3176 + $0x360] sm:$0xff]
        %v3286 = vld [vmem:[%s3176 + $0x368] sm:$0xff]
        %v3287 = vld [vmem:[%s3176 + $0x370] sm:$0xff]
        %v3288 = vld [vmem:[%s3176 + $0x378] sm:$0xff]
        %v3289 = vld [vmem:[%s3176 + $0x380] sm:$0xff]
        %v3290 = vld [vmem:[%s3176 + $0x388] sm:$0xff]
        %v3291 = vld [vmem:[%s3176 + $0x390] sm:$0xff]
        %v3292 = vld [vmem:[%s3176 + $0x398] sm:$0xff]
        %v3293 = vld [vmem:[%s3176 + $0x3a0] sm:$0xff]
        %v3294 = vld [vmem:[%s3176 + $0x3a8] sm:$0xff]
        %v3295 = vld [vmem:[%s3176 + $0x3b0] sm:$0xff]
        %v3296 = vld [vmem:[%s3176 + $0x3b8] sm:$0xff]
        %v3297 = vld [vmem:[%s3176 + $0x3c0] sm:$0xff]
        %v3298 = vld [vmem:[%s3176 + $0x3c8] sm:$0xff]
        %v3299 = vld [vmem:[%s3176 + $0x3d0] sm:$0xff]
        %v3300 = vld [vmem:[%s3176 + $0x3d8] sm:$0xff]
        %v3301 = vld [vmem:[%s3176 + $0x3e0] sm:$0xff]
        %v3302 = vld [vmem:[%s3176 + $0x3e8] sm:$0xff]
        %v3303 = vld [vmem:[%s3176 + $0x3f0] sm:$0xff]
        %v3304 = vld [vmem:[%s3176 + $0x3f8] sm:$0xff]
        %v3305 = vld [vmem:[%s3176 + $0x400] sm:$0xff]
        %v3306 = vld [vmem:[%s3176 + $0x408] sm:$0xff]
        %v3307 = vld [vmem:[%s3176 + $0x410] sm:$0xff]
        %v3308 = vld [vmem:[%s3176 + $0x418] sm:$0xff]
        %v3309 = vld [vmem:[%s3176 + $0x420] sm:$0xff]
        %v3310 = vld [vmem:[%s3176 + $0x428] sm:$0xff]
        %v3311 = vld [vmem:[%s3176 + $0x430] sm:$0xff]
        %v3312 = vld [vmem:[%s3176 + $0x438] sm:$0xff]
        %v3313 = vld [vmem:[%s3176 + $0x440] sm:$0xff]
        %v3314 = vld [vmem:[%s3176 + $0x448] sm:$0xff]
        %v3315 = vld [vmem:[%s3176 + $0x450] sm:$0xff]
        %v3316 = vld [vmem:[%s3176 + $0x458] sm:$0xff]
        %v3317 = vld [vmem:[%s3176 + $0x460] sm:$0xff]
        %v3318 = vld [vmem:[%s3176 + $0x468] sm:$0xff]
        %v3319 = vld [vmem:[%s3176 + $0x470] sm:$0xff]
        %v3320 = vld [vmem:[%s3176 + $0x478] sm:$0xff]
        %v3321 = vld [vmem:[%s3176 + $0x480] sm:$0xff]
        %v3322 = vld [vmem:[%s3176 + $0x488] sm:$0xff]
        %v3323 = vld [vmem:[%s3176 + $0x490] sm:$0xff]
        %v3324 = vld [vmem:[%s3176 + $0x498] sm:$0xff]
        %v3325 = vld [vmem:[%s3176 + $0x4a0] sm:$0xff]
        %v3326 = vld [vmem:[%s3176 + $0x4a8] sm:$0xff]
        %v3327 = vld [vmem:[%s3176 + $0x4b0] sm:$0xff]
        %v3328 = vld [vmem:[%s3176 + $0x4b8] sm:$0xff]
        %v3329 = vld [vmem:[%s3176 + $0x4c0] sm:$0xff]
        %v3330 = vld [vmem:[%s3176 + $0x4c8] sm:$0xff]
        %v3331 = vld [vmem:[%s3176 + $0x4d0] sm:$0xff]
        %v3332 = vld [vmem:[%s3176 + $0x4d8] sm:$0xff]
        %v3333 = vld [vmem:[%s3176 + $0x4e0] sm:$0xff]
        %v3334 = vld [vmem:[%s3176 + $0x4e8] sm:$0xff]
        %v3335 = vld [vmem:[%s3176 + $0x4f0] sm:$0xff]
        %v3336 = vld [vmem:[%s3176 + $0x4f8] sm:$0xff]
        %v3337 = vld [vmem:[%s3176 + $0x500] sm:$0xff]
        %v3338 = vld [vmem:[%s3176 + $0x508] sm:$0xff]
        %v3339 = vld [vmem:[%s3176 + $0x510] sm:$0xff]
        %v3340 = vld [vmem:[%s3176 + $0x518] sm:$0xff]
        %v3341 = vld [vmem:[%s3176 + $0x520] sm:$0xff]
        %v3342 = vld [vmem:[%s3176 + $0x528] sm:$0xff]
        %v3343 = vld [vmem:[%s3176 + $0x530] sm:$0xff]
        %v3344 = vld [vmem:[%s3176 + $0x538] sm:$0xff]
        %v3345 = vld [vmem:[%s3176 + $0x540] sm:$0xff]
        %v3346 = vld [vmem:[%s3176 + $0x548] sm:$0xff]
        %v3347 = vld [vmem:[%s3176 + $0x550] sm:$0xff]
        %v3348 = vld [vmem:[%s3176 + $0x558] sm:$0xff]
        %v3349 = vld [vmem:[%s3176 + $0x560] sm:$0xff]
        %v3350 = vld [vmem:[%s3176 + $0x568] sm:$0xff]
        %v3351 = vld [vmem:[%s3176 + $0x570] sm:$0xff]
        %v3352 = vld [vmem:[%s3176 + $0x578] sm:$0xff]
        %v3353 = vld [vmem:[%s3176 + $0x580] sm:$0xff]
        %v3354 = vld [vmem:[%s3176 + $0x588] sm:$0xff]
        %v3355 = vld [vmem:[%s3176 + $0x590] sm:$0xff]
        %v3356 = vld [vmem:[%s3176 + $0x598] sm:$0xff]
        %v3357 = vld [vmem:[%s3176 + $0x5a0] sm:$0xff]
        %v3358 = vld [vmem:[%s3176 + $0x5a8] sm:$0xff]
        %v3359 = vld [vmem:[%s3176 + $0x5b0] sm:$0xff]
        %v3360 = vld [vmem:[%s3176 + $0x5b8] sm:$0xff]
        %v3361 = vld [vmem:[%s3176 + $0x5c0] sm:$0xff]
        %v3362 = vld [vmem:[%s3176 + $0x5c8] sm:$0xff]
        %v3363 = vld [vmem:[%s3176 + $0x5d0] sm:$0xff]
        %v3364 = vld [vmem:[%s3176 + $0x5d8] sm:$0xff]
        %v3365 = vld [vmem:[%s3176 + $0x5e0] sm:$0xff]
        %v3366 = vld [vmem:[%s3176 + $0x5e8] sm:$0xff]
        %v3367 = vld [vmem:[%s3176 + $0x5f0] sm:$0xff]
        %v3368 = vld [vmem:[%s3176 + $0x5f8] sm:$0xff]
        %v3369 = vld [vmem:[%s3176 + $0x600] sm:$0xff]
        %v3370 = vld [vmem:[%s3176 + $0x608] sm:$0xff]
        %v3371 = vld [vmem:[%s3176 + $0x610] sm:$0xff]
        %v3372 = vld [vmem:[%s3176 + $0x618] sm:$0xff]
        %v3373 = vld [vmem:[%s3176 + $0x620] sm:$0xff]
        %v3374 = vld [vmem:[%s3176 + $0x628] sm:$0xff]
        %v3375 = vld [vmem:[%s3176 + $0x630] sm:$0xff]
        %v3376 = vld [vmem:[%s3176 + $0x638] sm:$0xff]
        %v3377 = vld [vmem:[%s3176 + $0x640] sm:$0xff]
        %v3378 = vld [vmem:[%s3176 + $0x648] sm:$0xff]
        %v3379 = vld [vmem:[%s3176 + $0x650] sm:$0xff]
        %v3380 = vld [vmem:[%s3176 + $0x658] sm:$0xff]
        %v3381 = vld [vmem:[%s3176 + $0x660] sm:$0xff]
        %v3382 = vld [vmem:[%s3176 + $0x668] sm:$0xff]
        %v3383 = vld [vmem:[%s3176 + $0x670] sm:$0xff]
        %v3384 = vld [vmem:[%s3176 + $0x678] sm:$0xff]
        %v3385 = vld [vmem:[%s3176 + $0x680] sm:$0xff]
        %v3386 = vld [vmem:[%s3176 + $0x688] sm:$0xff]
        %v3387 = vld [vmem:[%s3176 + $0x690] sm:$0xff]
        %v3388 = vld [vmem:[%s3176 + $0x698] sm:$0xff]
        %v3389 = vld [vmem:[%s3176 + $0x6a0] sm:$0xff]
        %v3390 = vld [vmem:[%s3176 + $0x6a8] sm:$0xff]
        %v3391 = vld [vmem:[%s3176 + $0x6b0] sm:$0xff]
        %v3392 = vld [vmem:[%s3176 + $0x6b8] sm:$0xff]
        %v3393 = vld [vmem:[%s3176 + $0x6c0] sm:$0xff]
        %v3394 = vld [vmem:[%s3176 + $0x6c8] sm:$0xff]
        %v3395 = vld [vmem:[%s3176 + $0x6d0] sm:$0xff]
        %v3396 = vld [vmem:[%s3176 + $0x6d8] sm:$0xff]
        %v3397 = vld [vmem:[%s3176 + $0x6e0] sm:$0xff]
        %v3398 = vld [vmem:[%s3176 + $0x6e8] sm:$0xff]
        %v3399 = vld [vmem:[%s3176 + $0x6f0] sm:$0xff]
        %v3400 = vld [vmem:[%s3176 + $0x6f8] sm:$0xff]
        %v3401 = vld [vmem:[%s3176 + $0x700] sm:$0xff]
        %v3402 = vld [vmem:[%s3176 + $0x708] sm:$0xff]
        %v3403 = vld [vmem:[%s3176 + $0x710] sm:$0xff]
        %v3404 = vld [vmem:[%s3176 + $0x718] sm:$0xff]
        %v3405 = vld [vmem:[%s3176 + $0x720] sm:$0xff]
        %v3406 = vld [vmem:[%s3176 + $0x728] sm:$0xff]
        %v3407 = vld [vmem:[%s3176 + $0x730] sm:$0xff]
        %v3408 = vld [vmem:[%s3176 + $0x738] sm:$0xff]
        %v3409 = vld [vmem:[%s3176 + $0x740] sm:$0xff]
        %v3410 = vld [vmem:[%s3176 + $0x748] sm:$0xff]
        %v3411 = vld [vmem:[%s3176 + $0x750] sm:$0xff]
        %v3412 = vld [vmem:[%s3176 + $0x758] sm:$0xff]
        %v3413 = vld [vmem:[%s3176 + $0x760] sm:$0xff]
        %v3414 = vld [vmem:[%s3176 + $0x768] sm:$0xff]
        %v3415 = vld [vmem:[%s3176 + $0x770] sm:$0xff]
        %v3416 = vld [vmem:[%s3176 + $0x778] sm:$0xff]
        %v3417 = vld [vmem:[%s3176 + $0x780] sm:$0xff]
        %v3418 = vld [vmem:[%s3176 + $0x788] sm:$0xff]
        %v3419 = vld [vmem:[%s3176 + $0x790] sm:$0xff]
        %v3420 = vld [vmem:[%s3176 + $0x798] sm:$0xff]
        %v3421 = vld [vmem:[%s3176 + $0x7a0] sm:$0xff]
        %v3422 = vld [vmem:[%s3176 + $0x7a8] sm:$0xff]
        %v3423 = vld [vmem:[%s3176 + $0x7b0] sm:$0xff]
        %v3424 = vld [vmem:[%s3176 + $0x7b8] sm:$0xff]
        %v3425 = vld [vmem:[%s3176 + $0x7c0] sm:$0xff]
        %v3426 = vld [vmem:[%s3176 + $0x7c8] sm:$0xff]
        %v3427 = vld [vmem:[%s3176 + $0x7d0] sm:$0xff]
        %v3428 = vld [vmem:[%s3176 + $0x7d8] sm:$0xff]
        %v3429 = vld [vmem:[%s3176 + $0x7e0] sm:$0xff]
        %v3430 = vld [vmem:[%s3176 + $0x7e8] sm:$0xff]
        %v3431 = vld [vmem:[%s3176 + $0x7f0] sm:$0xff]
        %v3432 = vld [vmem:[%s3176 + $0x7f8] sm:$0xff]
        %v3445 = vrot.slane %v3168, 1
        %v3446 = vrot.slane %v2908, 1
        %v3447 = vsel %vm1567, %v3445, %v3446
        %v3448 = vrot.slane %v3169, 1
        %v3449 = vrot.slane %v2909, 1
        %v3450 = vsel %vm1567, %v3448, %v3449
        %v3451 = vrot.slane %v3170, 1
        %v3452 = vrot.slane %v2910, 1
        %v3453 = vsel %vm1567, %v3451, %v3452
        %v3454 = vrot.slane %v3171, 1
        %v3455 = vrot.slane %v2911, 1
        %v3456 = vsel %vm1567, %v3454, %v3455
        %v3457 = vrot.slane %v3172, 1
        %v3458 = vsel %vm1567, %v3446, %v3457
        %v3459 = vrot.slane %v3173, 1
        %v3460 = vsel %vm1567, %v3449, %v3459
        %v3461 = vrot.slane %v3174, 1
        %v3462 = vsel %vm1567, %v3452, %v3461
        %v3463 = vrot.slane %v3175, 1
        %v3464 = vsel %vm1567, %v3455, %v3463
        %3473 = vmatprep.subr.mxu0 %v3178
        %3474 = vmatpush1.msra.mxu0 %v3177
        %3475 = vmatprep.subr.mxu0 %v3182
        %3476 = vmatpush1.msra.mxu0 %v3181
        %3477 = vmatprep.subr.mxu0 %v3186
        %3478 = vmatpush1.msra.mxu0 %v3185
        %3479 = vmatprep.subr.mxu0 %v3190
        %3480 = vmatpush1.msra.mxu0 %v3189
        %3481 = vmatprep.subr.mxu0 %v3194
        %3482 = vmatpush1.msra.mxu0 %v3193
        %3483 = vmatprep.subr.mxu0 %v3198
        %3484 = vmatpush1.msra.mxu0 %v3197
        %3485 = vmatprep.subr.mxu0 %v3202
        %3486 = vmatpush1.msra.mxu0 %v3201
        %3487 = vmatprep.subr.mxu0 %v3206
        %3488 = vmatpush1.msra.mxu0 %v3205
        %3489 = vmatprep.subr.mxu0 %v3210
        %3490 = vmatpush1.msra.mxu0 %v3209
        %3491 = vmatprep.subr.mxu0 %v3214
        %3492 = vmatpush1.msra.mxu0 %v3213
        %3493 = vmatprep.subr.mxu0 %v3218
        %3494 = vmatpush1.msra.mxu0 %v3217
        %3495 = vmatprep.subr.mxu0 %v3222
        %3496 = vmatpush1.msra.mxu0 %v3221
        %3497 = vmatprep.subr.mxu0 %v3226
        %3498 = vmatpush1.msra.mxu0 %v3225
        %3499 = vmatprep.subr.mxu0 %v3230
        %3500 = vmatpush1.msra.mxu0 %v3229
        %3501 = vmatprep.subr.mxu0 %v3234
        %3502 = vmatpush1.msra.mxu0 %v3233
        %3503 = vmatprep.subr.mxu0 %v3238
        %3504 = vmatpush1.msra.mxu0 %v3237
        %3505 = vmatprep.subr.mxu0 %v3242
        %3506 = vmatpush1.msra.mxu0 %v3241
        %3507 = vmatprep.subr.mxu0 %v3246
        %3508 = vmatpush1.msra.mxu0 %v3245
        %3509 = vmatprep.subr.mxu0 %v3250
        %3510 = vmatpush1.msra.mxu0 %v3249
        %3511 = vmatprep.subr.mxu0 %v3254
        %3512 = vmatpush1.msra.mxu0 %v3253
        %3513 = vmatprep.subr.mxu0 %v3258
        %3514 = vmatpush1.msra.mxu0 %v3257
        %3515 = vmatprep.subr.mxu0 %v3262
        %3516 = vmatpush1.msra.mxu0 %v3261
        %3517 = vmatprep.subr.mxu0 %v3266
        %3518 = vmatpush1.msra.mxu0 %v3265
        %3519 = vmatprep.subr.mxu0 %v3270
        %3520 = vmatpush1.msra.mxu0 %v3269
        %3521 = vmatprep.subr.mxu0 %v3274
        %3522 = vmatpush1.msra.mxu0 %v3273
        %3523 = vmatprep.subr.mxu0 %v3278
        %3524 = vmatpush1.msra.mxu0 %v3277
        %3525 = vmatprep.subr.mxu0 %v3282
        %3526 = vmatpush1.msra.mxu0 %v3281
        %3527 = vmatprep.subr.mxu0 %v3286
        %3528 = vmatpush1.msra.mxu0 %v3285
        %3529 = vmatprep.subr.mxu0 %v3290
        %3530 = vmatpush1.msra.mxu0 %v3289
        %3531 = vmatprep.subr.mxu0 %v3294
        %3532 = vmatpush1.msra.mxu0 %v3293
        %3533 = vmatprep.subr.mxu0 %v3298
        %3534 = vmatpush1.msra.mxu0 %v3297
        %3535 = vmatprep.subr.mxu0 %v3302
        %3536 = vmatpush1.msra.mxu0 %v3301
        %3537 = vmatprep.mubr.f32.mxu0 %v3450
        %3538 = vmatmul.mubr.f32.gmra.mrb[0].mxu0 %v3447
        %v3539 = vpop.f32.mrb[0].mxu0
        %v3540 = vadd.f32 0.0, %v3539
        %v3541 = vpop.f32.mrb[0].mxu0
        %v3542 = vadd.f32 0.0, %v3541
        %3543 = vmatprep.mubr.f32.mxu0 %v3460
        %3544 = vmatmul.mubr.f32.gmra.mrb[0].mxu0 %v3458
        %v3545 = vpop.f32.mrb[0].mxu0
        %v3546 = vadd.f32 0.0, %v3545
        %v3547 = vpop.f32.mrb[0].mxu0
        %v3548 = vadd.f32 0.0, %v3547
        %3549 = vdwg.mxu0
        %3550 = vmatprep.subr.mxu0 %v3306
        %3551 = vmatpush1.msra.mxu0 %v3305
        %3552 = vmatprep.subr.mxu0 %v3310
        %3553 = vmatpush1.msra.mxu0 %v3309
        %3554 = vmatprep.subr.mxu0 %v3314
        %3555 = vmatpush1.msra.mxu0 %v3313
        %3556 = vmatprep.subr.mxu0 %v3318
        %3557 = vmatpush1.msra.mxu0 %v3317
        %3558 = vmatprep.subr.mxu0 %v3322
        %3559 = vmatpush1.msra.mxu0 %v3321
        %3560 = vmatprep.subr.mxu0 %v3326
        %3561 = vmatpush1.msra.mxu0 %v3325
        %3562 = vmatprep.subr.mxu0 %v3330
        %3563 = vmatpush1.msra.mxu0 %v3329
        %3564 = vmatprep.subr.mxu0 %v3334
        %3565 = vmatpush1.msra.mxu0 %v3333
        %3566 = vmatprep.subr.mxu0 %v3338
        %3567 = vmatpush1.msra.mxu0 %v3337
        %3568 = vmatprep.subr.mxu0 %v3342
        %3569 = vmatpush1.msra.mxu0 %v3341
        %3570 = vmatprep.subr.mxu0 %v3346
        %3571 = vmatpush1.msra.mxu0 %v3345
        %3572 = vmatprep.subr.mxu0 %v3350
        %3573 = vmatpush1.msra.mxu0 %v3349
        %3574 = vmatprep.subr.mxu0 %v3354
        %3575 = vmatpush1.msra.mxu0 %v3353
        %3576 = vmatprep.subr.mxu0 %v3358
        %3577 = vmatpush1.msra.mxu0 %v3357
        %3578 = vmatprep.subr.mxu0 %v3362
        %3579 = vmatpush1.msra.mxu0 %v3361
        %3580 = vmatprep.subr.mxu0 %v3366
        %3581 = vmatpush1.msra.mxu0 %v3365
        %3582 = vmatprep.subr.mxu0 %v3370
        %3583 = vmatpush1.msra.mxu0 %v3369
        %3584 = vmatprep.subr.mxu0 %v3374
        %3585 = vmatpush1.msra.mxu0 %v3373
        %3586 = vmatprep.subr.mxu0 %v3378
        %3587 = vmatpush1.msra.mxu0 %v3377
        %3588 = vmatprep.subr.mxu0 %v3382
        %3589 = vmatpush1.msra.mxu0 %v3381
        %3590 = vmatprep.subr.mxu0 %v3386
        %3591 = vmatpush1.msra.mxu0 %v3385
        %3592 = vmatprep.subr.mxu0 %v3390
        %3593 = vmatpush1.msra.mxu0 %v3389
        %3594 = vmatprep.subr.mxu0 %v3394
        %3595 = vmatpush1.msra.mxu0 %v3393
        %3596 = vmatprep.subr.mxu0 %v3398
        %3597 = vmatpush1.msra.mxu0 %v3397
        %3598 = vmatprep.subr.mxu0 %v3402
        %3599 = vmatpush1.msra.mxu0 %v3401
        %3600 = vmatprep.subr.mxu0 %v3406
        %3601 = vmatpush1.msra.mxu0 %v3405
        %3602 = vmatprep.subr.mxu0 %v3410
        %3603 = vmatpush1.msra.mxu0 %v3409
        %3604 = vmatprep.subr.mxu0 %v3414
        %3605 = vmatpush1.msra.mxu0 %v3413
        %3606 = vmatprep.subr.mxu0 %v3418
        %3607 = vmatpush1.msra.mxu0 %v3417
        %3608 = vmatprep.subr.mxu0 %v3422
        %3609 = vmatpush1.msra.mxu0 %v3421
        %3610 = vmatprep.subr.mxu0 %v3426
        %3611 = vmatpush1.msra.mxu0 %v3425
        %3612 = vmatprep.subr.mxu0 %v3430
        %3613 = vmatpush1.msra.mxu0 %v3429
        %3614 = vmatprep.mubr.f32.mxu0 %v3456
        %3615 = vmatmul.mubr.f32.gmra.mrb[0].mxu0 %v3453
        %v3616 = vpop.f32.mrb[0].mxu0
        %v3617 = vadd.f32 %v3540, %v3616
        %v3618 = vpop.f32.mrb[0].mxu0
        %v3619 = vadd.f32 %v3542, %v3618
        %3620 = vmatprep.mubr.f32.mxu0 %v3464
        %3621 = vmatmul.mubr.f32.gmra.mrb[0].mxu0 %v3462
        %v3622 = vpop.f32.mrb[0].mxu0
        %v3623 = vadd.f32 %v3546, %v3622
        %v3624 = vpop.f32.mrb[0].mxu0
        %v3625 = vadd.f32 %v3548, %v3624
        %3626 = vdwg.mxu0
        %3627 = vmatprep.subr.mxu0 %v3180
        %3628 = vmatpush1.msra.mxu0 %v3179
        %3629 = vmatprep.subr.mxu0 %v3184
        %3630 = vmatpush1.msra.mxu0 %v3183
        %3631 = vmatprep.subr.mxu0 %v3188
        %3632 = vmatpush1.msra.mxu0 %v3187
        %3633 = vmatprep.subr.mxu0 %v3192
        %3634 = vmatpush1.msra.mxu0 %v3191
        %3635 = vmatprep.subr.mxu0 %v3196
        %3636 = vmatpush1.msra.mxu0 %v3195
        %3637 = vmatprep.subr.mxu0 %v3200
        %3638 = vmatpush1.msra.mxu0 %v3199
        %3639 = vmatprep.subr.mxu0 %v3204
        %3640 = vmatpush1.msra.mxu0 %v3203
        %3641 = vmatprep.subr.mxu0 %v3208
        %3642 = vmatpush1.msra.mxu0 %v3207
        %3643 = vmatprep.subr.mxu0 %v3212
        %3644 = vmatpush1.msra.mxu0 %v3211
        %3645 = vmatprep.subr.mxu0 %v3216
        %3646 = vmatpush1.msra.mxu0 %v3215
        %3647 = vmatprep.subr.mxu0 %v3220
        %3648 = vmatpush1.msra.mxu0 %v3219
        %3649 = vmatprep.subr.mxu0 %v3224
        %3650 = vmatpush1.msra.mxu0 %v3223
        %3651 = vmatprep.subr.mxu0 %v3228
        %3652 = vmatpush1.msra.mxu0 %v3227
        %3653 = vmatprep.subr.mxu0 %v3232
        %3654 = vmatpush1.msra.mxu0 %v3231
        %3655 = vmatprep.subr.mxu0 %v3236
        %3656 = vmatpush1.msra.mxu0 %v3235
        %3657 = vmatprep.subr.mxu0 %v3240
        %3658 = vmatpush1.msra.mxu0 %v3239
        %3659 = vmatprep.subr.mxu0 %v3244
        %3660 = vmatpush1.msra.mxu0 %v3243
        %3661 = vmatprep.subr.mxu0 %v3248
        %3662 = vmatpush1.msra.mxu0 %v3247
        %3663 = vmatprep.subr.mxu0 %v3252
        %3664 = vmatpush1.msra.mxu0 %v3251
        %3665 = vmatprep.subr.mxu0 %v3256
        %3666 = vmatpush1.msra.mxu0 %v3255
        %3667 = vmatprep.subr.mxu0 %v3260
        %3668 = vmatpush1.msra.mxu0 %v3259
        %3669 = vmatprep.subr.mxu0 %v3264
        %3670 = vmatpush1.msra.mxu0 %v3263
        %3671 = vmatprep.subr.mxu0 %v3268
        %3672 = vmatpush1.msra.mxu0 %v3267
        %3673 = vmatprep.subr.mxu0 %v3272
        %3674 = vmatpush1.msra.mxu0 %v3271
        %3675 = vmatprep.subr.mxu0 %v3276
        %3676 = vmatpush1.msra.mxu0 %v3275
        %3677 = vmatprep.subr.mxu0 %v3280
        %3678 = vmatpush1.msra.mxu0 %v3279
        %3679 = vmatprep.subr.mxu0 %v3284
        %3680 = vmatpush1.msra.mxu0 %v3283
        %3681 = vmatprep.subr.mxu0 %v3288
        %3682 = vmatpush1.msra.mxu0 %v3287
        %3683 = vmatprep.subr.mxu0 %v3292
        %3684 = vmatpush1.msra.mxu0 %v3291
        %3685 = vmatprep.subr.mxu0 %v3296
        %3686 = vmatpush1.msra.mxu0 %v3295
        %3687 = vmatprep.subr.mxu0 %v3300
        %3688 = vmatpush1.msra.mxu0 %v3299
        %3689 = vmatprep.subr.mxu0 %v3304
        %3690 = vmatpush1.msra.mxu0 %v3303
        %3691 = vmatprep.mubr.f32.mxu0 %v3450
        %3692 = vmatmul.mubr.f32.gmra.mrb[0].mxu0 %v3447
        %v3693 = vpop.f32.mrb[0].mxu0
        %v3694 = vadd.f32 0.0, %v3693
        %v3695 = vpop.f32.mrb[0].mxu0
        %v3696 = vadd.f32 0.0, %v3695
        %3697 = vmatprep.mubr.f32.mxu0 %v3460
        %3698 = vmatmul.mubr.f32.gmra.mrb[0].mxu0 %v3458
        %v3699 = vpop.f32.mrb[0].mxu0
        %v3700 = vadd.f32 0.0, %v3699
        %v3701 = vpop.f32.mrb[0].mxu0
        %v3702 = vadd.f32 0.0, %v3701
        %3703 = vdwg.mxu0
        %3704 = vmatprep.subr.mxu0 %v3308
        %3705 = vmatpush1.msra.mxu0 %v3307
        %3706 = vmatprep.subr.mxu0 %v3312
        %3707 = vmatpush1.msra.mxu0 %v3311
        %3708 = vmatprep.subr.mxu0 %v3316
        %3709 = vmatpush1.msra.mxu0 %v3315
        %3710 = vmatprep.subr.mxu0 %v3320
        %3711 = vmatpush1.msra.mxu0 %v3319
        %3712 = vmatprep.subr.mxu0 %v3324
        %3713 = vmatpush1.msra.mxu0 %v3323
        %3714 = vmatprep.subr.mxu0 %v3328
        %3715 = vmatpush1.msra.mxu0 %v3327
        %3716 = vmatprep.subr.mxu0 %v3332
        %3717 = vmatpush1.msra.mxu0 %v3331
        %3718 = vmatprep.subr.mxu0 %v3336
        %3719 = vmatpush1.msra.mxu0 %v3335
        %3720 = vmatprep.subr.mxu0 %v3340
        %3721 = vmatpush1.msra.mxu0 %v3339
        %3722 = vmatprep.subr.mxu0 %v3344
        %3723 = vmatpush1.msra.mxu0 %v3343
        %3724 = vmatprep.subr.mxu0 %v3348
        %3725 = vmatpush1.msra.mxu0 %v3347
        %3726 = vmatprep.subr.mxu0 %v3352
        %3727 = vmatpush1.msra.mxu0 %v3351
        %3728 = vmatprep.subr.mxu0 %v3356
        %3729 = vmatpush1.msra.mxu0 %v3355
        %3730 = vmatprep.subr.mxu0 %v3360
        %3731 = vmatpush1.msra.mxu0 %v3359
        %3732 = vmatprep.subr.mxu0 %v3364
        %3733 = vmatpush1.msra.mxu0 %v3363
        %3734 = vmatprep.subr.mxu0 %v3368
        %3735 = vmatpush1.msra.mxu0 %v3367
        %3736 = vmatprep.subr.mxu0 %v3372
        %3737 = vmatpush1.msra.mxu0 %v3371
        %3738 = vmatprep.subr.mxu0 %v3376
        %3739 = vmatpush1.msra.mxu0 %v3375
        %3740 = vmatprep.subr.mxu0 %v3380
        %3741 = vmatpush1.msra.mxu0 %v3379
        %3742 = vmatprep.subr.mxu0 %v3384
        %3743 = vmatpush1.msra.mxu0 %v3383
        %3744 = vmatprep.subr.mxu0 %v3388
        %3745 = vmatpush1.msra.mxu0 %v3387
        %3746 = vmatprep.subr.mxu0 %v3392
        %3747 = vmatpush1.msra.mxu0 %v3391
        %3748 = vmatprep.subr.mxu0 %v3396
        %3749 = vmatpush1.msra.mxu0 %v3395
        %3750 = vmatprep.subr.mxu0 %v3400
        %3751 = vmatpush1.msra.mxu0 %v3399
        %3752 = vmatprep.subr.mxu0 %v3404
        %3753 = vmatpush1.msra.mxu0 %v3403
        %3754 = vmatprep.subr.mxu0 %v3408
        %3755 = vmatpush1.msra.mxu0 %v3407
        %3756 = vmatprep.subr.mxu0 %v3412
        %3757 = vmatpush1.msra.mxu0 %v3411
        %3758 = vmatprep.subr.mxu0 %v3416
        %3759 = vmatpush1.msra.mxu0 %v3415
        %3760 = vmatprep.subr.mxu0 %v3420
        %3761 = vmatpush1.msra.mxu0 %v3419
        %3762 = vmatprep.subr.mxu0 %v3424
        %3763 = vmatpush1.msra.mxu0 %v3423
        %3764 = vmatprep.subr.mxu0 %v3428
        %3765 = vmatpush1.msra.mxu0 %v3427
        %3766 = vmatprep.subr.mxu0 %v3432
        %3767 = vmatpush1.msra.mxu0 %v3431
        %3768 = vmatprep.mubr.f32.mxu0 %v3456
        %3769 = vmatmul.mubr.f32.gmra.mrb[0].mxu0 %v3453
        %v3770 = vpop.f32.mrb[0].mxu0
        %v3771 = vadd.f32 %v3694, %v3770
        %v3772 = vpop.f32.mrb[0].mxu0
        %v3773 = vadd.f32 %v3696, %v3772
        %3774 = vmatprep.mubr.f32.mxu0 %v3464
        %3775 = vmatmul.mubr.f32.gmra.mrb[0].mxu0 %v3462
        %v3776 = vpop.f32.mrb[0].mxu0
        %v3777 = vadd.f32 %v3700, %v3776
        %v3778 = vpop.f32.mrb[0].mxu0
        %v3779 = vadd.f32 %v3702, %v3778
        %3780 = vdwg.mxu0
        %3781 = vmatprep.subr.mxu0 %v2913
        %3782 = vmatpush1.msra.mxu0 %v2912
        %3783 = vmatprep.subr.mxu0 %v2917
        %3784 = vmatpush1.msra.mxu0 %v2916
        %3785 = vmatprep.subr.mxu0 %v2921
        %3786 = vmatpush1.msra.mxu0 %v2920
        %3787 = vmatprep.subr.mxu0 %v2925
        %3788 = vmatpush1.msra.mxu0 %v2924
        %3789 = vmatprep.subr.mxu0 %v2929
        %3790 = vmatpush1.msra.mxu0 %v2928
        %3791 = vmatprep.subr.mxu0 %v2933
        %3792 = vmatpush1.msra.mxu0 %v2932
        %3793 = vmatprep.subr.mxu0 %v2937
        %3794 = vmatpush1.msra.mxu0 %v2936
        %3795 = vmatprep.subr.mxu0 %v2941
        %3796 = vmatpush1.msra.mxu0 %v2940
        %3797 = vmatprep.subr.mxu0 %v2945
        %3798 = vmatpush1.msra.mxu0 %v2944
        %3799 = vmatprep.subr.mxu0 %v2949
        %3800 = vmatpush1.msra.mxu0 %v2948
        %3801 = vmatprep.subr.mxu0 %v2953
        %3802 = vmatpush1.msra.mxu0 %v2952
        %3803 = vmatprep.subr.mxu0 %v2957
        %3804 = vmatpush1.msra.mxu0 %v2956
        %3805 = vmatprep.subr.mxu0 %v2961
        %3806 = vmatpush1.msra.mxu0 %v2960
        %3807 = vmatprep.subr.mxu0 %v2965
        %3808 = vmatpush1.msra.mxu0 %v2964
        %3809 = vmatprep.subr.mxu0 %v2969
        %3810 = vmatpush1.msra.mxu0 %v2968
        %3811 = vmatprep.subr.mxu0 %v2973
        %3812 = vmatpush1.msra.mxu0 %v2972
        %3813 = vmatprep.subr.mxu0 %v2977
        %3814 = vmatpush1.msra.mxu0 %v2976
        %3815 = vmatprep.subr.mxu0 %v2981
        %3816 = vmatpush1.msra.mxu0 %v2980
        %3817 = vmatprep.subr.mxu0 %v2985
        %3818 = vmatpush1.msra.mxu0 %v2984
        %3819 = vmatprep.subr.mxu0 %v2989
        %3820 = vmatpush1.msra.mxu0 %v2988
        %3821 = vmatprep.subr.mxu0 %v2993
        %3822 = vmatpush1.msra.mxu0 %v2992
        %3823 = vmatprep.subr.mxu0 %v2997
        %3824 = vmatpush1.msra.mxu0 %v2996
        %3825 = vmatprep.subr.mxu0 %v3001
        %3826 = vmatpush1.msra.mxu0 %v3000
        %3827 = vmatprep.subr.mxu0 %v3005
        %3828 = vmatpush1.msra.mxu0 %v3004
        %3829 = vmatprep.subr.mxu0 %v3009
        %3830 = vmatpush1.msra.mxu0 %v3008
        %3831 = vmatprep.subr.mxu0 %v3013
        %3832 = vmatpush1.msra.mxu0 %v3012
        %3833 = vmatprep.subr.mxu0 %v3017
        %3834 = vmatpush1.msra.mxu0 %v3016
        %3835 = vmatprep.subr.mxu0 %v3021
        %3836 = vmatpush1.msra.mxu0 %v3020
        %3837 = vmatprep.subr.mxu0 %v3025
        %3838 = vmatpush1.msra.mxu0 %v3024
        %3839 = vmatprep.subr.mxu0 %v3029
        %3840 = vmatpush1.msra.mxu0 %v3028
        %3841 = vmatprep.subr.mxu0 %v3033
        %3842 = vmatpush1.msra.mxu0 %v3032
        %3843 = vmatprep.subr.mxu0 %v3037
        %3844 = vmatpush1.msra.mxu0 %v3036
        %3845 = vmatprep.mubr.f32.mxu0 %v2905
        %3846 = vmatmul.mubr.f32.gmra.mrb[0].mxu0 %v2904
        %v3847 = vpop.f32.mrb[0].mxu0
        %v3848 = vadd.f32 %v3617, %v3847
        %v3849 = vpop.f32.mrb[0].mxu0
        %v3850 = vadd.f32 %v3619, %v3849
        %3851 = vmatprep.mubr.f32.mxu0 %v2909
        %3852 = vmatmul.mubr.f32.gmra.mrb[0].mxu0 %v2908
        %v3853 = vpop.f32.mrb[0].mxu0
        %v3854 = vadd.f32 %v3623, %v3853
        %v3855 = vpop.f32.mrb[0].mxu0
        %v3856 = vadd.f32 %v3625, %v3855
        %3857 = vdwg.mxu0
        %3858 = vmatprep.subr.mxu0 %v3041
        %3859 = vmatpush1.msra.mxu0 %v3040
        %3860 = vmatprep.subr.mxu0 %v3045
        %3861 = vmatpush1.msra.mxu0 %v3044
        %3862 = vmatprep.subr.mxu0 %v3049
        %3863 = vmatpush1.msra.mxu0 %v3048
        %3864 = vmatprep.subr.mxu0 %v3053
        %3865 = vmatpush1.msra.mxu0 %v3052
        %3866 = vmatprep.subr.mxu0 %v3057
        %3867 = vmatpush1.msra.mxu0 %v3056
        %3868 = vmatprep.subr.mxu0 %v3061
        %3869 = vmatpush1.msra.mxu0 %v3060
        %3870 = vmatprep.subr.mxu0 %v3065
        %3871 = vmatpush1.msra.mxu0 %v3064
        %3872 = vmatprep.subr.mxu0 %v3069
        %3873 = vmatpush1.msra.mxu0 %v3068
        %3874 = vmatprep.subr.mxu0 %v3073
        %3875 = vmatpush1.msra.mxu0 %v3072
        %3876 = vmatprep.subr.mxu0 %v3077
        %3877 = vmatpush1.msra.mxu0 %v3076
        %3878 = vmatprep.subr.mxu0 %v3081
        %3879 = vmatpush1.msra.mxu0 %v3080
        %3880 = vmatprep.subr.mxu0 %v3085
        %3881 = vmatpush1.msra.mxu0 %v3084
        %3882 = vmatprep.subr.mxu0 %v3089
        %3883 = vmatpush1.msra.mxu0 %v3088
        %3884 = vmatprep.subr.mxu0 %v3093
        %3885 = vmatpush1.msra.mxu0 %v3092
        %3886 = vmatprep.subr.mxu0 %v3097
        %3887 = vmatpush1.msra.mxu0 %v3096
        %3888 = vmatprep.subr.mxu0 %v3101
        %3889 = vmatpush1.msra.mxu0 %v3100
        %3890 = vmatprep.subr.mxu0 %v3105
        %3891 = vmatpush1.msra.mxu0 %v3104
        %3892 = vmatprep.subr.mxu0 %v3109
        %3893 = vmatpush1.msra.mxu0 %v3108
        %3894 = vmatprep.subr.mxu0 %v3113
        %3895 = vmatpush1.msra.mxu0 %v3112
        %3896 = vmatprep.subr.mxu0 %v3117
        %3897 = vmatpush1.msra.mxu0 %v3116
        %3898 = vmatprep.subr.mxu0 %v3121
        %3899 = vmatpush1.msra.mxu0 %v3120
        %3900 = vmatprep.subr.mxu0 %v3125
        %3901 = vmatpush1.msra.mxu0 %v3124
        %3902 = vmatprep.subr.mxu0 %v3129
        %3903 = vmatpush1.msra.mxu0 %v3128
        %3904 = vmatprep.subr.mxu0 %v3133
        %3905 = vmatpush1.msra.mxu0 %v3132
        %3906 = vmatprep.subr.mxu0 %v3137
        %3907 = vmatpush1.msra.mxu0 %v3136
        %3908 = vmatprep.subr.mxu0 %v3141
        %3909 = vmatpush1.msra.mxu0 %v3140
        %3910 = vmatprep.subr.mxu0 %v3145
        %3911 = vmatpush1.msra.mxu0 %v3144
        %3912 = vmatprep.subr.mxu0 %v3149
        %3913 = vmatpush1.msra.mxu0 %v3148
        %3914 = vmatprep.subr.mxu0 %v3153
        %3915 = vmatpush1.msra.mxu0 %v3152
        %3916 = vmatprep.subr.mxu0 %v3157
        %3917 = vmatpush1.msra.mxu0 %v3156
        %3918 = vmatprep.subr.mxu0 %v3161
        %3919 = vmatpush1.msra.mxu0 %v3160
        %3920 = vmatprep.subr.mxu0 %v3165
        %3921 = vmatpush1.msra.mxu0 %v3164
        %3922 = vmatprep.mubr.f32.mxu0 %v2907
        %3923 = vmatmul.mubr.f32.gmra.mrb[0].mxu0 %v2906
        %v3924 = vpop.f32.mrb[0].mxu0
        %v3925 = vadd.f32 %v3848, %v3924
        %v3926 = vpop.f32.mrb[0].mxu0
        %v3927 = vadd.f32 %v3850, %v3926
        %3928 = vmatprep.mubr.f32.mxu0 %v2911
        %3929 = vmatmul.mubr.f32.gmra.mrb[0].mxu0 %v2910
        %v3930 = vpop.f32.mrb[0].mxu0
        %v3931 = vadd.f32 %v3854, %v3930
        %v3932 = vpop.f32.mrb[0].mxu0
        %v3933 = vadd.f32 %v3856, %v3932
        %3934 = vdwg.mxu0
        %3935 = vmatprep.subr.mxu0 %v2915
        %3936 = vmatpush1.msra.mxu0 %v2914
        %3937 = vmatprep.subr.mxu0 %v2919
        %3938 = vmatpush1.msra.mxu0 %v2918
        %3939 = vmatprep.subr.mxu0 %v2923
        %3940 = vmatpush1.msra.mxu0 %v2922
        %3941 = vmatprep.subr.mxu0 %v2927
        %3942 = vmatpush1.msra.mxu0 %v2926
        %3943 = vmatprep.subr.mxu0 %v2931
        %3944 = vmatpush1.msra.mxu0 %v2930
        %3945 = vmatprep.subr.mxu0 %v2935
        %3946 = vmatpush1.msra.mxu0 %v2934
        %3947 = vmatprep.subr.mxu0 %v2939
        %3948 = vmatpush1.msra.mxu0 %v2938
        %3949 = vmatprep.subr.mxu0 %v2943
        %3950 = vmatpush1.msra.mxu0 %v2942
        %3951 = vmatprep.subr.mxu0 %v2947
        %3952 = vmatpush1.msra.mxu0 %v2946
        %3953 = vmatprep.subr.mxu0 %v2951
        %3954 = vmatpush1.msra.mxu0 %v2950
        %3955 = vmatprep.subr.mxu0 %v2955
        %3956 = vmatpush1.msra.mxu0 %v2954
        %3957 = vmatprep.subr.mxu0 %v2959
        %3958 = vmatpush1.msra.mxu0 %v2958
        %3959 = vmatprep.subr.mxu0 %v2963
        %3960 = vmatpush1.msra.mxu0 %v2962
        %3961 = vmatprep.subr.mxu0 %v2967
        %3962 = vmatpush1.msra.mxu0 %v2966
        %3963 = vmatprep.subr.mxu0 %v2971
        %3964 = vmatpush1.msra.mxu0 %v2970
        %3965 = vmatprep.subr.mxu0 %v2975
        %3966 = vmatpush1.msra.mxu0 %v2974
        %3967 = vmatprep.subr.mxu0 %v2979
        %3968 = vmatpush1.msra.mxu0 %v2978
        %3969 = vmatprep.subr.mxu0 %v2983
        %3970 = vmatpush1.msra.mxu0 %v2982
        %3971 = vmatprep.subr.mxu0 %v2987
        %3972 = vmatpush1.msra.mxu0 %v2986
        %3973 = vmatprep.subr.mxu0 %v2991
        %3974 = vmatpush1.msra.mxu0 %v2990
        %3975 = vmatprep.subr.mxu0 %v2995
        %3976 = vmatpush1.msra.mxu0 %v2994
        %3977 = vmatprep.subr.mxu0 %v2999
        %3978 = vmatpush1.msra.mxu0 %v2998
        %3979 = vmatprep.subr.mxu0 %v3003
        %3980 = vmatpush1.msra.mxu0 %v3002
        %3981 = vmatprep.subr.mxu0 %v3007
        %3982 = vmatpush1.msra.mxu0 %v3006
        %3983 = vmatprep.subr.mxu0 %v3011
        %3984 = vmatpush1.msra.mxu0 %v3010
        %3985 = vmatprep.subr.mxu0 %v3015
        %3986 = vmatpush1.msra.mxu0 %v3014
        %3987 = vmatprep.subr.mxu0 %v3019
        %3988 = vmatpush1.msra.mxu0 %v3018
        %3989 = vmatprep.subr.mxu0 %v3023
        %3990 = vmatpush1.msra.mxu0 %v3022
        %3991 = vmatprep.subr.mxu0 %v3027
        %3992 = vmatpush1.msra.mxu0 %v3026
        %3993 = vmatprep.subr.mxu0 %v3031
        %3994 = vmatpush1.msra.mxu0 %v3030
        %3995 = vmatprep.subr.mxu0 %v3035
        %3996 = vmatpush1.msra.mxu0 %v3034
        %3997 = vmatprep.subr.mxu0 %v3039
        %3998 = vmatpush1.msra.mxu0 %v3038
        %3999 = vmatprep.mubr.f32.mxu0 %v2905
        %4000 = vmatmul.mubr.f32.gmra.mrb[0].mxu0 %v2904
        %v4001 = vpop.f32.mrb[0].mxu0
        %v4002 = vadd.f32 %v3771, %v4001
        %v4003 = vpop.f32.mrb[0].mxu0
        %v4004 = vadd.f32 %v3773, %v4003
        %4005 = vmatprep.mubr.f32.mxu0 %v2909
        %4006 = vmatmul.mubr.f32.gmra.mrb[0].mxu0 %v2908
        %v4007 = vpop.f32.mrb[0].mxu0
        %v4008 = vadd.f32 %v3777, %v4007
        %v4009 = vpop.f32.mrb[0].mxu0
        %v4010 = vadd.f32 %v3779, %v4009
        %4011 = vdwg.mxu0
        %4012 = vmatprep.subr.mxu0 %v3043
        %4013 = vmatpush1.msra.mxu0 %v3042
        %4014 = vmatprep.subr.mxu0 %v3047
        %4015 = vmatpush1.msra.mxu0 %v3046
        %4016 = vmatprep.subr.mxu0 %v3051
        %4017 = vmatpush1.msra.mxu0 %v3050
        %4018 = vmatprep.subr.mxu0 %v3055
        %4019 = vmatpush1.msra.mxu0 %v3054
        %4020 = vmatprep.subr.mxu0 %v3059
        %4021 = vmatpush1.msra.mxu0 %v3058
        %4022 = vmatprep.subr.mxu0 %v3063
        %4023 = vmatpush1.msra.mxu0 %v3062
        %4024 = vmatprep.subr.mxu0 %v3067
        %4025 = vmatpush1.msra.mxu0 %v3066
        %4026 = vmatprep.subr.mxu0 %v3071
        %4027 = vmatpush1.msra.mxu0 %v3070
        %4028 = vmatprep.subr.mxu0 %v3075
        %4029 = vmatpush1.msra.mxu0 %v3074
        %4030 = vmatprep.subr.mxu0 %v3079
        %4031 = vmatpush1.msra.mxu0 %v3078
        %4032 = vmatprep.subr.mxu0 %v3083
        %4033 = vmatpush1.msra.mxu0 %v3082
        %4034 = vmatprep.subr.mxu0 %v3087
        %4035 = vmatpush1.msra.mxu0 %v3086
        %4036 = vmatprep.subr.mxu0 %v3091
        %4037 = vmatpush1.msra.mxu0 %v3090
        %4038 = vmatprep.subr.mxu0 %v3095
        %4039 = vmatpush1.msra.mxu0 %v3094
        %4040 = vmatprep.subr.mxu0 %v3099
        %4041 = vmatpush1.msra.mxu0 %v3098
        %4042 = vmatprep.subr.mxu0 %v3103
        %4043 = vmatpush1.msra.mxu0 %v3102
        %4044 = vmatprep.subr.mxu0 %v3107
        %4045 = vmatpush1.msra.mxu0 %v3106
        %4046 = vmatprep.subr.mxu0 %v3111
        %4047 = vmatpush1.msra.mxu0 %v3110
        %4048 = vmatprep.subr.mxu0 %v3115
        %4049 = vmatpush1.msra.mxu0 %v3114
        %4050 = vmatprep.subr.mxu0 %v3119
        %4051 = vmatpush1.msra.mxu0 %v3118
        %4052 = vmatprep.subr.mxu0 %v3123
        %4053 = vmatpush1.msra.mxu0 %v3122
        %4054 = vmatprep.subr.mxu0 %v3127
        %4055 = vmatpush1.msra.mxu0 %v3126
        %4056 = vmatprep.subr.mxu0 %v3131
        %4057 = vmatpush1.msra.mxu0 %v3130
        %4058 = vmatprep.subr.mxu0 %v3135
        %4059 = vmatpush1.msra.mxu0 %v3134
        %4060 = vmatprep.subr.mxu0 %v3139
        %4061 = vmatpush1.msra.mxu0 %v3138
        %4062 = vmatprep.subr.mxu0 %v3143
        %4063 = vmatpush1.msra.mxu0 %v3142
        %4064 = vmatprep.subr.mxu0 %v3147
        %4065 = vmatpush1.msra.mxu0 %v3146
        %4066 = vmatprep.subr.mxu0 %v3151
        %4067 = vmatpush1.msra.mxu0 %v3150
        %4068 = vmatprep.subr.mxu0 %v3155
        %4069 = vmatpush1.msra.mxu0 %v3154
        %4070 = vmatprep.subr.mxu0 %v3159
        %4071 = vmatpush1.msra.mxu0 %v3158
        %4072 = vmatprep.subr.mxu0 %v3163
        %4073 = vmatpush1.msra.mxu0 %v3162
        %4074 = vmatprep.subr.mxu0 %v3167
        %4075 = vmatpush1.msra.mxu0 %v3166
        %4076 = vmatprep.mubr.f32.mxu0 %v2907
        %4077 = vmatmul.mubr.f32.gmra.mrb[0].mxu0 %v2906
        %v4078 = vpop.f32.mrb[0].mxu0
        %v4079 = vadd.f32 %v4002, %v4078
        %v4080 = vpop.f32.mrb[0].mxu0
        %v4081 = vadd.f32 %v4004, %v4080
        %4082 = vmatprep.mubr.f32.mxu0 %v2911
        %4083 = vmatmul.mubr.f32.gmra.mrb[0].mxu0 %v2910
        %v4084 = vpop.f32.mrb[0].mxu0
        %v4085 = vadd.f32 %v4008, %v4084
        %v4086 = vpop.f32.mrb[0].mxu0
        %v4087 = vadd.f32 %v4010, %v4086
        %4088 = vdwg.mxu0
        %v4089 = vld [vmem:[#allocation2] sm:$0xfc]
        %v4090 = vld [vmem:[#allocation2 + $0x8] sm:$0xfc]
        %v4091 = vld [vmem:[#allocation2 + $0x10] sm:$0xfc]
        %v4092 = vld [vmem:[#allocation2 + $0x18] sm:$0xfc]
        %v4093 = vld [vmem:[#allocation2 + $0x40] sm:$0x3]
        %v4094 = vld [vmem:[#allocation2 + $0x48] sm:$0x3]
        %v4095 = vld [vmem:[#allocation2 + $0x50] sm:$0x3]
        %v4096 = vld [vmem:[#allocation2 + $0x58] sm:$0x3]
        %s4097 = scalar_lea.vmem [#allocation12], 4096
        %v4098 = vld [vmem:[%s4097] sm:$0xff]
        %v4099 = vld [vmem:[%s4097 + $0x8] sm:$0xff]
        %v4100 = vld [vmem:[%s4097 + $0x10] sm:$0xff]
        %v4101 = vld [vmem:[%s4097 + $0x18] sm:$0xff]
        %v4102 = vld [vmem:[%s4097 + $0x20] sm:$0xff]
        %v4103 = vld [vmem:[%s4097 + $0x28] sm:$0xff]
        %v4104 = vld [vmem:[%s4097 + $0x30] sm:$0xff]
        %v4105 = vld [vmem:[%s4097 + $0x38] sm:$0xff]
        %v4106 = vld [vmem:[%s4097 + $0x40] sm:$0xff]
        %v4107 = vld [vmem:[%s4097 + $0x48] sm:$0xff]
        %v4108 = vld [vmem:[%s4097 + $0x50] sm:$0xff]
        %v4109 = vld [vmem:[%s4097 + $0x58] sm:$0xff]
        %v4110 = vld [vmem:[%s4097 + $0x60] sm:$0xff]
        %v4111 = vld [vmem:[%s4097 + $0x68] sm:$0xff]
        %v4112 = vld [vmem:[%s4097 + $0x70] sm:$0xff]
        %v4113 = vld [vmem:[%s4097 + $0x78] sm:$0xff]
        %v4114 = vld [vmem:[%s4097 + $0x80] sm:$0xff]
        %v4115 = vld [vmem:[%s4097 + $0x88] sm:$0xff]
        %v4116 = vld [vmem:[%s4097 + $0x90] sm:$0xff]
        %v4117 = vld [vmem:[%s4097 + $0x98] sm:$0xff]
        %v4118 = vld [vmem:[%s4097 + $0xa0] sm:$0xff]
        %v4119 = vld [vmem:[%s4097 + $0xa8] sm:$0xff]
        %v4120 = vld [vmem:[%s4097 + $0xb0] sm:$0xff]
        %v4121 = vld [vmem:[%s4097 + $0xb8] sm:$0xff]
        %v4122 = vld [vmem:[%s4097 + $0xc0] sm:$0xff]
        %v4123 = vld [vmem:[%s4097 + $0xc8] sm:$0xff]
        %v4124 = vld [vmem:[%s4097 + $0xd0] sm:$0xff]
        %v4125 = vld [vmem:[%s4097 + $0xd8] sm:$0xff]
        %v4126 = vld [vmem:[%s4097 + $0xe0] sm:$0xff]
        %v4127 = vld [vmem:[%s4097 + $0xe8] sm:$0xff]
        %v4128 = vld [vmem:[%s4097 + $0xf0] sm:$0xff]
        %v4129 = vld [vmem:[%s4097 + $0xf8] sm:$0xff]
        %v4130 = vld [vmem:[%s4097 + $0x100] sm:$0xff]
        %v4131 = vld [vmem:[%s4097 + $0x108] sm:$0xff]
        %v4132 = vld [vmem:[%s4097 + $0x110] sm:$0xff]
        %v4133 = vld [vmem:[%s4097 + $0x118] sm:$0xff]
        %v4134 = vld [vmem:[%s4097 + $0x120] sm:$0xff]
        %v4135 = vld [vmem:[%s4097 + $0x128] sm:$0xff]
        %v4136 = vld [vmem:[%s4097 + $0x130] sm:$0xff]
        %v4137 = vld [vmem:[%s4097 + $0x138] sm:$0xff]
        %v4138 = vld [vmem:[%s4097 + $0x140] sm:$0xff]
        %v4139 = vld [vmem:[%s4097 + $0x148] sm:$0xff]
        %v4140 = vld [vmem:[%s4097 + $0x150] sm:$0xff]
        %v4141 = vld [vmem:[%s4097 + $0x158] sm:$0xff]
        %v4142 = vld [vmem:[%s4097 + $0x160] sm:$0xff]
        %v4143 = vld [vmem:[%s4097 + $0x168] sm:$0xff]
        %v4144 = vld [vmem:[%s4097 + $0x170] sm:$0xff]
        %v4145 = vld [vmem:[%s4097 + $0x178] sm:$0xff]
        %v4146 = vld [vmem:[%s4097 + $0x180] sm:$0xff]
        %v4147 = vld [vmem:[%s4097 + $0x188] sm:$0xff]
        %v4148 = vld [vmem:[%s4097 + $0x190] sm:$0xff]
        %v4149 = vld [vmem:[%s4097 + $0x198] sm:$0xff]
        %v4150 = vld [vmem:[%s4097 + $0x1a0] sm:$0xff]
        %v4151 = vld [vmem:[%s4097 + $0x1a8] sm:$0xff]
        %v4152 = vld [vmem:[%s4097 + $0x1b0] sm:$0xff]
        %v4153 = vld [vmem:[%s4097 + $0x1b8] sm:$0xff]
        %v4154 = vld [vmem:[%s4097 + $0x1c0] sm:$0xff]
        %v4155 = vld [vmem:[%s4097 + $0x1c8] sm:$0xff]
        %v4156 = vld [vmem:[%s4097 + $0x1d0] sm:$0xff]
        %v4157 = vld [vmem:[%s4097 + $0x1d8] sm:$0xff]
        %v4158 = vld [vmem:[%s4097 + $0x1e0] sm:$0xff]
        %v4159 = vld [vmem:[%s4097 + $0x1e8] sm:$0xff]
        %v4160 = vld [vmem:[%s4097 + $0x1f0] sm:$0xff]
        %v4161 = vld [vmem:[%s4097 + $0x1f8] sm:$0xff]
        %v4162 = vld [vmem:[%s4097 + $0x200] sm:$0xff]
        %v4163 = vld [vmem:[%s4097 + $0x208] sm:$0xff]
        %v4164 = vld [vmem:[%s4097 + $0x210] sm:$0xff]
        %v4165 = vld [vmem:[%s4097 + $0x218] sm:$0xff]
        %v4166 = vld [vmem:[%s4097 + $0x220] sm:$0xff]
        %v4167 = vld [vmem:[%s4097 + $0x228] sm:$0xff]
        %v4168 = vld [vmem:[%s4097 + $0x230] sm:$0xff]
        %v4169 = vld [vmem:[%s4097 + $0x238] sm:$0xff]
        %v4170 = vld [vmem:[%s4097 + $0x240] sm:$0xff]
        %v4171 = vld [vmem:[%s4097 + $0x248] sm:$0xff]
        %v4172 = vld [vmem:[%s4097 + $0x250] sm:$0xff]
        %v4173 = vld [vmem:[%s4097 + $0x258] sm:$0xff]
        %v4174 = vld [vmem:[%s4097 + $0x260] sm:$0xff]
        %v4175 = vld [vmem:[%s4097 + $0x268] sm:$0xff]
        %v4176 = vld [vmem:[%s4097 + $0x270] sm:$0xff]
        %v4177 = vld [vmem:[%s4097 + $0x278] sm:$0xff]
        %v4178 = vld [vmem:[%s4097 + $0x280] sm:$0xff]
        %v4179 = vld [vmem:[%s4097 + $0x288] sm:$0xff]
        %v4180 = vld [vmem:[%s4097 + $0x290] sm:$0xff]
        %v4181 = vld [vmem:[%s4097 + $0x298] sm:$0xff]
        %v4182 = vld [vmem:[%s4097 + $0x2a0] sm:$0xff]
        %v4183 = vld [vmem:[%s4097 + $0x2a8] sm:$0xff]
        %v4184 = vld [vmem:[%s4097 + $0x2b0] sm:$0xff]
        %v4185 = vld [vmem:[%s4097 + $0x2b8] sm:$0xff]
        %v4186 = vld [vmem:[%s4097 + $0x2c0] sm:$0xff]
        %v4187 = vld [vmem:[%s4097 + $0x2c8] sm:$0xff]
        %v4188 = vld [vmem:[%s4097 + $0x2d0] sm:$0xff]
        %v4189 = vld [vmem:[%s4097 + $0x2d8] sm:$0xff]
        %v4190 = vld [vmem:[%s4097 + $0x2e0] sm:$0xff]
        %v4191 = vld [vmem:[%s4097 + $0x2e8] sm:$0xff]
        %v4192 = vld [vmem:[%s4097 + $0x2f0] sm:$0xff]
        %v4193 = vld [vmem:[%s4097 + $0x2f8] sm:$0xff]
        %v4194 = vld [vmem:[%s4097 + $0x300] sm:$0xff]
        %v4195 = vld [vmem:[%s4097 + $0x308] sm:$0xff]
        %v4196 = vld [vmem:[%s4097 + $0x310] sm:$0xff]
        %v4197 = vld [vmem:[%s4097 + $0x318] sm:$0xff]
        %v4198 = vld [vmem:[%s4097 + $0x320] sm:$0xff]
        %v4199 = vld [vmem:[%s4097 + $0x328] sm:$0xff]
        %v4200 = vld [vmem:[%s4097 + $0x330] sm:$0xff]
        %v4201 = vld [vmem:[%s4097 + $0x338] sm:$0xff]
        %v4202 = vld [vmem:[%s4097 + $0x340] sm:$0xff]
        %v4203 = vld [vmem:[%s4097 + $0x348] sm:$0xff]
        %v4204 = vld [vmem:[%s4097 + $0x350] sm:$0xff]
        %v4205 = vld [vmem:[%s4097 + $0x358] sm:$0xff]
        %v4206 = vld [vmem:[%s4097 + $0x360] sm:$0xff]
        %v4207 = vld [vmem:[%s4097 + $0x368] sm:$0xff]
        %v4208 = vld [vmem:[%s4097 + $0x370] sm:$0xff]
        %v4209 = vld [vmem:[%s4097 + $0x378] sm:$0xff]
        %v4210 = vld [vmem:[%s4097 + $0x380] sm:$0xff]
        %v4211 = vld [vmem:[%s4097 + $0x388] sm:$0xff]
        %v4212 = vld [vmem:[%s4097 + $0x390] sm:$0xff]
        %v4213 = vld [vmem:[%s4097 + $0x398] sm:$0xff]
        %v4214 = vld [vmem:[%s4097 + $0x3a0] sm:$0xff]
        %v4215 = vld [vmem:[%s4097 + $0x3a8] sm:$0xff]
        %v4216 = vld [vmem:[%s4097 + $0x3b0] sm:$0xff]
        %v4217 = vld [vmem:[%s4097 + $0x3b8] sm:$0xff]
        %v4218 = vld [vmem:[%s4097 + $0x3c0] sm:$0xff]
        %v4219 = vld [vmem:[%s4097 + $0x3c8] sm:$0xff]
        %v4220 = vld [vmem:[%s4097 + $0x3d0] sm:$0xff]
        %v4221 = vld [vmem:[%s4097 + $0x3d8] sm:$0xff]
        %v4222 = vld [vmem:[%s4097 + $0x3e0] sm:$0xff]
        %v4223 = vld [vmem:[%s4097 + $0x3e8] sm:$0xff]
        %v4224 = vld [vmem:[%s4097 + $0x3f0] sm:$0xff]
        %v4225 = vld [vmem:[%s4097 + $0x3f8] sm:$0xff]
        %v4226 = vld [vmem:[%s4097 + $0x400] sm:$0xff]
        %v4227 = vld [vmem:[%s4097 + $0x408] sm:$0xff]
        %v4228 = vld [vmem:[%s4097 + $0x410] sm:$0xff]
        %v4229 = vld [vmem:[%s4097 + $0x418] sm:$0xff]
        %v4230 = vld [vmem:[%s4097 + $0x420] sm:$0xff]
        %v4231 = vld [vmem:[%s4097 + $0x428] sm:$0xff]
        %v4232 = vld [vmem:[%s4097 + $0x430] sm:$0xff]
        %v4233 = vld [vmem:[%s4097 + $0x438] sm:$0xff]
        %v4234 = vld [vmem:[%s4097 + $0x440] sm:$0xff]
        %v4235 = vld [vmem:[%s4097 + $0x448] sm:$0xff]
        %v4236 = vld [vmem:[%s4097 + $0x450] sm:$0xff]
        %v4237 = vld [vmem:[%s4097 + $0x458] sm:$0xff]
        %v4238 = vld [vmem:[%s4097 + $0x460] sm:$0xff]
        %v4239 = vld [vmem:[%s4097 + $0x468] sm:$0xff]
        %v4240 = vld [vmem:[%s4097 + $0x470] sm:$0xff]
        %v4241 = vld [vmem:[%s4097 + $0x478] sm:$0xff]
        %v4242 = vld [vmem:[%s4097 + $0x480] sm:$0xff]
        %v4243 = vld [vmem:[%s4097 + $0x488] sm:$0xff]
        %v4244 = vld [vmem:[%s4097 + $0x490] sm:$0xff]
        %v4245 = vld [vmem:[%s4097 + $0x498] sm:$0xff]
        %v4246 = vld [vmem:[%s4097 + $0x4a0] sm:$0xff]
        %v4247 = vld [vmem:[%s4097 + $0x4a8] sm:$0xff]
        %v4248 = vld [vmem:[%s4097 + $0x4b0] sm:$0xff]
        %v4249 = vld [vmem:[%s4097 + $0x4b8] sm:$0xff]
        %v4250 = vld [vmem:[%s4097 + $0x4c0] sm:$0xff]
        %v4251 = vld [vmem:[%s4097 + $0x4c8] sm:$0xff]
        %v4252 = vld [vmem:[%s4097 + $0x4d0] sm:$0xff]
        %v4253 = vld [vmem:[%s4097 + $0x4d8] sm:$0xff]
        %v4254 = vld [vmem:[%s4097 + $0x4e0] sm:$0xff]
        %v4255 = vld [vmem:[%s4097 + $0x4e8] sm:$0xff]
        %v4256 = vld [vmem:[%s4097 + $0x4f0] sm:$0xff]
        %v4257 = vld [vmem:[%s4097 + $0x4f8] sm:$0xff]
        %v4258 = vld [vmem:[%s4097 + $0x500] sm:$0xff]
        %v4259 = vld [vmem:[%s4097 + $0x508] sm:$0xff]
        %v4260 = vld [vmem:[%s4097 + $0x510] sm:$0xff]
        %v4261 = vld [vmem:[%s4097 + $0x518] sm:$0xff]
        %v4262 = vld [vmem:[%s4097 + $0x520] sm:$0xff]
        %v4263 = vld [vmem:[%s4097 + $0x528] sm:$0xff]
        %v4264 = vld [vmem:[%s4097 + $0x530] sm:$0xff]
        %v4265 = vld [vmem:[%s4097 + $0x538] sm:$0xff]
        %v4266 = vld [vmem:[%s4097 + $0x540] sm:$0xff]
        %v4267 = vld [vmem:[%s4097 + $0x548] sm:$0xff]
        %v4268 = vld [vmem:[%s4097 + $0x550] sm:$0xff]
        %v4269 = vld [vmem:[%s4097 + $0x558] sm:$0xff]
        %v4270 = vld [vmem:[%s4097 + $0x560] sm:$0xff]
        %v4271 = vld [vmem:[%s4097 + $0x568] sm:$0xff]
        %v4272 = vld [vmem:[%s4097 + $0x570] sm:$0xff]
        %v4273 = vld [vmem:[%s4097 + $0x578] sm:$0xff]
        %v4274 = vld [vmem:[%s4097 + $0x580] sm:$0xff]
        %v4275 = vld [vmem:[%s4097 + $0x588] sm:$0xff]
        %v4276 = vld [vmem:[%s4097 + $0x590] sm:$0xff]
        %v4277 = vld [vmem:[%s4097 + $0x598] sm:$0xff]
        %v4278 = vld [vmem:[%s4097 + $0x5a0] sm:$0xff]
        %v4279 = vld [vmem:[%s4097 + $0x5a8] sm:$0xff]
        %v4280 = vld [vmem:[%s4097 + $0x5b0] sm:$0xff]
        %v4281 = vld [vmem:[%s4097 + $0x5b8] sm:$0xff]
        %v4282 = vld [vmem:[%s4097 + $0x5c0] sm:$0xff]
        %v4283 = vld [vmem:[%s4097 + $0x5c8] sm:$0xff]
        %v4284 = vld [vmem:[%s4097 + $0x5d0] sm:$0xff]
        %v4285 = vld [vmem:[%s4097 + $0x5d8] sm:$0xff]
        %v4286 = vld [vmem:[%s4097 + $0x5e0] sm:$0xff]
        %v4287 = vld [vmem:[%s4097 + $0x5e8] sm:$0xff]
        %v4288 = vld [vmem:[%s4097 + $0x5f0] sm:$0xff]
        %v4289 = vld [vmem:[%s4097 + $0x5f8] sm:$0xff]
        %v4290 = vld [vmem:[%s4097 + $0x600] sm:$0xff]
        %v4291 = vld [vmem:[%s4097 + $0x608] sm:$0xff]
        %v4292 = vld [vmem:[%s4097 + $0x610] sm:$0xff]
        %v4293 = vld [vmem:[%s4097 + $0x618] sm:$0xff]
        %v4294 = vld [vmem:[%s4097 + $0x620] sm:$0xff]
        %v4295 = vld [vmem:[%s4097 + $0x628] sm:$0xff]
        %v4296 = vld [vmem:[%s4097 + $0x630] sm:$0xff]
        %v4297 = vld [vmem:[%s4097 + $0x638] sm:$0xff]
        %v4298 = vld [vmem:[%s4097 + $0x640] sm:$0xff]
        %v4299 = vld [vmem:[%s4097 + $0x648] sm:$0xff]
        %v4300 = vld [vmem:[%s4097 + $0x650] sm:$0xff]
        %v4301 = vld [vmem:[%s4097 + $0x658] sm:$0xff]
        %v4302 = vld [vmem:[%s4097 + $0x660] sm:$0xff]
        %v4303 = vld [vmem:[%s4097 + $0x668] sm:$0xff]
        %v4304 = vld [vmem:[%s4097 + $0x670] sm:$0xff]
        %v4305 = vld [vmem:[%s4097 + $0x678] sm:$0xff]
        %v4306 = vld [vmem:[%s4097 + $0x680] sm:$0xff]
        %v4307 = vld [vmem:[%s4097 + $0x688] sm:$0xff]
        %v4308 = vld [vmem:[%s4097 + $0x690] sm:$0xff]
        %v4309 = vld [vmem:[%s4097 + $0x698] sm:$0xff]
        %v4310 = vld [vmem:[%s4097 + $0x6a0] sm:$0xff]
        %v4311 = vld [vmem:[%s4097 + $0x6a8] sm:$0xff]
        %v4312 = vld [vmem:[%s4097 + $0x6b0] sm:$0xff]
        %v4313 = vld [vmem:[%s4097 + $0x6b8] sm:$0xff]
        %v4314 = vld [vmem:[%s4097 + $0x6c0] sm:$0xff]
        %v4315 = vld [vmem:[%s4097 + $0x6c8] sm:$0xff]
        %v4316 = vld [vmem:[%s4097 + $0x6d0] sm:$0xff]
        %v4317 = vld [vmem:[%s4097 + $0x6d8] sm:$0xff]
        %v4318 = vld [vmem:[%s4097 + $0x6e0] sm:$0xff]
        %v4319 = vld [vmem:[%s4097 + $0x6e8] sm:$0xff]
        %v4320 = vld [vmem:[%s4097 + $0x6f0] sm:$0xff]
        %v4321 = vld [vmem:[%s4097 + $0x6f8] sm:$0xff]
        %v4322 = vld [vmem:[%s4097 + $0x700] sm:$0xff]
        %v4323 = vld [vmem:[%s4097 + $0x708] sm:$0xff]
        %v4324 = vld [vmem:[%s4097 + $0x710] sm:$0xff]
        %v4325 = vld [vmem:[%s4097 + $0x718] sm:$0xff]
        %v4326 = vld [vmem:[%s4097 + $0x720] sm:$0xff]
        %v4327 = vld [vmem:[%s4097 + $0x728] sm:$0xff]
        %v4328 = vld [vmem:[%s4097 + $0x730] sm:$0xff]
        %v4329 = vld [vmem:[%s4097 + $0x738] sm:$0xff]
        %v4330 = vld [vmem:[%s4097 + $0x740] sm:$0xff]
        %v4331 = vld [vmem:[%s4097 + $0x748] sm:$0xff]
        %v4332 = vld [vmem:[%s4097 + $0x750] sm:$0xff]
        %v4333 = vld [vmem:[%s4097 + $0x758] sm:$0xff]
        %v4334 = vld [vmem:[%s4097 + $0x760] sm:$0xff]
        %v4335 = vld [vmem:[%s4097 + $0x768] sm:$0xff]
        %v4336 = vld [vmem:[%s4097 + $0x770] sm:$0xff]
        %v4337 = vld [vmem:[%s4097 + $0x778] sm:$0xff]
        %v4338 = vld [vmem:[%s4097 + $0x780] sm:$0xff]
        %v4339 = vld [vmem:[%s4097 + $0x788] sm:$0xff]
        %v4340 = vld [vmem:[%s4097 + $0x790] sm:$0xff]
        %v4341 = vld [vmem:[%s4097 + $0x798] sm:$0xff]
        %v4342 = vld [vmem:[%s4097 + $0x7a0] sm:$0xff]
        %v4343 = vld [vmem:[%s4097 + $0x7a8] sm:$0xff]
        %v4344 = vld [vmem:[%s4097 + $0x7b0] sm:$0xff]
        %v4345 = vld [vmem:[%s4097 + $0x7b8] sm:$0xff]
        %v4346 = vld [vmem:[%s4097 + $0x7c0] sm:$0xff]
        %v4347 = vld [vmem:[%s4097 + $0x7c8] sm:$0xff]
        %v4348 = vld [vmem:[%s4097 + $0x7d0] sm:$0xff]
        %v4349 = vld [vmem:[%s4097 + $0x7d8] sm:$0xff]
        %v4350 = vld [vmem:[%s4097 + $0x7e0] sm:$0xff]
        %v4351 = vld [vmem:[%s4097 + $0x7e8] sm:$0xff]
        %v4352 = vld [vmem:[%s4097 + $0x7f0] sm:$0xff]
        %v4353 = vld [vmem:[%s4097 + $0x7f8] sm:$0xff]
        %v4362 = vrot.slane %v4089, 2
        %v4363 = vrot.slane %v2908, 2
        %v4364 = vsel %vm2485, %v4362, %v4363
        %v4365 = vrot.slane %v4090, 2
        %v4366 = vrot.slane %v2909, 2
        %v4367 = vsel %vm2485, %v4365, %v4366
        %v4368 = vrot.slane %v4091, 2
        %v4369 = vrot.slane %v2910, 2
        %v4370 = vsel %vm2485, %v4368, %v4369
        %v4371 = vrot.slane %v4092, 2
        %v4372 = vrot.slane %v2911, 2
        %v4373 = vsel %vm2485, %v4371, %v4372
        %v4374 = vrot.slane %v4093, 2
        %v4375 = vsel %vm2485, %v4363, %v4374
        %v4376 = vrot.slane %v4094, 2
        %v4377 = vsel %vm2485, %v4366, %v4376
        %v4378 = vrot.slane %v4095, 2
        %v4379 = vsel %vm2485, %v4369, %v4378
        %v4380 = vrot.slane %v4096, 2
        %v4381 = vsel %vm2485, %v4372, %v4380
        %4390 = vmatprep.subr.mxu0 %v4099
        %4391 = vmatpush1.msra.mxu0 %v4098
        %4392 = vmatprep.subr.mxu0 %v4103
        %4393 = vmatpush1.msra.mxu0 %v4102
        %4394 = vmatprep.subr.mxu0 %v4107
        %4395 = vmatpush1.msra.mxu0 %v4106
        %4396 = vmatprep.subr.mxu0 %v4111
        %4397 = vmatpush1.msra.mxu0 %v4110
        %4398 = vmatprep.subr.mxu0 %v4115
        %4399 = vmatpush1.msra.mxu0 %v4114
        %4400 = vmatprep.subr.mxu0 %v4119
        %4401 = vmatpush1.msra.mxu0 %v4118
        %4402 = vmatprep.subr.mxu0 %v4123
        %4403 = vmatpush1.msra.mxu0 %v4122
        %4404 = vmatprep.subr.mxu0 %v4127
        %4405 = vmatpush1.msra.mxu0 %v4126
        %4406 = vmatprep.subr.mxu0 %v4131
        %4407 = vmatpush1.msra.mxu0 %v4130
        %4408 = vmatprep.subr.mxu0 %v4135
        %4409 = vmatpush1.msra.mxu0 %v4134
        %4410 = vmatprep.subr.mxu0 %v4139
        %4411 = vmatpush1.msra.mxu0 %v4138
        %4412 = vmatprep.subr.mxu0 %v4143
        %4413 = vmatpush1.msra.mxu0 %v4142
        %4414 = vmatprep.subr.mxu0 %v4147
        %4415 = vmatpush1.msra.mxu0 %v4146
        %4416 = vmatprep.subr.mxu0 %v4151
        %4417 = vmatpush1.msra.mxu0 %v4150
        %4418 = vmatprep.subr.mxu0 %v4155
        %4419 = vmatpush1.msra.mxu0 %v4154
        %4420 = vmatprep.subr.mxu0 %v4159
        %4421 = vmatpush1.msra.mxu0 %v4158
        %4422 = vmatprep.subr.mxu0 %v4163
        %4423 = vmatpush1.msra.mxu0 %v4162
        %4424 = vmatprep.subr.mxu0 %v4167
        %4425 = vmatpush1.msra.mxu0 %v4166
        %4426 = vmatprep.subr.mxu0 %v4171
        %4427 = vmatpush1.msra.mxu0 %v4170
        %4428 = vmatprep.subr.mxu0 %v4175
        %4429 = vmatpush1.msra.mxu0 %v4174
        %4430 = vmatprep.subr.mxu0 %v4179
        %4431 = vmatpush1.msra.mxu0 %v4178
        %4432 = vmatprep.subr.mxu0 %v4183
        %4433 = vmatpush1.msra.mxu0 %v4182
        %4434 = vmatprep.subr.mxu0 %v4187
        %4435 = vmatpush1.msra.mxu0 %v4186
        %4436 = vmatprep.subr.mxu0 %v4191
        %4437 = vmatpush1.msra.mxu0 %v4190
        %4438 = vmatprep.subr.mxu0 %v4195
        %4439 = vmatpush1.msra.mxu0 %v4194
        %4440 = vmatprep.subr.mxu0 %v4199
        %4441 = vmatpush1.msra.mxu0 %v4198
        %4442 = vmatprep.subr.mxu0 %v4203
        %4443 = vmatpush1.msra.mxu0 %v4202
        %4444 = vmatprep.subr.mxu0 %v4207
        %4445 = vmatpush1.msra.mxu0 %v4206
        %4446 = vmatprep.subr.mxu0 %v4211
        %4447 = vmatpush1.msra.mxu0 %v4210
        %4448 = vmatprep.subr.mxu0 %v4215
        %4449 = vmatpush1.msra.mxu0 %v4214
        %4450 = vmatprep.subr.mxu0 %v4219
        %4451 = vmatpush1.msra.mxu0 %v4218
        %4452 = vmatprep.subr.mxu0 %v4223
        %4453 = vmatpush1.msra.mxu0 %v4222
        %4454 = vmatprep.mubr.f32.mxu0 %v4367
        %4455 = vmatmul.mubr.f32.gmra.mrb[0].mxu0 %v4364
        %v4456 = vpop.f32.mrb[0].mxu0
        %v4457 = vadd.f32 0.0, %v4456
        %v4458 = vpop.f32.mrb[0].mxu0
        %v4459 = vadd.f32 0.0, %v4458
        %4460 = vmatprep.mubr.f32.mxu0 %v4377
        %4461 = vmatmul.mubr.f32.gmra.mrb[0].mxu0 %v4375
        %v4462 = vpop.f32.mrb[0].mxu0
        %v4463 = vadd.f32 0.0, %v4462
        %v4464 = vpop.f32.mrb[0].mxu0
        %v4465 = vadd.f32 0.0, %v4464
        %4466 = vdwg.mxu0
        %4467 = vmatprep.subr.mxu0 %v4227
        %4468 = vmatpush1.msra.mxu0 %v4226
        %4469 = vmatprep.subr.mxu0 %v4231
        %4470 = vmatpush1.msra.mxu0 %v4230
        %4471 = vmatprep.subr.mxu0 %v4235
        %4472 = vmatpush1.msra.mxu0 %v4234
        %4473 = vmatprep.subr.mxu0 %v4239
        %4474 = vmatpush1.msra.mxu0 %v4238
        %4475 = vmatprep.subr.mxu0 %v4243
        %4476 = vmatpush1.msra.mxu0 %v4242
        %4477 = vmatprep.subr.mxu0 %v4247
        %4478 = vmatpush1.msra.mxu0 %v4246
        %4479 = vmatprep.subr.mxu0 %v4251
        %4480 = vmatpush1.msra.mxu0 %v4250
        %4481 = vmatprep.subr.mxu0 %v4255
        %4482 = vmatpush1.msra.mxu0 %v4254
        %4483 = vmatprep.subr.mxu0 %v4259
        %4484 = vmatpush1.msra.mxu0 %v4258
        %4485 = vmatprep.subr.mxu0 %v4263
        %4486 = vmatpush1.msra.mxu0 %v4262
        %4487 = vmatprep.subr.mxu0 %v4267
        %4488 = vmatpush1.msra.mxu0 %v4266
        %4489 = vmatprep.subr.mxu0 %v4271
        %4490 = vmatpush1.msra.mxu0 %v4270
        %4491 = vmatprep.subr.mxu0 %v4275
        %4492 = vmatpush1.msra.mxu0 %v4274
        %4493 = vmatprep.subr.mxu0 %v4279
        %4494 = vmatpush1.msra.mxu0 %v4278
        %4495 = vmatprep.subr.mxu0 %v4283
        %4496 = vmatpush1.msra.mxu0 %v4282
        %4497 = vmatprep.subr.mxu0 %v4287
        %4498 = vmatpush1.msra.mxu0 %v4286
        %4499 = vmatprep.subr.mxu0 %v4291
        %4500 = vmatpush1.msra.mxu0 %v4290
        %4501 = vmatprep.subr.mxu0 %v4295
        %4502 = vmatpush1.msra.mxu0 %v4294
        %4503 = vmatprep.subr.mxu0 %v4299
        %4504 = vmatpush1.msra.mxu0 %v4298
        %4505 = vmatprep.subr.mxu0 %v4303
        %4506 = vmatpush1.msra.mxu0 %v4302
        %4507 = vmatprep.subr.mxu0 %v4307
        %4508 = vmatpush1.msra.mxu0 %v4306
        %4509 = vmatprep.subr.mxu0 %v4311
        %4510 = vmatpush1.msra.mxu0 %v4310
        %4511 = vmatprep.subr.mxu0 %v4315
        %4512 = vmatpush1.msra.mxu0 %v4314
        %4513 = vmatprep.subr.mxu0 %v4319
        %4514 = vmatpush1.msra.mxu0 %v4318
        %4515 = vmatprep.subr.mxu0 %v4323
        %4516 = vmatpush1.msra.mxu0 %v4322
        %4517 = vmatprep.subr.mxu0 %v4327
        %4518 = vmatpush1.msra.mxu0 %v4326
        %4519 = vmatprep.subr.mxu0 %v4331
        %4520 = vmatpush1.msra.mxu0 %v4330
        %4521 = vmatprep.subr.mxu0 %v4335
        %4522 = vmatpush1.msra.mxu0 %v4334
        %4523 = vmatprep.subr.mxu0 %v4339
        %4524 = vmatpush1.msra.mxu0 %v4338
        %4525 = vmatprep.subr.mxu0 %v4343
        %4526 = vmatpush1.msra.mxu0 %v4342
        %4527 = vmatprep.subr.mxu0 %v4347
        %4528 = vmatpush1.msra.mxu0 %v4346
        %4529 = vmatprep.subr.mxu0 %v4351
        %4530 = vmatpush1.msra.mxu0 %v4350
        %4531 = vmatprep.mubr.f32.mxu0 %v4373
        %4532 = vmatmul.mubr.f32.gmra.mrb[0].mxu0 %v4370
        %v4533 = vpop.f32.mrb[0].mxu0
        %v4534 = vadd.f32 %v4457, %v4533
        %v4535 = vpop.f32.mrb[0].mxu0
        %v4536 = vadd.f32 %v4459, %v4535
        %4537 = vmatprep.mubr.f32.mxu0 %v4381
        %4538 = vmatmul.mubr.f32.gmra.mrb[0].mxu0 %v4379
        %v4539 = vpop.f32.mrb[0].mxu0
        %v4540 = vadd.f32 %v4463, %v4539
        %v4541 = vpop.f32.mrb[0].mxu0
        %v4542 = vadd.f32 %v4465, %v4541
        %4543 = vdwg.mxu0
        %4544 = vmatprep.subr.mxu0 %v4101
        %4545 = vmatpush1.msra.mxu0 %v4100
        %4546 = vmatprep.subr.mxu0 %v4105
        %4547 = vmatpush1.msra.mxu0 %v4104
        %4548 = vmatprep.subr.mxu0 %v4109
        %4549 = vmatpush1.msra.mxu0 %v4108
        %4550 = vmatprep.subr.mxu0 %v4113
        %4551 = vmatpush1.msra.mxu0 %v4112
        %4552 = vmatprep.subr.mxu0 %v4117
        %4553 = vmatpush1.msra.mxu0 %v4116
        %4554 = vmatprep.subr.mxu0 %v4121
        %4555 = vmatpush1.msra.mxu0 %v4120
        %4556 = vmatprep.subr.mxu0 %v4125
        %4557 = vmatpush1.msra.mxu0 %v4124
        %4558 = vmatprep.subr.mxu0 %v4129
        %4559 = vmatpush1.msra.mxu0 %v4128
        %4560 = vmatprep.subr.mxu0 %v4133
        %4561 = vmatpush1.msra.mxu0 %v4132
        %4562 = vmatprep.subr.mxu0 %v4137
        %4563 = vmatpush1.msra.mxu0 %v4136
        %4564 = vmatprep.subr.mxu0 %v4141
        %4565 = vmatpush1.msra.mxu0 %v4140
        %4566 = vmatprep.subr.mxu0 %v4145
        %4567 = vmatpush1.msra.mxu0 %v4144
        %4568 = vmatprep.subr.mxu0 %v4149
        %4569 = vmatpush1.msra.mxu0 %v4148
        %4570 = vmatprep.subr.mxu0 %v4153
        %4571 = vmatpush1.msra.mxu0 %v4152
        %4572 = vmatprep.subr.mxu0 %v4157
        %4573 = vmatpush1.msra.mxu0 %v4156
        %4574 = vmatprep.subr.mxu0 %v4161
        %4575 = vmatpush1.msra.mxu0 %v4160
        %4576 = vmatprep.subr.mxu0 %v4165
        %4577 = vmatpush1.msra.mxu0 %v4164
        %4578 = vmatprep.subr.mxu0 %v4169
        %4579 = vmatpush1.msra.mxu0 %v4168
        %4580 = vmatprep.subr.mxu0 %v4173
        %4581 = vmatpush1.msra.mxu0 %v4172
        %4582 = vmatprep.subr.mxu0 %v4177
        %4583 = vmatpush1.msra.mxu0 %v4176
        %4584 = vmatprep.subr.mxu0 %v4181
        %4585 = vmatpush1.msra.mxu0 %v4180
        %4586 = vmatprep.subr.mxu0 %v4185
        %4587 = vmatpush1.msra.mxu0 %v4184
        %4588 = vmatprep.subr.mxu0 %v4189
        %4589 = vmatpush1.msra.mxu0 %v4188
        %4590 = vmatprep.subr.mxu0 %v4193
        %4591 = vmatpush1.msra.mxu0 %v4192
        %4592 = vmatprep.subr.mxu0 %v4197
        %4593 = vmatpush1.msra.mxu0 %v4196
        %4594 = vmatprep.subr.mxu0 %v4201
        %4595 = vmatpush1.msra.mxu0 %v4200
        %4596 = vmatprep.subr.mxu0 %v4205
        %4597 = vmatpush1.msra.mxu0 %v4204
        %4598 = vmatprep.subr.mxu0 %v4209
        %4599 = vmatpush1.msra.mxu0 %v4208
        %4600 = vmatprep.subr.mxu0 %v4213
        %4601 = vmatpush1.msra.mxu0 %v4212
        %4602 = vmatprep.subr.mxu0 %v4217
        %4603 = vmatpush1.msra.mxu0 %v4216
        %4604 = vmatprep.subr.mxu0 %v4221
        %4605 = vmatpush1.msra.mxu0 %v4220
        %4606 = vmatprep.subr.mxu0 %v4225
        %4607 = vmatpush1.msra.mxu0 %v4224
        %4608 = vmatprep.mubr.f32.mxu0 %v4367
        %4609 = vmatmul.mubr.f32.gmra.mrb[0].mxu0 %v4364
        %v4610 = vpop.f32.mrb[0].mxu0
        %v4611 = vadd.f32 0.0, %v4610
        %v4612 = vpop.f32.mrb[0].mxu0
        %v4613 = vadd.f32 0.0, %v4612
        %4614 = vmatprep.mubr.f32.mxu0 %v4377
        %4615 = vmatmul.mubr.f32.gmra.mrb[0].mxu0 %v4375
        %v4616 = vpop.f32.mrb[0].mxu0
        %v4617 = vadd.f32 0.0, %v4616
        %v4618 = vpop.f32.mrb[0].mxu0
        %v4619 = vadd.f32 0.0, %v4618
        %4620 = vdwg.mxu0
        %4621 = vmatprep.subr.mxu0 %v4229
        %4622 = vmatpush1.msra.mxu0 %v4228
        %4623 = vmatprep.subr.mxu0 %v4233
        %4624 = vmatpush1.msra.mxu0 %v4232
        %4625 = vmatprep.subr.mxu0 %v4237
        %4626 = vmatpush1.msra.mxu0 %v4236
        %4627 = vmatprep.subr.mxu0 %v4241
        %4628 = vmatpush1.msra.mxu0 %v4240
        %4629 = vmatprep.subr.mxu0 %v4245
        %4630 = vmatpush1.msra.mxu0 %v4244
        %4631 = vmatprep.subr.mxu0 %v4249
        %4632 = vmatpush1.msra.mxu0 %v4248
        %4633 = vmatprep.subr.mxu0 %v4253
        %4634 = vmatpush1.msra.mxu0 %v4252
        %4635 = vmatprep.subr.mxu0 %v4257
        %4636 = vmatpush1.msra.mxu0 %v4256
        %4637 = vmatprep.subr.mxu0 %v4261
        %4638 = vmatpush1.msra.mxu0 %v4260
        %4639 = vmatprep.subr.mxu0 %v4265
        %4640 = vmatpush1.msra.mxu0 %v4264
        %4641 = vmatprep.subr.mxu0 %v4269
        %4642 = vmatpush1.msra.mxu0 %v4268
        %4643 = vmatprep.subr.mxu0 %v4273
        %4644 = vmatpush1.msra.mxu0 %v4272
        %4645 = vmatprep.subr.mxu0 %v4277
        %4646 = vmatpush1.msra.mxu0 %v4276
        %4647 = vmatprep.subr.mxu0 %v4281
        %4648 = vmatpush1.msra.mxu0 %v4280
        %4649 = vmatprep.subr.mxu0 %v4285
        %4650 = vmatpush1.msra.mxu0 %v4284
        %4651 = vmatprep.subr.mxu0 %v4289
        %4652 = vmatpush1.msra.mxu0 %v4288
        %4653 = vmatprep.subr.mxu0 %v4293
        %4654 = vmatpush1.msra.mxu0 %v4292
        %4655 = vmatprep.subr.mxu0 %v4297
        %4656 = vmatpush1.msra.mxu0 %v4296
        %4657 = vmatprep.subr.mxu0 %v4301
        %4658 = vmatpush1.msra.mxu0 %v4300
        %4659 = vmatprep.subr.mxu0 %v4305
        %4660 = vmatpush1.msra.mxu0 %v4304
        %4661 = vmatprep.subr.mxu0 %v4309
        %4662 = vmatpush1.msra.mxu0 %v4308
        %4663 = vmatprep.subr.mxu0 %v4313
        %4664 = vmatpush1.msra.mxu0 %v4312
        %4665 = vmatprep.subr.mxu0 %v4317
        %4666 = vmatpush1.msra.mxu0 %v4316
        %4667 = vmatprep.subr.mxu0 %v4321
        %4668 = vmatpush1.msra.mxu0 %v4320
        %4669 = vmatprep.subr.mxu0 %v4325
        %4670 = vmatpush1.msra.mxu0 %v4324
        %4671 = vmatprep.subr.mxu0 %v4329
        %4672 = vmatpush1.msra.mxu0 %v4328
        %4673 = vmatprep.subr.mxu0 %v4333
        %4674 = vmatpush1.msra.mxu0 %v4332
        %4675 = vmatprep.subr.mxu0 %v4337
        %4676 = vmatpush1.msra.mxu0 %v4336
        %4677 = vmatprep.subr.mxu0 %v4341
        %4678 = vmatpush1.msra.mxu0 %v4340
        %4679 = vmatprep.subr.mxu0 %v4345
        %4680 = vmatpush1.msra.mxu0 %v4344
        %4681 = vmatprep.subr.mxu0 %v4349
        %4682 = vmatpush1.msra.mxu0 %v4348
        %4683 = vmatprep.subr.mxu0 %v4353
        %4684 = vmatpush1.msra.mxu0 %v4352
        %4685 = vmatprep.mubr.f32.mxu0 %v4373
        %4686 = vmatmul.mubr.f32.gmra.mrb[0].mxu0 %v4370
        %v4687 = vpop.f32.mrb[0].mxu0
        %v4688 = vadd.f32 %v4611, %v4687
        %v4689 = vpop.f32.mrb[0].mxu0
        %v4690 = vadd.f32 %v4613, %v4689
        %4691 = vmatprep.mubr.f32.mxu0 %v4381
        %4692 = vmatmul.mubr.f32.gmra.mrb[0].mxu0 %v4379
        %v4693 = vpop.f32.mrb[0].mxu0
        %v4694 = vadd.f32 %v4617, %v4693
        %v4695 = vpop.f32.mrb[0].mxu0
        %v4696 = vadd.f32 %v4619, %v4695
        %4697 = vdwg.mxu0
        %v4698 = vadd.f32 %v3925, %v4534
        %v4699 = vadd.f32 %v3927, %v4536
        %v4700 = vadd.f32 %v4079, %v4688
        %v4701 = vadd.f32 %v4081, %v4690
        %v4702 = vadd.f32 %v3931, %v4540
        %v4703 = vadd.f32 %v3933, %v4542
        %v4704 = vadd.f32 %v4085, %v4694
        %v4705 = vadd.f32 %v4087, %v4696
        %v4706 = vld [vmem:[#allocation14] sm:$0xf]
        %v4708 = vlaneseq
        %v4709 = vshrl.u32 %v4708, 7
        %v4710 = vsub.s32 0, %v4709
        %v4711 = vrot.slane %v4706, %v4710
        %v4712 = vlaneseq
        %v4713 = vshrl.u32 %v4712, 7
        %v4714 = vsub.s32 1, %v4713
        %v4715 = vrot.slane %v4706, %v4714
        %v4716 = vlaneseq
        %v4717 = vshrl.u32 %v4716, 7
        %v4718 = vsub.s32 2, %v4717
        %v4719 = vrot.slane %v4706, %v4718
        %v4720 = vlaneseq
        %v4721 = vshrl.u32 %v4720, 7
        %v4722 = vsub.s32 3, %v4721
        %v4723 = vrot.slane %v4706, %v4722
        %v4728 = vadd.f32 %v4698, %v4711
        %v4729 = vadd.f32 %v4699, %v4715
        %v4730 = vadd.f32 %v4700, %v4719
        %v4731 = vadd.f32 %v4701, %v4723
        %v4732 = vadd.f32 %v4702, %v4711
        %v4733 = vadd.f32 %v4703, %v4715
        %v4734 = vadd.f32 %v4704, %v4719
        %v4735 = vadd.f32 %v4705, %v4723
        %v4736 = vmax.f32 %v4728, 0.0
        %v4737 = vmax.f32 %v4729, 0.0
        %v4738 = vmax.f32 %v4730, 0.0
        %v4739 = vmax.f32 %v4731, 0.0
        %v4740 = vmax.f32 %v4732, 0.0
        %v4741 = vmax.f32 %v4733, 0.0
        %v4742 = vmax.f32 %v4734, 0.0
        %v4743 = vmax.f32 %v4735, 0.0
        %4744 = vst [vmem:[%s377] sm:$0xff] %v4736
        %4745 = vst [vmem:[%s377 + $0x8] sm:$0xff] %v4737
        %4746 = vst [vmem:[%s377 + $0x10] sm:$0xff] %v4738
        %4747 = vst [vmem:[%s377 + $0x18] sm:$0xff] %v4739
        %4748 = vst [vmem:[%s377 + $0x20] sm:$0xff] %v4740
        %4749 = vst [vmem:[%s377 + $0x28] sm:$0xff] %v4741
        %4750 = vst [vmem:[%s377 + $0x30] sm:$0xff] %v4742
        %4751 = vst [vmem:[%s377 + $0x38] sm:$0xff] %v4743
        %s4752 = sand.u32 %s187, 1
        %s4753 = scalar_lea.sflag [#allocation5], %s4752
        %s4754 = sand.u32 %s187, 1
        %s4755 = smul.addr %s4754, 64
        %s4756 = scalar_lea.vmem [#allocation15], %s4755
        // Predicated region
        $region77: #{tpu_custom_call.1} parent=47 // pred_check
          %p4757 = pneg %p197
        $region78: #{tpu_custom_call.1} parent=47 // pred_check_branch
          %4759 = sbr.rel (%p4757) target = $region80
        $region79: #{tpu_custom_call.1} parent=47 // pred_region
          %s4761 = ssub.s32 1024, 1024
          %4762 = vsyncadd %s4753, %s4761
          %s4763 = smul.addr %s27, 8
          %s4764 = smul.addr %s4763, 128
          %s4765 = scalar_lea.hbm %s7, %s4764
          %s4766 = sshll.u32 %s4756, 4
          %s4767 = int_to_ptr.vmem [resolvable:$true] %s4766
          %4772 = dma.vmem_to_hbm [thread:$0]  %s4767, 1024, %s4765, %s4753, 512, 512, 32
        $region80: #{tpu_custom_call.1} parent=47 // pred_fallthru
          _
      $region48: #{tpu_custom_call.1} parent=5 // pred_fallthru
        _
      %p4773 = scmp.le.s32.totalorder 2, %s22
      // Predicated region
      $region81: #{tpu_custom_call.1} parent=5 // pred_check
        %p4774 = pneg %p4773
      $region82: #{tpu_custom_call.1} parent=5 // pred_check_branch
        %4776 = sbr.rel (%p4774) target = $region84
      $region83: #{tpu_custom_call.1} parent=5 // pred_region
        %s4777 = ssub.s32 %s22, 2
        // Predicated region
        $region85: #{tpu_custom_call.1} parent=83 // pred_check
          %p4778 = pneg %p203
        $region86: #{tpu_custom_call.1} parent=83 // pred_check_branch
          %4780 = sbr.rel (%p4778) target = $region88
        $region87: #{tpu_custom_call.1} parent=83 // pred_region
          %s4781 = sand.u32 %s188, 1
          %s4782 = scalar_lea.sflag [#allocation5], %s4781
          %s4783 = sand.u32 %s188, 1
          %s4784 = smul.addr %s4783, 64
          %s4785 = scalar_lea.vmem [#allocation15], %s4784
          %4786 = dma.done %s4782, 1024
        $region88: #{tpu_custom_call.1} parent=83 // pred_fallthru
          _
      $region84: #{tpu_custom_call.1} parent=5 // pred_fallthru
        _
    $region6: #{tpu_custom_call.1} parent=1 // loop_footer
      %s26 = sadd.s32 1, %s22
    $region7: #{tpu_custom_call.1} parent=1 // loop_footer_branch
      %21 = sbr.rel target = $region3
    $region8: #{tpu_custom_call.1} parent=1 // loop_exit
      _
    %4787 = vsyncpa [#allocation4], 1
    %s4788 = scalar_lea.sflag [#allocation4], 1
    %4789 = vsyncpa %s4788, 1
    %4790 = vsyncpa [#allocation7], 1
    %4791 = vsyncpa [#allocation10], 1
    %4792 = vsyncpa [#allocation13], 1
    %4793 = vsyncpa [#allocation5], 1
    %s4794 = scalar_lea.sflag [#allocation5], 1
    %4795 = vsyncpa %s4794, 1

</llo_original>
